<compile_context>
chip_gen: v7x
topology: tpu7x:2x2x1
jax: 0.10.0
libtpu: 0.0.40
codegen_flags: <defaults>
</compile_context>

<pallas_src>
import functools

import jax
import jax.numpy as jnp
from jax import lax
from jax.experimental import pallas as pl
from jax.experimental.pallas import tpu as pltpu

DIM = 128          # MoCo feature dim
K_QUEUE = 4096     # queue length
M_MOM = 0.99       # momentum coefficient
T_TEMP = 0.1       # softmax temperature
EPS = 1e-12        # F.normalize eps
_ROW_GRAIN = 16    # sublane granularity (bf16 key outputs pack 16 rows/vreg)
_Q_CHUNK = 512     # queue-axis chunk for the LSE epilogue


def _round_up(x, m):
    return (x + m - 1) // m * m


# ----------------------------------------------------------------------------
# Fused kernel: momentum update + both encoders + symmetric contrastive loss.
#   rows of half 0: q1 = enc_q(x1) paired with k2 = enc_k(x2)  -> loss_12
#   rows of half 1: q2 = enc_q(x2) paired with k1 = enc_k(x1)  -> loss_21
# ----------------------------------------------------------------------------
def _fused_moco_kernel(x1_ref, x2_ref, wq_ref, bq_ref, wk_ref, bk_ref,
                       queue_ref,
                       loss_ref, k1_ref, k2_ref, wk_new_ref, bk_new_ref,
                       *, inv_t, m, n_valid, q_chunk):
    row_tile = x1_ref.shape[0]

    # momentum-updated key-encoder params; written every step (idempotent,
    # grid-invariant output block) so no separate momentum pallas_call and no
    # in-place alias hazard on wk/bk.
    wq = wq_ref[...]
    bq = bq_ref[...]
    wk_eff = wk_ref[...] * m + wq * (1.0 - m)
    bk_eff = bk_ref[...] * m + bq * (1.0 - m)
    wk_new_ref[...] = wk_eff
    bk_new_ref[...] = bk_eff

    # bf16 MXU operands, f32 accumulation, f32 normalization
    wq_b = wq.astype(jnp.bfloat16)
    wk_b = wk_eff.astype(jnp.bfloat16)
    x1 = x1_ref[...].astype(jnp.bfloat16)
    x2 = x2_ref[...].astype(jnp.bfloat16)

    def _feat(x, w, b):
        pre = jnp.dot(x, w, preferred_element_type=jnp.float32) + b
        ss = jnp.maximum(jnp.sum(pre * pre, axis=1, keepdims=True), EPS * EPS)
        return pre * lax.rsqrt(ss)

    q1 = _feat(x1, wq_b, bq)        # [T, DIM] f32, unit rows
    q2 = _feat(x2, wq_b, bq)
    k1 = _feat(x1, wk_b, bk_eff)    # key features (no-grad semantics)
    k2 = _feat(x2, wk_b, bk_eff)

    # keys for the enqueue, bf16 to match the bf16 queue storage
    k1_ref[...] = k1.astype(jnp.bfloat16)
    k2_ref[...] = k2.astype(jnp.bfloat16)

    # stacked queries [q1; q2] and their matching keys [k2; k1]
    q_all = jnp.concatenate([q1, q2], axis=0)                    # [2T, DIM]
    k_swap = jnp.concatenate([k2, k1], axis=0)                   # [2T, DIM]
    l_pos = jnp.sum(q_all * k_swap, axis=1, keepdims=True)       # [2T, 1] f32
    q_b = q_all.astype(jnp.bfloat16)

    # log-sum-exp over [l_pos | l_neg] with the analytic max 1/T:
    # q rows and queue columns are unit-norm, so every logit <= inv_t.
    # Chunked over the queue axis -> no [2T, K] f32 intermediate.
    n_cols = queue_ref.shape[1]
    sum_exp = jnp.exp((l_pos - 1.0) * inv_t)                      # [2T, 1]
    for c in range(0, n_cols, q_chunk):
        s_c = jnp.dot(q_b, queue_ref[:, c:c + q_chunk],
                      preferred_element_type=jnp.float32)         # [2T, C]
        sum_exp = sum_exp + jnp.sum(jnp.exp((s_c - 1.0) * inv_t),
                                    axis=1, keepdims=True)

    # CE with label 0: LSE - l_pos/T  (max folded back in)
    per_sample = inv_t + jnp.log(sum_exp) - l_pos * inv_t          # [2T, 1]

    # mask padded rows (both halves share the same padding pattern)
    rid = lax.broadcasted_iota(jnp.int32, (2 * row_tile, 1), 0)
    local = jnp.where(rid < row_tile, rid, rid - row_tile)
    gid = pl.program_id(0) * row_tile + local
    per_sample = jnp.where(gid < n_valid, per_sample, 0.0)

    partial = jnp.sum(per_sample, axis=0, keepdims=True)           # [1, 1]
    loss_ref[...] = jnp.broadcast_to(partial, (8, 128))            # lane-dense


def fused_moco_step(x1_flat, x2_flat, wq, bq, wk, bk, queue_dm,
                    *, m=M_MOM, t=T_TEMP):
    n, d_in = x1_flat.shape
    dim, kq = queue_dm.shape          # queue stored [DIM, K] (PyTorch layout)

    # per-half row tiling: multiple of _ROW_GRAIN, >= 2 tiles when the batch
    # allows it (megacore sharding on v7x), capped at 128 rows per half
    # (-> M = 256 for the l_neg matmul on v6e/v7x).
    half = (n + 1) // 2
    row_tile = min(128, _round_up(max(half, 1), _ROW_GRAIN))
    n_pad = _round_up(n, row_tile)
    num_tiles = n_pad // row_tile

    if n_pad > n:
        pad = ((0, n_pad - n), (0, 0))
        x1p = jnp.pad(x1_flat, pad)
        x2p = jnp.pad(x2_flat, pad)
    else:
        x1p, x2p = x1_flat, x2_flat

    q_chunk = min(_Q_CHUNK, kq)
    assert kq % q_chunk == 0, "K_QUEUE must be a multiple of the LSE chunk"

    kernel = functools.partial(_fused_moco_kernel, inv_t=1.0 / t, m=m,
                               n_valid=n, q_chunk=q_chunk)

    loss_parts, k1, k2, wk_new, bk_new = pl.pallas_call(
        kernel,
        grid=(num_tiles,),
        in_specs=[
            pl.BlockSpec((row_tile, d_in), lambda i: (i, 0)),   # x1 tile
            pl.BlockSpec((row_tile, d_in), lambda i: (i, 0)),   # x2 tile
            pl.BlockSpec((d_in, dim), lambda i: (0, 0)),        # Wq (invariant)
            pl.BlockSpec((1, dim), lambda i: (0, 0)),           # bq
            pl.BlockSpec((d_in, dim), lambda i: (0, 0)),        # Wk
            pl.BlockSpec((1, dim), lambda i: (0, 0)),           # bk
            pl.BlockSpec((dim, kq), lambda i: (0, 0)),          # queue (bf16)
        ],
        out_specs=(
            pl.BlockSpec((8, 128), lambda i: (i, 0)),           # loss partial
            pl.BlockSpec((row_tile, dim), lambda i: (i, 0)),    # k1 (bf16)
            pl.BlockSpec((row_tile, dim), lambda i: (i, 0)),    # k2 (bf16)
            pl.BlockSpec((d_in, dim), lambda i: (0, 0)),        # Wk_new
            pl.BlockSpec((1, dim), lambda i: (0, 0)),           # bk_new
        ),
        out_shape=(
            jax.ShapeDtypeStruct((num_tiles * 8, 128), jnp.float32),
            jax.ShapeDtypeStruct((n_pad, dim), jnp.bfloat16),
            jax.ShapeDtypeStruct((n_pad, dim), jnp.bfloat16),
            jax.ShapeDtypeStruct((d_in, dim), jnp.float32),
            jax.ShapeDtypeStruct((1, dim), jnp.float32),
        ),
        compiler_params=pltpu.CompilerParams(
            dimension_semantics=("parallel",),
            vmem_limit_bytes=32 * 1024 * 1024,
        ),
    )(x1p, x2p, wq, bq, wk, bk, queue_dm)

    # loss_12 + loss_21 = (1/N) * sum of all 2N per-sample losses
    loss = jnp.sum(loss_parts[::8, 0]) / n

    # keys already come out as the two halves of cat([k1, k2]); drop padding
    k_enq = jnp.concatenate([k1[:n], k2[:n]], axis=0)            # [2N, DIM]
    return loss, k_enq, wk_new, bk_new


# ----------------------------------------------------------------------------
# Queue dequeue/enqueue on the [DIM, K] bf16 queue (PyTorch layout:
# queue[:, ptr:ptr+batch] = keys.t()).
# ----------------------------------------------------------------------------
def dequeue_and_enqueue(queue_dm, queue_ptr, keys):
    batch = keys.shape[0]
    kq = queue_dm.shape[1]
    assert kq % batch == 0
    # NOTE: assumes ptr + batch never wraps past K (holds because ptr always
    # advances by the same batch size and K % batch == 0).
    queue_dm = lax.dynamic_update_slice(
        queue_dm, keys.T.astype(queue_dm.dtype), (0, queue_ptr))
    new_ptr = (queue_ptr + batch) % kq
    return queue_dm, new_ptr


# ----------------------------------------------------------------------------
# Full ModelMoCo.forward (symmetric=True)
# ----------------------------------------------------------------------------
def moco_forward(x1, x2, wq, bq, wk, bk, queue_dm, queue_ptr,
                 *, m=M_MOM, t=T_TEMP):
    n = x1.shape[0]
    d_in = x1.shape[1] * x1.shape[2] * x1.shape[3]
    x1_flat = x1.reshape(n, d_in)
    x2_flat = x2.reshape(n, d_in)

    loss, k_enq, wk_new, bk_new = fused_moco_step(
        x1_flat, x2_flat, wq, bq, wk, bk, queue_dm, m=m, t=t)

    queue_dm, queue_ptr = dequeue_and_enqueue(queue_dm, queue_ptr, k_enq)
    return loss, (wk_new, bk_new, queue_dm, queue_ptr)


if __name__ == "__main__":
    # small shapes consistent with the module: NCHW images -> dim=128 features
    N, C, H, W = 2, 4, 16, 16
    D_IN = C * H * W

    key = jax.random.PRNGKey(0)
    k_x1, k_x2, k_w, k_q = jax.random.split(key, 4)

    x1 = jax.random.normal(k_x1, (N, C, H, W), jnp.float32)
    x2 = jax.random.normal(k_x2, (N, C, H, W), jnp.float32)

    # synthetic encoder parameters; key encoder initialized as a copy of the
    # query encoder, exactly like ModelMoCo.__init__.
    wq = jax.random.normal(k_w, (D_IN, DIM), jnp.float32) * 0.02
    bq = jnp.zeros((1, DIM), jnp.float32)
    wk = wq
    bk = bq

    # queue stored [dim, K] (PyTorch layout), unit-norm columns, held in bf16
    queue = jax.random.normal(k_q, (DIM, K_QUEUE), jnp.float32)
    queue = queue * lax.rsqrt(
        jnp.maximum(jnp.sum(queue * queue, axis=0, keepdims=True), EPS * EPS))
    queue_dm = queue.astype(jnp.bfloat16)
    queue_ptr = 0

    loss, (wk, bk, queue_dm, queue_ptr) = moco_forward(
        x1, x2, wq, bq, wk, bk, queue_dm, queue_ptr)

    loss = jax.block_until_ready(loss)
    jax.block_until_ready(queue_dm)
    jax.block_until_ready(wk)
    assert loss.shape == () and bool(jnp.isfinite(loss))
    print("KERNEL_OK")
</pallas_src>

<mosaic_0001>
module attributes {stable_mosaic.version = 11 : i64} {
  func.func @_fused_moco_kernel(%arg0: i32, %arg1: memref<16x1024xf32, #tpu.memory_space<vmem>>, %arg2: memref<16x1024xf32, #tpu.memory_space<vmem>>, %arg3: memref<1024x128xf32, #tpu.memory_space<vmem>>, %arg4: memref<1x128xf32, #tpu.memory_space<vmem>>, %arg5: memref<1024x128xf32, #tpu.memory_space<vmem>>, %arg6: memref<1x128xf32, #tpu.memory_space<vmem>>, %arg7: memref<128x4096xbf16, #tpu.memory_space<vmem>>, %arg8: memref<8x128xf32, #tpu.memory_space<vmem>>, %arg9: memref<16x128xbf16, #tpu.memory_space<vmem>>, %arg10: memref<16x128xbf16, #tpu.memory_space<vmem>>, %arg11: memref<1024x128xf32, #tpu.memory_space<vmem>>, %arg12: memref<1x128xf32, #tpu.memory_space<vmem>>) attributes {dimension_semantics = [#tpu.dimension_semantics<parallel>], iteration_bounds = array<i64: 1>, scalar_prefetch = 0 : i64, scratch_operands = 0 : i64, tpu.core_type = #tpu.core_type<tc>, window_params = [{transform_indices = @transform_0, window_bounds = array<i64: 16, 1024>}, {transform_indices = @transform_1, window_bounds = array<i64: 16, 1024>}, {pipeline_mode = #tpu.pipeline_mode<synchronous>, transform_indices = @transform_2, window_bounds = array<i64: 1024, 128>}, {pipeline_mode = #tpu.pipeline_mode<synchronous>, transform_indices = @transform_3, window_bounds = array<i64: 1, 128>}, {pipeline_mode = #tpu.pipeline_mode<synchronous>, transform_indices = @transform_4, window_bounds = array<i64: 1024, 128>}, {pipeline_mode = #tpu.pipeline_mode<synchronous>, transform_indices = @transform_5, window_bounds = array<i64: 1, 128>}, {pipeline_mode = #tpu.pipeline_mode<synchronous>, transform_indices = @transform_6, window_bounds = array<i64: 128, 4096>}, {transform_indices = @transform_7, window_bounds = array<i64: 8, 128>}, {transform_indices = @transform_8, window_bounds = array<i64: 16, 128>}, {transform_indices = @transform_9, window_bounds = array<i64: 16, 128>}, {pipeline_mode = #tpu.pipeline_mode<synchronous>, transform_indices = @transform_10, window_bounds = array<i64: 1024, 128>}, {pipeline_mode = #tpu.pipeline_mode<synchronous>, transform_indices = @transform_11, window_bounds = array<i64: 1, 128>}]} {
    %c0 = arith.constant 0 : index
    %c0_0 = arith.constant 0 : index
    %0 = vector.load %arg3[%c0, %c0_0] : memref<1024x128xf32, #tpu.memory_space<vmem>>, vector<1024x128xf32>
    %c0_1 = arith.constant 0 : index
    %c0_2 = arith.constant 0 : index
    %1 = vector.load %arg4[%c0_1, %c0_2] : memref<1x128xf32, #tpu.memory_space<vmem>>, vector<1x128xf32>
    %c0_3 = arith.constant 0 : index
    %c0_4 = arith.constant 0 : index
    %2 = vector.load %arg5[%c0_3, %c0_4] : memref<1024x128xf32, #tpu.memory_space<vmem>>, vector<1024x128xf32>
    %cst = arith.constant 9.900000e-01 : f32
    %3 = vector.broadcast %cst : f32 to vector<1024x128xf32>
    %4 = arith.mulf %2, %3 : vector<1024x128xf32>
    %cst_5 = arith.constant 0.00999999977 : f32
    %5 = vector.broadcast %cst_5 : f32 to vector<1024x128xf32>
    %6 = arith.mulf %0, %5 : vector<1024x128xf32>
    %7 = arith.addf %4, %6 : vector<1024x128xf32>
    %c0_6 = arith.constant 0 : index
    %c0_7 = arith.constant 0 : index
    %8 = vector.load %arg6[%c0_6, %c0_7] : memref<1x128xf32, #tpu.memory_space<vmem>>, vector<1x128xf32>
    %cst_8 = arith.constant 9.900000e-01 : f32
    %9 = vector.broadcast %cst_8 : f32 to vector<1x128xf32>
    %10 = arith.mulf %8, %9 : vector<1x128xf32>
    %cst_9 = arith.constant 0.00999999977 : f32
    %11 = vector.broadcast %cst_9 : f32 to vector<1x128xf32>
    %12 = arith.mulf %1, %11 : vector<1x128xf32>
    %13 = arith.addf %10, %12 : vector<1x128xf32>
    %c0_10 = arith.constant 0 : index
    %c0_11 = arith.constant 0 : index
    %14 = vector.load %arg11[%c0_10, %c0_11] : memref<1024x128xf32, #tpu.memory_space<vmem>>, vector<1024x128xf32>
    tpu.vector_store %arg11[%c0_10, %c0_11], %7 {strides = array<i32>} : memref<1024x128xf32, #tpu.memory_space<vmem>>, vector<1024x128xf32>,
    %c0_12 = arith.constant 0 : index
    %c0_13 = arith.constant 0 : index
    %15 = vector.load %arg12[%c0_12, %c0_13] : memref<1x128xf32, #tpu.memory_space<vmem>>, vector<1x128xf32>
    tpu.vector_store %arg12[%c0_12, %c0_13], %13 {strides = array<i32>} : memref<1x128xf32, #tpu.memory_space<vmem>>, vector<1x128xf32>,
    %16 = arith.truncf %0 : vector<1024x128xf32> to vector<1024x128xbf16>
    %17 = arith.truncf %7 : vector<1024x128xf32> to vector<1024x128xbf16>
    %c0_14 = arith.constant 0 : index
    %c0_15 = arith.constant 0 : index
    %18 = vector.load %arg1[%c0_14, %c0_15] : memref<16x1024xf32, #tpu.memory_space<vmem>>, vector<16x1024xf32>
    %19 = arith.truncf %18 : vector<16x1024xf32> to vector<16x1024xbf16>
    %c0_16 = arith.constant 0 : index
    %c0_17 = arith.constant 0 : index
    %20 = vector.load %arg2[%c0_16, %c0_17] : memref<16x1024xf32, #tpu.memory_space<vmem>>, vector<16x1024xf32>
    %21 = arith.truncf %20 : vector<16x1024xf32> to vector<16x1024xbf16>
    %cst_18 = arith.constant dense<0.000000e+00> : vector<16x128xf32>
    %22 = tpu.matmul %19, %16, %cst_18 {dimension_numbers = #tpu.dot_dimension_numbers<[1], [0], [0], [1], [0, 0, 1, 1], [], []>} : vector<16x1024xbf16>, vector<1024x128xbf16>, vector<16x128xf32> -> vector<16x128xf32>
    %23 = vector.broadcast %1 : vector<1x128xf32> to vector<16x128xf32>
    %24 = arith.addf %22, %23 : vector<16x128xf32>
    %25 = arith.mulf %24, %24 : vector<16x128xf32>
    %cst_19 = arith.constant dense<0.000000e+00> : vector<16xf32>
    %26 = vector.multi_reduction <add>, %25, %cst_19 [1] : vector<16x128xf32> to vector<16xf32>
    %27 = vector.shape_cast %26 : vector<16xf32> to vector<16x1xf32>
    %cst_20 = arith.constant 1.000000e-24 : f32
    %28 = vector.broadcast %cst_20 : f32 to vector<16x1xf32>
    %29 = arith.maximumf %27, %28 : vector<16x1xf32>
    %30 = math.rsqrt %29 : vector<16x1xf32>
    %31 = vector.broadcast %30 : vector<16x1xf32> to vector<16x128xf32>
    %32 = arith.mulf %24, %31 : vector<16x128xf32>
    %cst_21 = arith.constant dense<0.000000e+00> : vector<16x128xf32>
    %33 = tpu.matmul %21, %16, %cst_21 {dimension_numbers = #tpu.dot_dimension_numbers<[1], [0], [0], [1], [0, 0, 1, 1], [], []>} : vector<16x1024xbf16>, vector<1024x128xbf16>, vector<16x128xf32> -> vector<16x128xf32>
    %34 = vector.broadcast %1 : vector<1x128xf32> to vector<16x128xf32>
    %35 = arith.addf %33, %34 : vector<16x128xf32>
    %36 = arith.mulf %35, %35 : vector<16x128xf32>
    %cst_22 = arith.constant dense<0.000000e+00> : vector<16xf32>
    %37 = vector.multi_reduction <add>, %36, %cst_22 [1] : vector<16x128xf32> to vector<16xf32>
    %38 = vector.shape_cast %37 : vector<16xf32> to vector<16x1xf32>
    %cst_23 = arith.constant 1.000000e-24 : f32
    %39 = vector.broadcast %cst_23 : f32 to vector<16x1xf32>
    %40 = arith.maximumf %38, %39 : vector<16x1xf32>
    %41 = math.rsqrt %40 : vector<16x1xf32>
    %42 = vector.broadcast %41 : vector<16x1xf32> to vector<16x128xf32>
    %43 = arith.mulf %35, %42 : vector<16x128xf32>
    %cst_24 = arith.constant dense<0.000000e+00> : vector<16x128xf32>
    %44 = tpu.matmul %19, %17, %cst_24 {dimension_numbers = #tpu.dot_dimension_numbers<[1], [0], [0], [1], [0, 0, 1, 1], [], []>} : vector<16x1024xbf16>, vector<1024x128xbf16>, vector<16x128xf32> -> vector<16x128xf32>
    %45 = vector.broadcast %13 : vector<1x128xf32> to vector<16x128xf32>
    %46 = arith.addf %44, %45 : vector<16x128xf32>
    %47 = arith.mulf %46, %46 : vector<16x128xf32>
    %cst_25 = arith.constant dense<0.000000e+00> : vector<16xf32>
    %48 = vector.multi_reduction <add>, %47, %cst_25 [1] : vector<16x128xf32> to vector<16xf32>
    %49 = vector.shape_cast %48 : vector<16xf32> to vector<16x1xf32>
    %cst_26 = arith.constant 1.000000e-24 : f32
    %50 = vector.broadcast %cst_26 : f32 to vector<16x1xf32>
    %51 = arith.maximumf %49, %50 : vector<16x1xf32>
    %52 = math.rsqrt %51 : vector<16x1xf32>
    %53 = vector.broadcast %52 : vector<16x1xf32> to vector<16x128xf32>
    %54 = arith.mulf %46, %53 : vector<16x128xf32>
    %cst_27 = arith.constant dense<0.000000e+00> : vector<16x128xf32>
    %55 = tpu.matmul %21, %17, %cst_27 {dimension_numbers = #tpu.dot_dimension_numbers<[1], [0], [0], [1], [0, 0, 1, 1], [], []>} : vector<16x1024xbf16>, vector<1024x128xbf16>, vector<16x128xf32> -> vector<16x128xf32>
    %56 = vector.broadcast %13 : vector<1x128xf32> to vector<16x128xf32>
    %57 = arith.addf %55, %56 : vector<16x128xf32>
    %58 = arith.mulf %57, %57 : vector<16x128xf32>
    %cst_28 = arith.constant dense<0.000000e+00> : vector<16xf32>
    %59 = vector.multi_reduction <add>, %58, %cst_28 [1] : vector<16x128xf32> to vector<16xf32>
    %60 = vector.shape_cast %59 : vector<16xf32> to vector<16x1xf32>
    %cst_29 = arith.constant 1.000000e-24 : f32
    %61 = vector.broadcast %cst_29 : f32 to vector<16x1xf32>
    %62 = arith.maximumf %60, %61 : vector<16x1xf32>
    %63 = math.rsqrt %62 : vector<16x1xf32>
    %64 = vector.broadcast %63 : vector<16x1xf32> to vector<16x128xf32>
    %65 = arith.mulf %57, %64 : vector<16x128xf32>
    %66 = arith.truncf %54 : vector<16x128xf32> to vector<16x128xbf16>
    %c0_30 = arith.constant 0 : index
    %c0_31 = arith.constant 0 : index
    %67 = vector.load %arg9[%c0_30, %c0_31] : memref<16x128xbf16, #tpu.memory_space<vmem>>, vector<16x128xbf16>
    tpu.vector_store %arg9[%c0_30, %c0_31], %66 {strides = array<i32>} : memref<16x128xbf16, #tpu.memory_space<vmem>>, vector<16x128xbf16>,
    %68 = arith.truncf %65 : vector<16x128xf32> to vector<16x128xbf16>
    %c0_32 = arith.constant 0 : index
    %c0_33 = arith.constant 0 : index
    %69 = vector.load %arg10[%c0_32, %c0_33] : memref<16x128xbf16, #tpu.memory_space<vmem>>, vector<16x128xbf16>
    tpu.vector_store %arg10[%c0_32, %c0_33], %68 {strides = array<i32>} : memref<16x128xbf16, #tpu.memory_space<vmem>>, vector<16x128xbf16>,
    %70 = tpu.concatenate %32, %43 in 0 : vector<16x128xf32>, vector<16x128xf32> -> vector<32x128xf32>
    %71 = tpu.concatenate %65, %54 in 0 : vector<16x128xf32>, vector<16x128xf32> -> vector<32x128xf32>
    %72 = arith.mulf %70, %71 : vector<32x128xf32>
    %cst_34 = arith.constant dense<0.000000e+00> : vector<32xf32>
    %73 = vector.multi_reduction <add>, %72, %cst_34 [1] : vector<32x128xf32> to vector<32xf32>
    %74 = vector.shape_cast %73 : vector<32xf32> to vector<32x1xf32>
    %75 = arith.truncf %70 : vector<32x128xf32> to vector<32x128xbf16>
    %cst_35 = arith.constant 1.000000e+00 : f32
    %76 = vector.broadcast %cst_35 : f32 to vector<32x1xf32>
    %77 = arith.subf %74, %76 : vector<32x1xf32>
    %cst_36 = arith.constant 1.000000e+01 : f32
    %78 = vector.broadcast %cst_36 : f32 to vector<32x1xf32>
    %79 = arith.mulf %77, %78 : vector<32x1xf32>
    %80 = math.exp %79 : vector<32x1xf32>
    %c0_37 = arith.constant 0 : index
    %c0_38 = arith.constant 0 : index
    %81 = vector.load %arg7[%c0_37, %c0_38] : memref<128x4096xbf16, #tpu.memory_space<vmem>>, vector<128x512xbf16>
    %cst_39 = arith.constant dense<0.000000e+00> : vector<32x512xf32>
    %82 = tpu.matmul %75, %81, %cst_39 {dimension_numbers = #tpu.dot_dimension_numbers<[1], [0], [0], [1], [0, 0, 1, 1], [], []>} : vector<32x128xbf16>, vector<128x512xbf16>, vector<32x512xf32> -> vector<32x512xf32>
    %cst_40 = arith.constant 1.000000e+00 : f32
    %83 = vector.broadcast %cst_40 : f32 to vector<32x512xf32>
    %84 = arith.subf %82, %83 : vector<32x512xf32>
    %cst_41 = arith.constant 1.000000e+01 : f32
    %85 = vector.broadcast %cst_41 : f32 to vector<32x512xf32>
    %86 = arith.mulf %84, %85 : vector<32x512xf32>
    %87 = math.exp %86 : vector<32x512xf32>
    %cst_42 = arith.constant dense<0.000000e+00> : vector<32xf32>
    %88 = vector.multi_reduction <add>, %87, %cst_42 [1] : vector<32x512xf32> to vector<32xf32>
    %89 = vector.shape_cast %88 : vector<32xf32> to vector<32x1xf32>
    %90 = arith.addf %80, %89 : vector<32x1xf32>
    %c0_43 = arith.constant 0 : index
    %c512 = arith.constant 512 : index
    %91 = vector.load %arg7[%c0_43, %c512] : memref<128x4096xbf16, #tpu.memory_space<vmem>>, vector<128x512xbf16>
    %cst_44 = arith.constant dense<0.000000e+00> : vector<32x512xf32>
    %92 = tpu.matmul %75, %91, %cst_44 {dimension_numbers = #tpu.dot_dimension_numbers<[1], [0], [0], [1], [0, 0, 1, 1], [], []>} : vector<32x128xbf16>, vector<128x512xbf16>, vector<32x512xf32> -> vector<32x512xf32>
    %cst_45 = arith.constant 1.000000e+00 : f32
    %93 = vector.broadcast %cst_45 : f32 to vector<32x512xf32>
    %94 = arith.subf %92, %93 : vector<32x512xf32>
    %cst_46 = arith.constant 1.000000e+01 : f32
    %95 = vector.broadcast %cst_46 : f32 to vector<32x512xf32>
    %96 = arith.mulf %94, %95 : vector<32x512xf32>
    %97 = math.exp %96 : vector<32x512xf32>
    %cst_47 = arith.constant dense<0.000000e+00> : vector<32xf32>
    %98 = vector.multi_reduction <add>, %97, %cst_47 [1] : vector<32x512xf32> to vector<32xf32>
    %99 = vector.shape_cast %98 : vector<32xf32> to vector<32x1xf32>
    %100 = arith.addf %90, %99 : vector<32x1xf32>
    %c0_48 = arith.constant 0 : index
    %c1024 = arith.constant 1024 : index
    %101 = vector.load %arg7[%c0_48, %c1024] : memref<128x4096xbf16, #tpu.memory_space<vmem>>, vector<128x512xbf16>
    %cst_49 = arith.constant dense<0.000000e+00> : vector<32x512xf32>
    %102 = tpu.matmul %75, %101, %cst_49 {dimension_numbers = #tpu.dot_dimension_numbers<[1], [0], [0], [1], [0, 0, 1, 1], [], []>} : vector<32x128xbf16>, vector<128x512xbf16>, vector<32x512xf32> -> vector<32x512xf32>
    %cst_50 = arith.constant 1.000000e+00 : f32
    %103 = vector.broadcast %cst_50 : f32 to vector<32x512xf32>
    %104 = arith.subf %102, %103 : vector<32x512xf32>
    %cst_51 = arith.constant 1.000000e+01 : f32
    %105 = vector.broadcast %cst_51 : f32 to vector<32x512xf32>
    %106 = arith.mulf %104, %105 : vector<32x512xf32>
    %107 = math.exp %106 : vector<32x512xf32>
    %cst_52 = arith.constant dense<0.000000e+00> : vector<32xf32>
    %108 = vector.multi_reduction <add>, %107, %cst_52 [1] : vector<32x512xf32> to vector<32xf32>
    %109 = vector.shape_cast %108 : vector<32xf32> to vector<32x1xf32>
    %110 = arith.addf %100, %109 : vector<32x1xf32>
    %c0_53 = arith.constant 0 : index
    %c1536 = arith.constant 1536 : index
    %111 = vector.load %arg7[%c0_53, %c1536] : memref<128x4096xbf16, #tpu.memory_space<vmem>>, vector<128x512xbf16>
    %cst_54 = arith.constant dense<0.000000e+00> : vector<32x512xf32>
    %112 = tpu.matmul %75, %111, %cst_54 {dimension_numbers = #tpu.dot_dimension_numbers<[1], [0], [0], [1], [0, 0, 1, 1], [], []>} : vector<32x128xbf16>, vector<128x512xbf16>, vector<32x512xf32> -> vector<32x512xf32>
    %cst_55 = arith.constant 1.000000e+00 : f32
    %113 = vector.broadcast %cst_55 : f32 to vector<32x512xf32>
    %114 = arith.subf %112, %113 : vector<32x512xf32>
    %cst_56 = arith.constant 1.000000e+01 : f32
    %115 = vector.broadcast %cst_56 : f32 to vector<32x512xf32>
    %116 = arith.mulf %114, %115 : vector<32x512xf32>
    %117 = math.exp %116 : vector<32x512xf32>
    %cst_57 = arith.constant dense<0.000000e+00> : vector<32xf32>
    %118 = vector.multi_reduction <add>, %117, %cst_57 [1] : vector<32x512xf32> to vector<32xf32>
    %119 = vector.shape_cast %118 : vector<32xf32> to vector<32x1xf32>
    %120 = arith.addf %110, %119 : vector<32x1xf32>
    %c0_58 = arith.constant 0 : index
    %c2048 = arith.constant 2048 : index
    %121 = vector.load %arg7[%c0_58, %c2048] : memref<128x4096xbf16, #tpu.memory_space<vmem>>, vector<128x512xbf16>
    %cst_59 = arith.constant dense<0.000000e+00> : vector<32x512xf32>
    %122 = tpu.matmul %75, %121, %cst_59 {dimension_numbers = #tpu.dot_dimension_numbers<[1], [0], [0], [1], [0, 0, 1, 1], [], []>} : vector<32x128xbf16>, vector<128x512xbf16>, vector<32x512xf32> -> vector<32x512xf32>
    %cst_60 = arith.constant 1.000000e+00 : f32
    %123 = vector.broadcast %cst_60 : f32 to vector<32x512xf32>
    %124 = arith.subf %122, %123 : vector<32x512xf32>
    %cst_61 = arith.constant 1.000000e+01 : f32
    %125 = vector.broadcast %cst_61 : f32 to vector<32x512xf32>
    %126 = arith.mulf %124, %125 : vector<32x512xf32>
    %127 = math.exp %126 : vector<32x512xf32>
    %cst_62 = arith.constant dense<0.000000e+00> : vector<32xf32>
    %128 = vector.multi_reduction <add>, %127, %cst_62 [1] : vector<32x512xf32> to vector<32xf32>
    %129 = vector.shape_cast %128 : vector<32xf32> to vector<32x1xf32>
    %130 = arith.addf %120, %129 : vector<32x1xf32>
    %c0_63 = arith.constant 0 : index
    %c2560 = arith.constant 2560 : index
    %131 = vector.load %arg7[%c0_63, %c2560] : memref<128x4096xbf16, #tpu.memory_space<vmem>>, vector<128x512xbf16>
    %cst_64 = arith.constant dense<0.000000e+00> : vector<32x512xf32>
    %132 = tpu.matmul %75, %131, %cst_64 {dimension_numbers = #tpu.dot_dimension_numbers<[1], [0], [0], [1], [0, 0, 1, 1], [], []>} : vector<32x128xbf16>, vector<128x512xbf16>, vector<32x512xf32> -> vector<32x512xf32>
    %cst_65 = arith.constant 1.000000e+00 : f32
    %133 = vector.broadcast %cst_65 : f32 to vector<32x512xf32>
    %134 = arith.subf %132, %133 : vector<32x512xf32>
    %cst_66 = arith.constant 1.000000e+01 : f32
    %135 = vector.broadcast %cst_66 : f32 to vector<32x512xf32>
    %136 = arith.mulf %134, %135 : vector<32x512xf32>
    %137 = math.exp %136 : vector<32x512xf32>
    %cst_67 = arith.constant dense<0.000000e+00> : vector<32xf32>
    %138 = vector.multi_reduction <add>, %137, %cst_67 [1] : vector<32x512xf32> to vector<32xf32>
    %139 = vector.shape_cast %138 : vector<32xf32> to vector<32x1xf32>
    %140 = arith.addf %130, %139 : vector<32x1xf32>
    %c0_68 = arith.constant 0 : index
    %c3072 = arith.constant 3072 : index
    %141 = vector.load %arg7[%c0_68, %c3072] : memref<128x4096xbf16, #tpu.memory_space<vmem>>, vector<128x512xbf16>
    %cst_69 = arith.constant dense<0.000000e+00> : vector<32x512xf32>
    %142 = tpu.matmul %75, %141, %cst_69 {dimension_numbers = #tpu.dot_dimension_numbers<[1], [0], [0], [1], [0, 0, 1, 1], [], []>} : vector<32x128xbf16>, vector<128x512xbf16>, vector<32x512xf32> -> vector<32x512xf32>
    %cst_70 = arith.constant 1.000000e+00 : f32
    %143 = vector.broadcast %cst_70 : f32 to vector<32x512xf32>
    %144 = arith.subf %142, %143 : vector<32x512xf32>
    %cst_71 = arith.constant 1.000000e+01 : f32
    %145 = vector.broadcast %cst_71 : f32 to vector<32x512xf32>
    %146 = arith.mulf %144, %145 : vector<32x512xf32>
    %147 = math.exp %146 : vector<32x512xf32>
    %cst_72 = arith.constant dense<0.000000e+00> : vector<32xf32>
    %148 = vector.multi_reduction <add>, %147, %cst_72 [1] : vector<32x512xf32> to vector<32xf32>
    %149 = vector.shape_cast %148 : vector<32xf32> to vector<32x1xf32>
    %150 = arith.addf %140, %149 : vector<32x1xf32>
    %c0_73 = arith.constant 0 : index
    %c3584 = arith.constant 3584 : index
    %151 = vector.load %arg7[%c0_73, %c3584] : memref<128x4096xbf16, #tpu.memory_space<vmem>>, vector<128x512xbf16>
    %cst_74 = arith.constant dense<0.000000e+00> : vector<32x512xf32>
    %152 = tpu.matmul %75, %151, %cst_74 {dimension_numbers = #tpu.dot_dimension_numbers<[1], [0], [0], [1], [0, 0, 1, 1], [], []>} : vector<32x128xbf16>, vector<128x512xbf16>, vector<32x512xf32> -> vector<32x512xf32>
    %cst_75 = arith.constant 1.000000e+00 : f32
    %153 = vector.broadcast %cst_75 : f32 to vector<32x512xf32>
    %154 = arith.subf %152, %153 : vector<32x512xf32>
    %cst_76 = arith.constant 1.000000e+01 : f32
    %155 = vector.broadcast %cst_76 : f32 to vector<32x512xf32>
    %156 = arith.mulf %154, %155 : vector<32x512xf32>
    %157 = math.exp %156 : vector<32x512xf32>
    %cst_77 = arith.constant dense<0.000000e+00> : vector<32xf32>
    %158 = vector.multi_reduction <add>, %157, %cst_77 [1] : vector<32x512xf32> to vector<32xf32>
    %159 = vector.shape_cast %158 : vector<32xf32> to vector<32x1xf32>
    %160 = arith.addf %150, %159 : vector<32x1xf32>
    %161 = math.log %160 : vector<32x1xf32>
    %cst_78 = arith.constant 1.000000e+01 : f32
    %162 = vector.broadcast %cst_78 : f32 to vector<32x1xf32>
    %163 = arith.addf %162, %161 : vector<32x1xf32>
    %cst_79 = arith.constant 1.000000e+01 : f32
    %164 = vector.broadcast %cst_79 : f32 to vector<32x1xf32>
    %165 = arith.mulf %74, %164 : vector<32x1xf32>
    %166 = arith.subf %163, %165 : vector<32x1xf32>
    %167 = tpu.iota {dimensions = array<i32: 0>} : vector<32x1xi32>
    %c16_i32 = arith.constant 16 : i32
    %168 = vector.broadcast %c16_i32 : i32 to vector<32x1xi32>
    %169 = arith.cmpi slt, %167, %168 : vector<32x1xi32>
    %c16_i32_80 = arith.constant 16 : i32
    %170 = vector.broadcast %c16_i32_80 : i32 to vector<32x1xi32>
    %171 = arith.subi %167, %170 : vector<32x1xi32>
    %172 = arith.select %169, %167, %171 : vector<32x1xi1>, vector<32x1xi32>
    %c16_i32_81 = arith.constant 16 : i32
    %173 = arith.muli %arg0, %c16_i32_81 : i32
    %174 = vector.broadcast %173 : i32 to vector<32x1xi32>
    %175 = arith.addi %174, %172 : vector<32x1xi32>
    %c2_i32 = arith.constant 2 : i32
    %176 = vector.broadcast %c2_i32 : i32 to vector<32x1xi32>
    %177 = arith.cmpi slt, %175, %176 : vector<32x1xi32>
    %cst_82 = arith.constant 0.000000e+00 : f32
    %178 = vector.broadcast %cst_82 : f32 to vector<32x1xf32>
    %179 = arith.select %177, %166, %178 : vector<32x1xi1>, vector<32x1xf32>
    %cst_83 = arith.constant dense<0.000000e+00> : vector<1xf32>
    %180 = vector.multi_reduction <add>, %179, %cst_83 [0] : vector<32x1xf32> to vector<1xf32>
    %181 = vector.shape_cast %180 : vector<1xf32> to vector<1x1xf32>
    %182 = vector.shape_cast %181 : vector<1x1xf32> to vector<1x1xf32>
    %183 = vector.broadcast %182 : vector<1x1xf32> to vector<8x128xf32>
    %c0_84 = arith.constant 0 : index
    %c0_85 = arith.constant 0 : index
    %184 = vector.load %arg8[%c0_84, %c0_85] : memref<8x128xf32, #tpu.memory_space<vmem>>, vector<8x128xf32>
    tpu.vector_store %arg8[%c0_84, %c0_85], %183 {strides = array<i32>} : memref<8x128xf32, #tpu.memory_space<vmem>>, vector<8x128xf32>,
    return
  }
  func.func @transform_0(%arg0: i32) -> (i32, i32) {
    %c0_i32 = arith.constant 0 : i32
    %c0_i32_0 = arith.constant 0 : i32
    return %arg0, %c0_i32 : i32, i32
  }
  func.func @transform_1(%arg0: i32) -> (i32, i32) {
    %c0_i32 = arith.constant 0 : i32
    %c0_i32_0 = arith.constant 0 : i32
    return %arg0, %c0_i32 : i32, i32
  }
  func.func @transform_2(%arg0: i32) -> (i32, i32) {
    %c0_i32 = arith.constant 0 : i32
    %c0_i32_0 = arith.constant 0 : i32
    %c0_i32_1 = arith.constant 0 : i32
    return %c0_i32, %c0_i32_0 : i32, i32
  }
  func.func @transform_3(%arg0: i32) -> (i32, i32) {
    %c0_i32 = arith.constant 0 : i32
    %c0_i32_0 = arith.constant 0 : i32
    %c0_i32_1 = arith.constant 0 : i32
    return %c0_i32, %c0_i32_0 : i32, i32
  }
  func.func @transform_4(%arg0: i32) -> (i32, i32) {
    %c0_i32 = arith.constant 0 : i32
    %c0_i32_0 = arith.constant 0 : i32
    %c0_i32_1 = arith.constant 0 : i32
    return %c0_i32, %c0_i32_0 : i32, i32
  }
  func.func @transform_5(%arg0: i32) -> (i32, i32) {
    %c0_i32 = arith.constant 0 : i32
    %c0_i32_0 = arith.constant 0 : i32
    %c0_i32_1 = arith.constant 0 : i32
    return %c0_i32, %c0_i32_0 : i32, i32
  }
  func.func @transform_6(%arg0: i32) -> (i32, i32) {
    %c0_i32 = arith.constant 0 : i32
    %c0_i32_0 = arith.constant 0 : i32
    %c0_i32_1 = arith.constant 0 : i32
    return %c0_i32, %c0_i32_0 : i32, i32
  }
  func.func @transform_7(%arg0: i32) -> (i32, i32) {
    %c0_i32 = arith.constant 0 : i32
    %c0_i32_0 = arith.constant 0 : i32
    return %arg0, %c0_i32 : i32, i32
  }
  func.func @transform_8(%arg0: i32) -> (i32, i32) {
    %c0_i32 = arith.constant 0 : i32
    %c0_i32_0 = arith.constant 0 : i32
    return %arg0, %c0_i32 : i32, i32
  }
  func.func @transform_9(%arg0: i32) -> (i32, i32) {
    %c0_i32 = arith.constant 0 : i32
    %c0_i32_0 = arith.constant 0 : i32
    return %arg0, %c0_i32 : i32, i32
  }
  func.func @transform_10(%arg0: i32) -> (i32, i32) {
    %c0_i32 = arith.constant 0 : i32
    %c0_i32_0 = arith.constant 0 : i32
    %c0_i32_1 = arith.constant 0 : i32
    return %c0_i32, %c0_i32_0 : i32, i32
  }
  func.func @transform_11(%arg0: i32) -> (i32, i32) {
    %c0_i32 = arith.constant 0 : i32
    %c0_i32_0 = arith.constant 0 : i32
    %c0_i32_1 = arith.constant 0 : i32
    return %c0_i32, %c0_i32_0 : i32, i32
  }
}

</mosaic_0001>

<llo_original>
// kernel: tpu_custom_call.1
$region0: #{tpu_custom_call.1}
  #allocation0 [shape = 'u32[]', space=smem, size = 0x4, offset = 0x4, fixed_abs, tag = 'smem constant byte address 0x4 - core index']
  #allocation1 [shape = 'u32[144,128]{1,0:T(1,128)}', space=vmem, size = 0x12000, scoped, tag = 'internal scratch']
  %s0 = inlined_call_operand.hbm [shape: f32[16,1024], index: 0, kind: input, shape index: {}]
  %s1 = inlined_call_operand.hbm [shape: f32[16,1024], index: 1, kind: input, shape index: {}]
  %s2 = inlined_call_operand.hbm [shape: f32[1024,128], index: 2, kind: input, shape index: {}]
  %s3 = inlined_call_operand.vmem [shape: f32[1,128], index: 3, kind: input, shape index: {}]
  %s4 = inlined_call_operand.hbm [shape: f32[1024,128], index: 4, kind: input, shape index: {}]
  %s5 = inlined_call_operand.vmem [shape: f32[1,128], index: 5, kind: input, shape index: {}]
  %s6 = inlined_call_operand.hbm [shape: bf16[128,4096], index: 6, kind: input, shape index: {}]
  %s7 = inlined_call_operand.hbm [shape: f32[8,128], index: 7, kind: output, shape index: {0}]
  %s8 = inlined_call_operand.hbm [shape: bf16[16,128], index: 8, kind: output, shape index: {1}]
  %s9 = inlined_call_operand.hbm [shape: bf16[16,128], index: 9, kind: output, shape index: {2}]
  %s10 = inlined_call_operand.hbm [shape: f32[1024,128], index: 10, kind: output, shape index: {3}]
  %s11 = inlined_call_operand.hbm [shape: f32[1,128], index: 11, kind: output, shape index: {4}]
  %12 = xla_tuple %s7, %s8, %s9, %s10, %s11
  %s13 = sld [smem:[#allocation0]]
  $region90: #{tpu_custom_call.1} parent=0
    _
  %s15 = ssub.s32 1, %s13
  %s16 = scalar_select 0, %s15, %s13
  $region1: #{tpu_custom_call.1} parent=0
    #allocation2 [shape = 'u8[65536]{0}', space=vmem, size = 0x10000, scoped, tag = 'input window, operand 0, single buffered']
    #allocation3 [shape = 's32[1]{0}', space=sflag, size = 0x4, scoped, tag = 'scoped memory for tpu_custom_call.1']
    #allocation4 [shape = 's32[1]{0}', space=sflag, size = 0x4, scoped, tag = 'scoped memory for tpu_custom_call.1']
    #allocation5 [shape = 'u8[65536]{0}', space=vmem, size = 0x10000, scoped, tag = 'input window, operand 1, single buffered']
    #allocation6 [shape = 's32[1]{0}', space=sflag, size = 0x4, scoped, tag = 'scoped memory for tpu_custom_call.1']
    #allocation7 [shape = 'u8[524288]{0}', space=vmem, size = 0x80000, scoped, tag = 'input window, operand 2, single buffered']
    #allocation8 [shape = 'u8[524288]{0}', space=vmem, size = 0x80000, scoped, tag = 'input window, operand 4, single buffered']
    #allocation9 [shape = 's32[1]{0}', space=sflag, size = 0x4, scoped, tag = 'scoped memory for tpu_custom_call.1']
    #allocation10 [shape = 'u8[1048576]{0}', space=vmem, size = 0x100000, scoped, tag = 'input window, operand 6, single buffered']
    #allocation11 [shape = 'u8[4096]{0}', space=vmem, size = 0x1000, scoped, tag = 'output window, operand 0, single buffered']
    #allocation12 [shape = 'u8[4096]{0}', space=vmem, size = 0x1000, scoped, tag = 'output window, operand 1, single buffered']
    #allocation13 [shape = 's32[1]{0}', space=sflag, size = 0x4, scoped, tag = 'scoped memory for tpu_custom_call.1']
    #allocation14 [shape = 'u8[4096]{0}', space=vmem, size = 0x1000, scoped, tag = 'output window, operand 2, single buffered']
    #allocation15 [shape = 'u8[524288]{0}', space=vmem, size = 0x80000, scoped, tag = 'output window, operand 3, single buffered']
    #allocation16 [shape = 's32[1]{0}', space=sflag, size = 0x4, scoped, tag = 'scoped memory for tpu_custom_call.1']
    #allocation17 [shape = 'u8[512]{0}', space=vmem, size = 0x400, scoped, tag = 'output window, operand 4, single buffered']
    %17 = vsyncpa [#allocation3], 0
    %18 = vsyncpa [#allocation6], 0
    %19 = vsyncpa [#allocation9], 0
    %20 = vsyncpa [#allocation4], 0
    %21 = vsyncpa [#allocation13], 0
    %22 = vsyncpa [#allocation16], 0
    // Predicated region
    $region2: #{tpu_custom_call.1} parent=1 // pred_check
      _
    $region3: #{tpu_custom_call.1} parent=1 // pred_check_branch
      %24 = sbr.rel (0) target = $region5
    $region4: #{tpu_custom_call.1} parent=1 // pred_region
      %s26 = ssub.s32 2048, 2048
      %27 = vsyncadd [#allocation3], %s26
      %s28 = sshll.u32 [#allocation2], 4
      %s29 = int_to_ptr.vmem [resolvable:$true] %s28
      %34 = dma.hbm_to_vmem [thread:$0]  %s0, 2048, %s29, [#allocation3], 1024, 1024, 64
    $region5: #{tpu_custom_call.1} parent=1 // pred_fallthru
      _
    // Predicated region
    $region6: #{tpu_custom_call.1} parent=1 // pred_check
      _
    $region7: #{tpu_custom_call.1} parent=1 // pred_check_branch
      %36 = sbr.rel (0) target = $region9
    $region8: #{tpu_custom_call.1} parent=1 // pred_region
      %s38 = ssub.s32 2048, 2048
      %39 = vsyncadd [#allocation6], %s38
      %s40 = sshll.u32 [#allocation5], 4
      %s41 = int_to_ptr.vmem [resolvable:$true] %s40
      %46 = dma.hbm_to_vmem [thread:$0]  %s1, 2048, %s41, [#allocation6], 1024, 1024, 64
    $region9: #{tpu_custom_call.1} parent=1 // pred_fallthru
      _
    // Predicated region
    $region10: #{tpu_custom_call.1} parent=1 // pred_check
      _
    $region11: #{tpu_custom_call.1} parent=1 // pred_check_branch
      %48 = sbr.rel (0) target = $region13
    $region12: #{tpu_custom_call.1} parent=1 // pred_region
      %s50 = ssub.s32 16384, 16384
      %51 = vsyncadd [#allocation6], %s50
      %s52 = sshll.u32 [#allocation7], 4
      %s53 = int_to_ptr.vmem [resolvable:$true] %s52
      %58 = dma.hbm_to_vmem [thread:$0]  %s2, 16384, %s53, [#allocation6], 128, 128, 8
    $region13: #{tpu_custom_call.1} parent=1 // pred_fallthru
      _
    // Predicated region
    $region14: #{tpu_custom_call.1} parent=1 // pred_check
      _
    $region15: #{tpu_custom_call.1} parent=1 // pred_check_branch
      %60 = sbr.rel (0) target = $region17
    $region16: #{tpu_custom_call.1} parent=1 // pred_region
      _
    $region17: #{tpu_custom_call.1} parent=1 // pred_fallthru
      _
    // Predicated region
    $region18: #{tpu_custom_call.1} parent=1 // pred_check
      _
    $region19: #{tpu_custom_call.1} parent=1 // pred_check_branch
      %62 = sbr.rel (0) target = $region21
    $region20: #{tpu_custom_call.1} parent=1 // pred_region
      %s64 = ssub.s32 16384, 16384
      %65 = vsyncadd [#allocation9], %s64
      %s66 = sshll.u32 [#allocation8], 4
      %s67 = int_to_ptr.vmem [resolvable:$true] %s66
      %72 = dma.hbm_to_vmem [thread:$0]  %s4, 16384, %s67, [#allocation9], 128, 128, 8
    $region21: #{tpu_custom_call.1} parent=1 // pred_fallthru
      _
    // Predicated region
    $region22: #{tpu_custom_call.1} parent=1 // pred_check
      _
    $region23: #{tpu_custom_call.1} parent=1 // pred_check_branch
      %74 = sbr.rel (0) target = $region25
    $region24: #{tpu_custom_call.1} parent=1 // pred_region
      _
    $region25: #{tpu_custom_call.1} parent=1 // pred_fallthru
      _
    // Predicated region
    $region26: #{tpu_custom_call.1} parent=1 // pred_check
      _
    $region27: #{tpu_custom_call.1} parent=1 // pred_check_branch
      %76 = sbr.rel (0) target = $region29
    $region28: #{tpu_custom_call.1} parent=1 // pred_region
      %s78 = ssub.s32 32768, 32768
      %79 = vsyncadd [#allocation9], %s78
      %s80 = sshll.u32 [#allocation10], 4
      %s81 = int_to_ptr.vmem [resolvable:$true] %s80
      %86 = dma.hbm_to_vmem [thread:$0]  %s6, 32768, %s81, [#allocation9], 2048, 2048, 128
    $region29: #{tpu_custom_call.1} parent=1 // pred_fallthru
      _
    // Predicated region
    $region30: #{tpu_custom_call.1} parent=1 // pred_check
      _
    $region31: #{tpu_custom_call.1} parent=1 // pred_check_branch
      %88 = sbr.rel (0) target = $region33
    $region32: #{tpu_custom_call.1} parent=1 // pred_region
      %89 = dma.done [#allocation3], 2048
    $region33: #{tpu_custom_call.1} parent=1 // pred_fallthru
      _
    // Predicated region
    $region34: #{tpu_custom_call.1} parent=1 // pred_check
      _
    $region35: #{tpu_custom_call.1} parent=1 // pred_check_branch
      %91 = sbr.rel (0) target = $region37
    $region36: #{tpu_custom_call.1} parent=1 // pred_region
      %92 = dma.done [#allocation6], 2048
    $region37: #{tpu_custom_call.1} parent=1 // pred_fallthru
      _
    // Predicated region
    $region38: #{tpu_custom_call.1} parent=1 // pred_check
      _
    $region39: #{tpu_custom_call.1} parent=1 // pred_check_branch
      %94 = sbr.rel (0) target = $region41
    $region40: #{tpu_custom_call.1} parent=1 // pred_region
      %95 = dma.done [#allocation6], 16384
    $region41: #{tpu_custom_call.1} parent=1 // pred_fallthru
      _
    // Predicated region
    $region42: #{tpu_custom_call.1} parent=1 // pred_check
      _
    $region43: #{tpu_custom_call.1} parent=1 // pred_check_branch
      %97 = sbr.rel (0) target = $region45
    $region44: #{tpu_custom_call.1} parent=1 // pred_region
      %98 = dma.done [#allocation9], 16384
    $region45: #{tpu_custom_call.1} parent=1 // pred_fallthru
      _
    // Predicated region
    $region46: #{tpu_custom_call.1} parent=1 // pred_check
      _
    $region47: #{tpu_custom_call.1} parent=1 // pred_check_branch
      %100 = sbr.rel (0) target = $region49
    $region48: #{tpu_custom_call.1} parent=1 // pred_region
      %101 = dma.done [#allocation9], 32768
    $region49: #{tpu_custom_call.1} parent=1 // pred_fallthru
      _
    %v103 = vld [vmem:[#allocation7] sm:$0xff]
    %v104 = vld [vmem:[#allocation7 + $0x8] sm:$0xff]
    %v105 = vld [vmem:[#allocation7 + $0x10] sm:$0xff]
    %v106 = vld [vmem:[#allocation7 + $0x18] sm:$0xff]
    %v107 = vld [vmem:[#allocation7 + $0x20] sm:$0xff]
    %v108 = vld [vmem:[#allocation7 + $0x28] sm:$0xff]
    %v109 = vld [vmem:[#allocation7 + $0x30] sm:$0xff]
    %v110 = vld [vmem:[#allocation7 + $0x38] sm:$0xff]
    %v111 = vld [vmem:[#allocation7 + $0x40] sm:$0xff]
    %v112 = vld [vmem:[#allocation7 + $0x48] sm:$0xff]
    %v113 = vld [vmem:[#allocation7 + $0x50] sm:$0xff]
    %v114 = vld [vmem:[#allocation7 + $0x58] sm:$0xff]
    %v115 = vld [vmem:[#allocation7 + $0x60] sm:$0xff]
    %v116 = vld [vmem:[#allocation7 + $0x68] sm:$0xff]
    %v117 = vld [vmem:[#allocation7 + $0x70] sm:$0xff]
    %v118 = vld [vmem:[#allocation7 + $0x78] sm:$0xff]
    %v119 = vld [vmem:[#allocation7 + $0x80] sm:$0xff]
    %v120 = vld [vmem:[#allocation7 + $0x88] sm:$0xff]
    %v121 = vld [vmem:[#allocation7 + $0x90] sm:$0xff]
    %v122 = vld [vmem:[#allocation7 + $0x98] sm:$0xff]
    %v123 = vld [vmem:[#allocation7 + $0xa0] sm:$0xff]
    %v124 = vld [vmem:[#allocation7 + $0xa8] sm:$0xff]
    %v125 = vld [vmem:[#allocation7 + $0xb0] sm:$0xff]
    %v126 = vld [vmem:[#allocation7 + $0xb8] sm:$0xff]
    %v127 = vld [vmem:[#allocation7 + $0xc0] sm:$0xff]
    %v128 = vld [vmem:[#allocation7 + $0xc8] sm:$0xff]
    %v129 = vld [vmem:[#allocation7 + $0xd0] sm:$0xff]
    %v130 = vld [vmem:[#allocation7 + $0xd8] sm:$0xff]
    %v131 = vld [vmem:[#allocation7 + $0xe0] sm:$0xff]
    %v132 = vld [vmem:[#allocation7 + $0xe8] sm:$0xff]
    %v133 = vld [vmem:[#allocation7 + $0xf0] sm:$0xff]
    %v134 = vld [vmem:[#allocation7 + $0xf8] sm:$0xff]
    %v135 = vld [vmem:[#allocation7 + $0x100] sm:$0xff]
    %v136 = vld [vmem:[#allocation7 + $0x108] sm:$0xff]
    %v137 = vld [vmem:[#allocation7 + $0x110] sm:$0xff]
    %v138 = vld [vmem:[#allocation7 + $0x118] sm:$0xff]
    %v139 = vld [vmem:[#allocation7 + $0x120] sm:$0xff]
    %v140 = vld [vmem:[#allocation7 + $0x128] sm:$0xff]
    %v141 = vld [vmem:[#allocation7 + $0x130] sm:$0xff]
    %v142 = vld [vmem:[#allocation7 + $0x138] sm:$0xff]
    %v143 = vld [vmem:[#allocation7 + $0x140] sm:$0xff]
    %v144 = vld [vmem:[#allocation7 + $0x148] sm:$0xff]
    %v145 = vld [vmem:[#allocation7 + $0x150] sm:$0xff]
    %v146 = vld [vmem:[#allocation7 + $0x158] sm:$0xff]
    %v147 = vld [vmem:[#allocation7 + $0x160] sm:$0xff]
    %v148 = vld [vmem:[#allocation7 + $0x168] sm:$0xff]
    %v149 = vld [vmem:[#allocation7 + $0x170] sm:$0xff]
    %v150 = vld [vmem:[#allocation7 + $0x178] sm:$0xff]
    %v151 = vld [vmem:[#allocation7 + $0x180] sm:$0xff]
    %v152 = vld [vmem:[#allocation7 + $0x188] sm:$0xff]
    %v153 = vld [vmem:[#allocation7 + $0x190] sm:$0xff]
    %v154 = vld [vmem:[#allocation7 + $0x198] sm:$0xff]
    %v155 = vld [vmem:[#allocation7 + $0x1a0] sm:$0xff]
    %v156 = vld [vmem:[#allocation7 + $0x1a8] sm:$0xff]
    %v157 = vld [vmem:[#allocation7 + $0x1b0] sm:$0xff]
    %v158 = vld [vmem:[#allocation7 + $0x1b8] sm:$0xff]
    %v159 = vld [vmem:[#allocation7 + $0x1c0] sm:$0xff]
    %v160 = vld [vmem:[#allocation7 + $0x1c8] sm:$0xff]
    %v161 = vld [vmem:[#allocation7 + $0x1d0] sm:$0xff]
    %v162 = vld [vmem:[#allocation7 + $0x1d8] sm:$0xff]
    %v163 = vld [vmem:[#allocation7 + $0x1e0] sm:$0xff]
    %v164 = vld [vmem:[#allocation7 + $0x1e8] sm:$0xff]
    %v165 = vld [vmem:[#allocation7 + $0x1f0] sm:$0xff]
    %v166 = vld [vmem:[#allocation7 + $0x1f8] sm:$0xff]
    %v167 = vld [vmem:[#allocation7 + $0x200] sm:$0xff]
    %v168 = vld [vmem:[#allocation7 + $0x208] sm:$0xff]
    %v169 = vld [vmem:[#allocation7 + $0x210] sm:$0xff]
    %v170 = vld [vmem:[#allocation7 + $0x218] sm:$0xff]
    %v171 = vld [vmem:[#allocation7 + $0x220] sm:$0xff]
    %v172 = vld [vmem:[#allocation7 + $0x228] sm:$0xff]
    %v173 = vld [vmem:[#allocation7 + $0x230] sm:$0xff]
    %v174 = vld [vmem:[#allocation7 + $0x238] sm:$0xff]
    %v175 = vld [vmem:[#allocation7 + $0x240] sm:$0xff]
    %v176 = vld [vmem:[#allocation7 + $0x248] sm:$0xff]
    %v177 = vld [vmem:[#allocation7 + $0x250] sm:$0xff]
    %v178 = vld [vmem:[#allocation7 + $0x258] sm:$0xff]
    %v179 = vld [vmem:[#allocation7 + $0x260] sm:$0xff]
    %v180 = vld [vmem:[#allocation7 + $0x268] sm:$0xff]
    %v181 = vld [vmem:[#allocation7 + $0x270] sm:$0xff]
    %v182 = vld [vmem:[#allocation7 + $0x278] sm:$0xff]
    %v183 = vld [vmem:[#allocation7 + $0x280] sm:$0xff]
    %v184 = vld [vmem:[#allocation7 + $0x288] sm:$0xff]
    %v185 = vld [vmem:[#allocation7 + $0x290] sm:$0xff]
    %v186 = vld [vmem:[#allocation7 + $0x298] sm:$0xff]
    %v187 = vld [vmem:[#allocation7 + $0x2a0] sm:$0xff]
    %v188 = vld [vmem:[#allocation7 + $0x2a8] sm:$0xff]
    %v189 = vld [vmem:[#allocation7 + $0x2b0] sm:$0xff]
    %v190 = vld [vmem:[#allocation7 + $0x2b8] sm:$0xff]
    %v191 = vld [vmem:[#allocation7 + $0x2c0] sm:$0xff]
    %v192 = vld [vmem:[#allocation7 + $0x2c8] sm:$0xff]
    %v193 = vld [vmem:[#allocation7 + $0x2d0] sm:$0xff]
    %v194 = vld [vmem:[#allocation7 + $0x2d8] sm:$0xff]
    %v195 = vld [vmem:[#allocation7 + $0x2e0] sm:$0xff]
    %v196 = vld [vmem:[#allocation7 + $0x2e8] sm:$0xff]
    %v197 = vld [vmem:[#allocation7 + $0x2f0] sm:$0xff]
    %v198 = vld [vmem:[#allocation7 + $0x2f8] sm:$0xff]
    %v199 = vld [vmem:[#allocation7 + $0x300] sm:$0xff]
    %v200 = vld [vmem:[#allocation7 + $0x308] sm:$0xff]
    %v201 = vld [vmem:[#allocation7 + $0x310] sm:$0xff]
    %v202 = vld [vmem:[#allocation7 + $0x318] sm:$0xff]
    %v203 = vld [vmem:[#allocation7 + $0x320] sm:$0xff]
    %v204 = vld [vmem:[#allocation7 + $0x328] sm:$0xff]
    %v205 = vld [vmem:[#allocation7 + $0x330] sm:$0xff]
    %v206 = vld [vmem:[#allocation7 + $0x338] sm:$0xff]
    %v207 = vld [vmem:[#allocation7 + $0x340] sm:$0xff]
    %v208 = vld [vmem:[#allocation7 + $0x348] sm:$0xff]
    %v209 = vld [vmem:[#allocation7 + $0x350] sm:$0xff]
    %v210 = vld [vmem:[#allocation7 + $0x358] sm:$0xff]
    %v211 = vld [vmem:[#allocation7 + $0x360] sm:$0xff]
    %v212 = vld [vmem:[#allocation7 + $0x368] sm:$0xff]
    %v213 = vld [vmem:[#allocation7 + $0x370] sm:$0xff]
    %v214 = vld [vmem:[#allocation7 + $0x378] sm:$0xff]
    %v215 = vld [vmem:[#allocation7 + $0x380] sm:$0xff]
    %v216 = vld [vmem:[#allocation7 + $0x388] sm:$0xff]
    %v217 = vld [vmem:[#allocation7 + $0x390] sm:$0xff]
    %v218 = vld [vmem:[#allocation7 + $0x398] sm:$0xff]
    %v219 = vld [vmem:[#allocation7 + $0x3a0] sm:$0xff]
    %v220 = vld [vmem:[#allocation7 + $0x3a8] sm:$0xff]
    %v221 = vld [vmem:[#allocation7 + $0x3b0] sm:$0xff]
    %v222 = vld [vmem:[#allocation7 + $0x3b8] sm:$0xff]
    %v223 = vld [vmem:[#allocation7 + $0x3c0] sm:$0xff]
    %v224 = vld [vmem:[#allocation7 + $0x3c8] sm:$0xff]
    %v225 = vld [vmem:[#allocation7 + $0x3d0] sm:$0xff]
    %v226 = vld [vmem:[#allocation7 + $0x3d8] sm:$0xff]
    %v227 = vld [vmem:[#allocation7 + $0x3e0] sm:$0xff]
    %v228 = vld [vmem:[#allocation7 + $0x3e8] sm:$0xff]
    %v229 = vld [vmem:[#allocation7 + $0x3f0] sm:$0xff]
    %v230 = vld [vmem:[#allocation7 + $0x3f8] sm:$0xff]
    %v231 = vld [vmem:[%s3] sm:$0x1]
    %v232 = vld [vmem:[#allocation8] sm:$0xff]
    %v233 = vld [vmem:[#allocation8 + $0x8] sm:$0xff]
    %v234 = vld [vmem:[#allocation8 + $0x10] sm:$0xff]
    %v235 = vld [vmem:[#allocation8 + $0x18] sm:$0xff]
    %v236 = vld [vmem:[#allocation8 + $0x20] sm:$0xff]
    %v237 = vld [vmem:[#allocation8 + $0x28] sm:$0xff]
    %v238 = vld [vmem:[#allocation8 + $0x30] sm:$0xff]
    %v239 = vld [vmem:[#allocation8 + $0x38] sm:$0xff]
    %v240 = vld [vmem:[#allocation8 + $0x40] sm:$0xff]
    %v241 = vld [vmem:[#allocation8 + $0x48] sm:$0xff]
    %v242 = vld [vmem:[#allocation8 + $0x50] sm:$0xff]
    %v243 = vld [vmem:[#allocation8 + $0x58] sm:$0xff]
    %v244 = vld [vmem:[#allocation8 + $0x60] sm:$0xff]
    %v245 = vld [vmem:[#allocation8 + $0x68] sm:$0xff]
    %v246 = vld [vmem:[#allocation8 + $0x70] sm:$0xff]
    %v247 = vld [vmem:[#allocation8 + $0x78] sm:$0xff]
    %v248 = vld [vmem:[#allocation8 + $0x80] sm:$0xff]
    %v249 = vld [vmem:[#allocation8 + $0x88] sm:$0xff]
    %v250 = vld [vmem:[#allocation8 + $0x90] sm:$0xff]
    %v251 = vld [vmem:[#allocation8 + $0x98] sm:$0xff]
    %v252 = vld [vmem:[#allocation8 + $0xa0] sm:$0xff]
    %v253 = vld [vmem:[#allocation8 + $0xa8] sm:$0xff]
    %v254 = vld [vmem:[#allocation8 + $0xb0] sm:$0xff]
    %v255 = vld [vmem:[#allocation8 + $0xb8] sm:$0xff]
    %v256 = vld [vmem:[#allocation8 + $0xc0] sm:$0xff]
    %v257 = vld [vmem:[#allocation8 + $0xc8] sm:$0xff]
    %v258 = vld [vmem:[#allocation8 + $0xd0] sm:$0xff]
    %v259 = vld [vmem:[#allocation8 + $0xd8] sm:$0xff]
    %v260 = vld [vmem:[#allocation8 + $0xe0] sm:$0xff]
    %v261 = vld [vmem:[#allocation8 + $0xe8] sm:$0xff]
    %v262 = vld [vmem:[#allocation8 + $0xf0] sm:$0xff]
    %v263 = vld [vmem:[#allocation8 + $0xf8] sm:$0xff]
    %v264 = vld [vmem:[#allocation8 + $0x100] sm:$0xff]
    %v265 = vld [vmem:[#allocation8 + $0x108] sm:$0xff]
    %v266 = vld [vmem:[#allocation8 + $0x110] sm:$0xff]
    %v267 = vld [vmem:[#allocation8 + $0x118] sm:$0xff]
    %v268 = vld [vmem:[#allocation8 + $0x120] sm:$0xff]
    %v269 = vld [vmem:[#allocation8 + $0x128] sm:$0xff]
    %v270 = vld [vmem:[#allocation8 + $0x130] sm:$0xff]
    %v271 = vld [vmem:[#allocation8 + $0x138] sm:$0xff]
    %v272 = vld [vmem:[#allocation8 + $0x140] sm:$0xff]
    %v273 = vld [vmem:[#allocation8 + $0x148] sm:$0xff]
    %v274 = vld [vmem:[#allocation8 + $0x150] sm:$0xff]
    %v275 = vld [vmem:[#allocation8 + $0x158] sm:$0xff]
    %v276 = vld [vmem:[#allocation8 + $0x160] sm:$0xff]
    %v277 = vld [vmem:[#allocation8 + $0x168] sm:$0xff]
    %v278 = vld [vmem:[#allocation8 + $0x170] sm:$0xff]
    %v279 = vld [vmem:[#allocation8 + $0x178] sm:$0xff]
    %v280 = vld [vmem:[#allocation8 + $0x180] sm:$0xff]
    %v281 = vld [vmem:[#allocation8 + $0x188] sm:$0xff]
    %v282 = vld [vmem:[#allocation8 + $0x190] sm:$0xff]
    %v283 = vld [vmem:[#allocation8 + $0x198] sm:$0xff]
    %v284 = vld [vmem:[#allocation8 + $0x1a0] sm:$0xff]
    %v285 = vld [vmem:[#allocation8 + $0x1a8] sm:$0xff]
    %v286 = vld [vmem:[#allocation8 + $0x1b0] sm:$0xff]
    %v287 = vld [vmem:[#allocation8 + $0x1b8] sm:$0xff]
    %v288 = vld [vmem:[#allocation8 + $0x1c0] sm:$0xff]
    %v289 = vld [vmem:[#allocation8 + $0x1c8] sm:$0xff]
    %v290 = vld [vmem:[#allocation8 + $0x1d0] sm:$0xff]
    %v291 = vld [vmem:[#allocation8 + $0x1d8] sm:$0xff]
    %v292 = vld [vmem:[#allocation8 + $0x1e0] sm:$0xff]
    %v293 = vld [vmem:[#allocation8 + $0x1e8] sm:$0xff]
    %v294 = vld [vmem:[#allocation8 + $0x1f0] sm:$0xff]
    %v295 = vld [vmem:[#allocation8 + $0x1f8] sm:$0xff]
    %v296 = vld [vmem:[#allocation8 + $0x200] sm:$0xff]
    %v297 = vld [vmem:[#allocation8 + $0x208] sm:$0xff]
    %v298 = vld [vmem:[#allocation8 + $0x210] sm:$0xff]
    %v299 = vld [vmem:[#allocation8 + $0x218] sm:$0xff]
    %v300 = vld [vmem:[#allocation8 + $0x220] sm:$0xff]
    %v301 = vld [vmem:[#allocation8 + $0x228] sm:$0xff]
    %v302 = vld [vmem:[#allocation8 + $0x230] sm:$0xff]
    %v303 = vld [vmem:[#allocation8 + $0x238] sm:$0xff]
    %v304 = vld [vmem:[#allocation8 + $0x240] sm:$0xff]
    %v305 = vld [vmem:[#allocation8 + $0x248] sm:$0xff]
    %v306 = vld [vmem:[#allocation8 + $0x250] sm:$0xff]
    %v307 = vld [vmem:[#allocation8 + $0x258] sm:$0xff]
    %v308 = vld [vmem:[#allocation8 + $0x260] sm:$0xff]
    %v309 = vld [vmem:[#allocation8 + $0x268] sm:$0xff]
    %v310 = vld [vmem:[#allocation8 + $0x270] sm:$0xff]
    %v311 = vld [vmem:[#allocation8 + $0x278] sm:$0xff]
    %v312 = vld [vmem:[#allocation8 + $0x280] sm:$0xff]
    %v313 = vld [vmem:[#allocation8 + $0x288] sm:$0xff]
    %v314 = vld [vmem:[#allocation8 + $0x290] sm:$0xff]
    %v315 = vld [vmem:[#allocation8 + $0x298] sm:$0xff]
    %v316 = vld [vmem:[#allocation8 + $0x2a0] sm:$0xff]
    %v317 = vld [vmem:[#allocation8 + $0x2a8] sm:$0xff]
    %v318 = vld [vmem:[#allocation8 + $0x2b0] sm:$0xff]
    %v319 = vld [vmem:[#allocation8 + $0x2b8] sm:$0xff]
    %v320 = vld [vmem:[#allocation8 + $0x2c0] sm:$0xff]
    %v321 = vld [vmem:[#allocation8 + $0x2c8] sm:$0xff]
    %v322 = vld [vmem:[#allocation8 + $0x2d0] sm:$0xff]
    %v323 = vld [vmem:[#allocation8 + $0x2d8] sm:$0xff]
    %v324 = vld [vmem:[#allocation8 + $0x2e0] sm:$0xff]
    %v325 = vld [vmem:[#allocation8 + $0x2e8] sm:$0xff]
    %v326 = vld [vmem:[#allocation8 + $0x2f0] sm:$0xff]
    %v327 = vld [vmem:[#allocation8 + $0x2f8] sm:$0xff]
    %v328 = vld [vmem:[#allocation8 + $0x300] sm:$0xff]
    %v329 = vld [vmem:[#allocation8 + $0x308] sm:$0xff]
    %v330 = vld [vmem:[#allocation8 + $0x310] sm:$0xff]
    %v331 = vld [vmem:[#allocation8 + $0x318] sm:$0xff]
    %v332 = vld [vmem:[#allocation8 + $0x320] sm:$0xff]
    %v333 = vld [vmem:[#allocation8 + $0x328] sm:$0xff]
    %v334 = vld [vmem:[#allocation8 + $0x330] sm:$0xff]
    %v335 = vld [vmem:[#allocation8 + $0x338] sm:$0xff]
    %v336 = vld [vmem:[#allocation8 + $0x340] sm:$0xff]
    %v337 = vld [vmem:[#allocation8 + $0x348] sm:$0xff]
    %v338 = vld [vmem:[#allocation8 + $0x350] sm:$0xff]
    %v339 = vld [vmem:[#allocation8 + $0x358] sm:$0xff]
    %v340 = vld [vmem:[#allocation8 + $0x360] sm:$0xff]
    %v341 = vld [vmem:[#allocation8 + $0x368] sm:$0xff]
    %v342 = vld [vmem:[#allocation8 + $0x370] sm:$0xff]
    %v343 = vld [vmem:[#allocation8 + $0x378] sm:$0xff]
    %v344 = vld [vmem:[#allocation8 + $0x380] sm:$0xff]
    %v345 = vld [vmem:[#allocation8 + $0x388] sm:$0xff]
    %v346 = vld [vmem:[#allocation8 + $0x390] sm:$0xff]
    %v347 = vld [vmem:[#allocation8 + $0x398] sm:$0xff]
    %v348 = vld [vmem:[#allocation8 + $0x3a0] sm:$0xff]
    %v349 = vld [vmem:[#allocation8 + $0x3a8] sm:$0xff]
    %v350 = vld [vmem:[#allocation8 + $0x3b0] sm:$0xff]
    %v351 = vld [vmem:[#allocation8 + $0x3b8] sm:$0xff]
    %v352 = vld [vmem:[#allocation8 + $0x3c0] sm:$0xff]
    %v353 = vld [vmem:[#allocation8 + $0x3c8] sm:$0xff]
    %v354 = vld [vmem:[#allocation8 + $0x3d0] sm:$0xff]
    %v355 = vld [vmem:[#allocation8 + $0x3d8] sm:$0xff]
    %v356 = vld [vmem:[#allocation8 + $0x3e0] sm:$0xff]
    %v357 = vld [vmem:[#allocation8 + $0x3e8] sm:$0xff]
    %v358 = vld [vmem:[#allocation8 + $0x3f0] sm:$0xff]
    %v359 = vld [vmem:[#allocation8 + $0x3f8] sm:$0xff]
    %v360 = vmul.f32 %v232, 0.99
    %v361 = vmul.f32 %v233, 0.99
    %v362 = vmul.f32 %v234, 0.99
    %v363 = vmul.f32 %v235, 0.99
    %v364 = vmul.f32 %v236, 0.99
    %v365 = vmul.f32 %v237, 0.99
    %v366 = vmul.f32 %v238, 0.99
    %v367 = vmul.f32 %v239, 0.99
    %v368 = vmul.f32 %v240, 0.99
    %v369 = vmul.f32 %v241, 0.99
    %v370 = vmul.f32 %v242, 0.99
    %v371 = vmul.f32 %v243, 0.99
    %v372 = vmul.f32 %v244, 0.99
    %v373 = vmul.f32 %v245, 0.99
    %v374 = vmul.f32 %v246, 0.99
    %v375 = vmul.f32 %v247, 0.99
    %v376 = vmul.f32 %v248, 0.99
    %v377 = vmul.f32 %v249, 0.99
    %v378 = vmul.f32 %v250, 0.99
    %v379 = vmul.f32 %v251, 0.99
    %v380 = vmul.f32 %v252, 0.99
    %v381 = vmul.f32 %v253, 0.99
    %v382 = vmul.f32 %v254, 0.99
    %v383 = vmul.f32 %v255, 0.99
    %v384 = vmul.f32 %v256, 0.99
    %v385 = vmul.f32 %v257, 0.99
    %v386 = vmul.f32 %v258, 0.99
    %v387 = vmul.f32 %v259, 0.99
    %v388 = vmul.f32 %v260, 0.99
    %v389 = vmul.f32 %v261, 0.99
    %v390 = vmul.f32 %v262, 0.99
    %v391 = vmul.f32 %v263, 0.99
    %v392 = vmul.f32 %v264, 0.99
    %v393 = vmul.f32 %v265, 0.99
    %v394 = vmul.f32 %v266, 0.99
    %v395 = vmul.f32 %v267, 0.99
    %v396 = vmul.f32 %v268, 0.99
    %v397 = vmul.f32 %v269, 0.99
    %v398 = vmul.f32 %v270, 0.99
    %v399 = vmul.f32 %v271, 0.99
    %v400 = vmul.f32 %v272, 0.99
    %v401 = vmul.f32 %v273, 0.99
    %v402 = vmul.f32 %v274, 0.99
    %v403 = vmul.f32 %v275, 0.99
    %v404 = vmul.f32 %v276, 0.99
    %v405 = vmul.f32 %v277, 0.99
    %v406 = vmul.f32 %v278, 0.99
    %v407 = vmul.f32 %v279, 0.99
    %v408 = vmul.f32 %v280, 0.99
    %v409 = vmul.f32 %v281, 0.99
    %v410 = vmul.f32 %v282, 0.99
    %v411 = vmul.f32 %v283, 0.99
    %v412 = vmul.f32 %v284, 0.99
    %v413 = vmul.f32 %v285, 0.99
    %v414 = vmul.f32 %v286, 0.99
    %v415 = vmul.f32 %v287, 0.99
    %v416 = vmul.f32 %v288, 0.99
    %v417 = vmul.f32 %v289, 0.99
    %v418 = vmul.f32 %v290, 0.99
    %v419 = vmul.f32 %v291, 0.99
    %v420 = vmul.f32 %v292, 0.99
    %v421 = vmul.f32 %v293, 0.99
    %v422 = vmul.f32 %v294, 0.99
    %v423 = vmul.f32 %v295, 0.99
    %v424 = vmul.f32 %v296, 0.99
    %v425 = vmul.f32 %v297, 0.99
    %v426 = vmul.f32 %v298, 0.99
    %v427 = vmul.f32 %v299, 0.99
    %v428 = vmul.f32 %v300, 0.99
    %v429 = vmul.f32 %v301, 0.99
    %v430 = vmul.f32 %v302, 0.99
    %v431 = vmul.f32 %v303, 0.99
    %v432 = vmul.f32 %v304, 0.99
    %v433 = vmul.f32 %v305, 0.99
    %v434 = vmul.f32 %v306, 0.99
    %v435 = vmul.f32 %v307, 0.99
    %v436 = vmul.f32 %v308, 0.99
    %v437 = vmul.f32 %v309, 0.99
    %v438 = vmul.f32 %v310, 0.99
    %v439 = vmul.f32 %v311, 0.99
    %v440 = vmul.f32 %v312, 0.99
    %v441 = vmul.f32 %v313, 0.99
    %v442 = vmul.f32 %v314, 0.99
    %v443 = vmul.f32 %v315, 0.99
    %v444 = vmul.f32 %v316, 0.99
    %v445 = vmul.f32 %v317, 0.99
    %v446 = vmul.f32 %v318, 0.99
    %v447 = vmul.f32 %v319, 0.99
    %v448 = vmul.f32 %v320, 0.99
    %v449 = vmul.f32 %v321, 0.99
    %v450 = vmul.f32 %v322, 0.99
    %v451 = vmul.f32 %v323, 0.99
    %v452 = vmul.f32 %v324, 0.99
    %v453 = vmul.f32 %v325, 0.99
    %v454 = vmul.f32 %v326, 0.99
    %v455 = vmul.f32 %v327, 0.99
    %v456 = vmul.f32 %v328, 0.99
    %v457 = vmul.f32 %v329, 0.99
    %v458 = vmul.f32 %v330, 0.99
    %v459 = vmul.f32 %v331, 0.99
    %v460 = vmul.f32 %v332, 0.99
    %v461 = vmul.f32 %v333, 0.99
    %v462 = vmul.f32 %v334, 0.99
    %v463 = vmul.f32 %v335, 0.99
    %v464 = vmul.f32 %v336, 0.99
    %v465 = vmul.f32 %v337, 0.99
    %v466 = vmul.f32 %v338, 0.99
    %v467 = vmul.f32 %v339, 0.99
    %v468 = vmul.f32 %v340, 0.99
    %v469 = vmul.f32 %v341, 0.99
    %v470 = vmul.f32 %v342, 0.99
    %v471 = vmul.f32 %v343, 0.99
    %v472 = vmul.f32 %v344, 0.99
    %v473 = vmul.f32 %v345, 0.99
    %v474 = vmul.f32 %v346, 0.99
    %v475 = vmul.f32 %v347, 0.99
    %v476 = vmul.f32 %v348, 0.99
    %v477 = vmul.f32 %v349, 0.99
    %v478 = vmul.f32 %v350, 0.99
    %v479 = vmul.f32 %v351, 0.99
    %v480 = vmul.f32 %v352, 0.99
    %v481 = vmul.f32 %v353, 0.99
    %v482 = vmul.f32 %v354, 0.99
    %v483 = vmul.f32 %v355, 0.99
    %v484 = vmul.f32 %v356, 0.99
    %v485 = vmul.f32 %v357, 0.99
    %v486 = vmul.f32 %v358, 0.99
    %v487 = vmul.f32 %v359, 0.99
    %v488 = vmul.f32 %v103, 0.01
    %v489 = vmul.f32 %v104, 0.01
    %v490 = vmul.f32 %v105, 0.01
    %v491 = vmul.f32 %v106, 0.01
    %v492 = vmul.f32 %v107, 0.01
    %v493 = vmul.f32 %v108, 0.01
    %v494 = vmul.f32 %v109, 0.01
    %v495 = vmul.f32 %v110, 0.01
    %v496 = vmul.f32 %v111, 0.01
    %v497 = vmul.f32 %v112, 0.01
    %v498 = vmul.f32 %v113, 0.01
    %v499 = vmul.f32 %v114, 0.01
    %v500 = vmul.f32 %v115, 0.01
    %v501 = vmul.f32 %v116, 0.01
    %v502 = vmul.f32 %v117, 0.01
    %v503 = vmul.f32 %v118, 0.01
    %v504 = vmul.f32 %v119, 0.01
    %v505 = vmul.f32 %v120, 0.01
    %v506 = vmul.f32 %v121, 0.01
    %v507 = vmul.f32 %v122, 0.01
    %v508 = vmul.f32 %v123, 0.01
    %v509 = vmul.f32 %v124, 0.01
    %v510 = vmul.f32 %v125, 0.01
    %v511 = vmul.f32 %v126, 0.01
    %v512 = vmul.f32 %v127, 0.01
    %v513 = vmul.f32 %v128, 0.01
    %v514 = vmul.f32 %v129, 0.01
    %v515 = vmul.f32 %v130, 0.01
    %v516 = vmul.f32 %v131, 0.01
    %v517 = vmul.f32 %v132, 0.01
    %v518 = vmul.f32 %v133, 0.01
    %v519 = vmul.f32 %v134, 0.01
    %v520 = vmul.f32 %v135, 0.01
    %v521 = vmul.f32 %v136, 0.01
    %v522 = vmul.f32 %v137, 0.01
    %v523 = vmul.f32 %v138, 0.01
    %v524 = vmul.f32 %v139, 0.01
    %v525 = vmul.f32 %v140, 0.01
    %v526 = vmul.f32 %v141, 0.01
    %v527 = vmul.f32 %v142, 0.01
    %v528 = vmul.f32 %v143, 0.01
    %v529 = vmul.f32 %v144, 0.01
    %v530 = vmul.f32 %v145, 0.01
    %v531 = vmul.f32 %v146, 0.01
    %v532 = vmul.f32 %v147, 0.01
    %v533 = vmul.f32 %v148, 0.01
    %v534 = vmul.f32 %v149, 0.01
    %v535 = vmul.f32 %v150, 0.01
    %v536 = vmul.f32 %v151, 0.01
    %v537 = vmul.f32 %v152, 0.01
    %v538 = vmul.f32 %v153, 0.01
    %v539 = vmul.f32 %v154, 0.01
    %v540 = vmul.f32 %v155, 0.01
    %v541 = vmul.f32 %v156, 0.01
    %v542 = vmul.f32 %v157, 0.01
    %v543 = vmul.f32 %v158, 0.01
    %v544 = vmul.f32 %v159, 0.01
    %v545 = vmul.f32 %v160, 0.01
    %v546 = vmul.f32 %v161, 0.01
    %v547 = vmul.f32 %v162, 0.01
    %v548 = vmul.f32 %v163, 0.01
    %v549 = vmul.f32 %v164, 0.01
    %v550 = vmul.f32 %v165, 0.01
    %v551 = vmul.f32 %v166, 0.01
    %v552 = vmul.f32 %v167, 0.01
    %v553 = vmul.f32 %v168, 0.01
    %v554 = vmul.f32 %v169, 0.01
    %v555 = vmul.f32 %v170, 0.01
    %v556 = vmul.f32 %v171, 0.01
    %v557 = vmul.f32 %v172, 0.01
    %v558 = vmul.f32 %v173, 0.01
    %v559 = vmul.f32 %v174, 0.01
    %v560 = vmul.f32 %v175, 0.01
    %v561 = vmul.f32 %v176, 0.01
    %v562 = vmul.f32 %v177, 0.01
    %v563 = vmul.f32 %v178, 0.01
    %v564 = vmul.f32 %v179, 0.01
    %v565 = vmul.f32 %v180, 0.01
    %v566 = vmul.f32 %v181, 0.01
    %v567 = vmul.f32 %v182, 0.01
    %v568 = vmul.f32 %v183, 0.01
    %v569 = vmul.f32 %v184, 0.01
    %v570 = vmul.f32 %v185, 0.01
    %v571 = vmul.f32 %v186, 0.01
    %v572 = vmul.f32 %v187, 0.01
    %v573 = vmul.f32 %v188, 0.01
    %v574 = vmul.f32 %v189, 0.01
    %v575 = vmul.f32 %v190, 0.01
    %v576 = vmul.f32 %v191, 0.01
    %v577 = vmul.f32 %v192, 0.01
    %v578 = vmul.f32 %v193, 0.01
    %v579 = vmul.f32 %v194, 0.01
    %v580 = vmul.f32 %v195, 0.01
    %v581 = vmul.f32 %v196, 0.01
    %v582 = vmul.f32 %v197, 0.01
    %v583 = vmul.f32 %v198, 0.01
    %v584 = vmul.f32 %v199, 0.01
    %v585 = vmul.f32 %v200, 0.01
    %v586 = vmul.f32 %v201, 0.01
    %v587 = vmul.f32 %v202, 0.01
    %v588 = vmul.f32 %v203, 0.01
    %v589 = vmul.f32 %v204, 0.01
    %v590 = vmul.f32 %v205, 0.01
    %v591 = vmul.f32 %v206, 0.01
    %v592 = vmul.f32 %v207, 0.01
    %v593 = vmul.f32 %v208, 0.01
    %v594 = vmul.f32 %v209, 0.01
    %v595 = vmul.f32 %v210, 0.01
    %v596 = vmul.f32 %v211, 0.01
    %v597 = vmul.f32 %v212, 0.01
    %v598 = vmul.f32 %v213, 0.01
    %v599 = vmul.f32 %v214, 0.01
    %v600 = vmul.f32 %v215, 0.01
    %v601 = vmul.f32 %v216, 0.01
    %v602 = vmul.f32 %v217, 0.01
    %v603 = vmul.f32 %v218, 0.01
    %v604 = vmul.f32 %v219, 0.01
    %v605 = vmul.f32 %v220, 0.01
    %v606 = vmul.f32 %v221, 0.01
    %v607 = vmul.f32 %v222, 0.01
    %v608 = vmul.f32 %v223, 0.01
    %v609 = vmul.f32 %v224, 0.01
    %v610 = vmul.f32 %v225, 0.01
    %v611 = vmul.f32 %v226, 0.01
    %v612 = vmul.f32 %v227, 0.01
    %v613 = vmul.f32 %v228, 0.01
    %v614 = vmul.f32 %v229, 0.01
    %v615 = vmul.f32 %v230, 0.01
    %v616 = vadd.f32 %v360, %v488
    %v617 = vadd.f32 %v361, %v489
    %v618 = vadd.f32 %v362, %v490
    %v619 = vadd.f32 %v363, %v491
    %v620 = vadd.f32 %v364, %v492
    %v621 = vadd.f32 %v365, %v493
    %v622 = vadd.f32 %v366, %v494
    %v623 = vadd.f32 %v367, %v495
    %v624 = vadd.f32 %v368, %v496
    %v625 = vadd.f32 %v369, %v497
    %v626 = vadd.f32 %v370, %v498
    %v627 = vadd.f32 %v371, %v499
    %v628 = vadd.f32 %v372, %v500
    %v629 = vadd.f32 %v373, %v501
    %v630 = vadd.f32 %v374, %v502
    %v631 = vadd.f32 %v375, %v503
    %v632 = vadd.f32 %v376, %v504
    %v633 = vadd.f32 %v377, %v505
    %v634 = vadd.f32 %v378, %v506
    %v635 = vadd.f32 %v379, %v507
    %v636 = vadd.f32 %v380, %v508
    %v637 = vadd.f32 %v381, %v509
    %v638 = vadd.f32 %v382, %v510
    %v639 = vadd.f32 %v383, %v511
    %v640 = vadd.f32 %v384, %v512
    %v641 = vadd.f32 %v385, %v513
    %v642 = vadd.f32 %v386, %v514
    %v643 = vadd.f32 %v387, %v515
    %v644 = vadd.f32 %v388, %v516
    %v645 = vadd.f32 %v389, %v517
    %v646 = vadd.f32 %v390, %v518
    %v647 = vadd.f32 %v391, %v519
    %v648 = vadd.f32 %v392, %v520
    %v649 = vadd.f32 %v393, %v521
    %v650 = vadd.f32 %v394, %v522
    %v651 = vadd.f32 %v395, %v523
    %v652 = vadd.f32 %v396, %v524
    %v653 = vadd.f32 %v397, %v525
    %v654 = vadd.f32 %v398, %v526
    %v655 = vadd.f32 %v399, %v527
    %v656 = vadd.f32 %v400, %v528
    %v657 = vadd.f32 %v401, %v529
    %v658 = vadd.f32 %v402, %v530
    %v659 = vadd.f32 %v403, %v531
    %v660 = vadd.f32 %v404, %v532
    %v661 = vadd.f32 %v405, %v533
    %v662 = vadd.f32 %v406, %v534
    %v663 = vadd.f32 %v407, %v535
    %v664 = vadd.f32 %v408, %v536
    %v665 = vadd.f32 %v409, %v537
    %v666 = vadd.f32 %v410, %v538
    %v667 = vadd.f32 %v411, %v539
    %v668 = vadd.f32 %v412, %v540
    %v669 = vadd.f32 %v413, %v541
    %v670 = vadd.f32 %v414, %v542
    %v671 = vadd.f32 %v415, %v543
    %v672 = vadd.f32 %v416, %v544
    %v673 = vadd.f32 %v417, %v545
    %v674 = vadd.f32 %v418, %v546
    %v675 = vadd.f32 %v419, %v547
    %v676 = vadd.f32 %v420, %v548
    %v677 = vadd.f32 %v421, %v549
    %v678 = vadd.f32 %v422, %v550
    %v679 = vadd.f32 %v423, %v551
    %v680 = vadd.f32 %v424, %v552
    %v681 = vadd.f32 %v425, %v553
    %v682 = vadd.f32 %v426, %v554
    %v683 = vadd.f32 %v427, %v555
    %v684 = vadd.f32 %v428, %v556
    %v685 = vadd.f32 %v429, %v557
    %v686 = vadd.f32 %v430, %v558
    %v687 = vadd.f32 %v431, %v559
    %v688 = vadd.f32 %v432, %v560
    %v689 = vadd.f32 %v433, %v561
    %v690 = vadd.f32 %v434, %v562
    %v691 = vadd.f32 %v435, %v563
    %v692 = vadd.f32 %v436, %v564
    %v693 = vadd.f32 %v437, %v565
    %v694 = vadd.f32 %v438, %v566
    %v695 = vadd.f32 %v439, %v567
    %v696 = vadd.f32 %v440, %v568
    %v697 = vadd.f32 %v441, %v569
    %v698 = vadd.f32 %v442, %v570
    %v699 = vadd.f32 %v443, %v571
    %v700 = vadd.f32 %v444, %v572
    %v701 = vadd.f32 %v445, %v573
    %v702 = vadd.f32 %v446, %v574
    %v703 = vadd.f32 %v447, %v575
    %v704 = vadd.f32 %v448, %v576
    %v705 = vadd.f32 %v449, %v577
    %v706 = vadd.f32 %v450, %v578
    %v707 = vadd.f32 %v451, %v579
    %v708 = vadd.f32 %v452, %v580
    %v709 = vadd.f32 %v453, %v581
    %v710 = vadd.f32 %v454, %v582
    %v711 = vadd.f32 %v455, %v583
    %v712 = vadd.f32 %v456, %v584
    %v713 = vadd.f32 %v457, %v585
    %v714 = vadd.f32 %v458, %v586
    %v715 = vadd.f32 %v459, %v587
    %v716 = vadd.f32 %v460, %v588
    %v717 = vadd.f32 %v461, %v589
    %v718 = vadd.f32 %v462, %v590
    %v719 = vadd.f32 %v463, %v591
    %v720 = vadd.f32 %v464, %v592
    %v721 = vadd.f32 %v465, %v593
    %v722 = vadd.f32 %v466, %v594
    %v723 = vadd.f32 %v467, %v595
    %v724 = vadd.f32 %v468, %v596
    %v725 = vadd.f32 %v469, %v597
    %v726 = vadd.f32 %v470, %v598
    %v727 = vadd.f32 %v471, %v599
    %v728 = vadd.f32 %v472, %v600
    %v729 = vadd.f32 %v473, %v601
    %v730 = vadd.f32 %v474, %v602
    %v731 = vadd.f32 %v475, %v603
    %v732 = vadd.f32 %v476, %v604
    %v733 = vadd.f32 %v477, %v605
    %v734 = vadd.f32 %v478, %v606
    %v735 = vadd.f32 %v479, %v607
    %v736 = vadd.f32 %v480, %v608
    %v737 = vadd.f32 %v481, %v609
    %v738 = vadd.f32 %v482, %v610
    %v739 = vadd.f32 %v483, %v611
    %v740 = vadd.f32 %v484, %v612
    %v741 = vadd.f32 %v485, %v613
    %v742 = vadd.f32 %v486, %v614
    %v743 = vadd.f32 %v487, %v615
    %v744 = vld [vmem:[%s5] sm:$0x1]
    %v745 = vmul.f32 %v744, 0.99
    %v746 = vmul.f32 %v231, 0.01
    %v747 = vadd.f32 %v745, %v746
    %748 = vst [vmem:[#allocation15] sm:$0xff] %v616
    %749 = vst [vmem:[#allocation15 + $0x8] sm:$0xff] %v617
    %750 = vst [vmem:[#allocation15 + $0x10] sm:$0xff] %v618
    %751 = vst [vmem:[#allocation15 + $0x18] sm:$0xff] %v619
    %752 = vst [vmem:[#allocation15 + $0x20] sm:$0xff] %v620
    %753 = vst [vmem:[#allocation15 + $0x28] sm:$0xff] %v621
    %754 = vst [vmem:[#allocation15 + $0x30] sm:$0xff] %v622
    %755 = vst [vmem:[#allocation15 + $0x38] sm:$0xff] %v623
    %756 = vst [vmem:[#allocation15 + $0x40] sm:$0xff] %v624
    %757 = vst [vmem:[#allocation15 + $0x48] sm:$0xff] %v625
    %758 = vst [vmem:[#allocation15 + $0x50] sm:$0xff] %v626
    %759 = vst [vmem:[#allocation15 + $0x58] sm:$0xff] %v627
    %760 = vst [vmem:[#allocation15 + $0x60] sm:$0xff] %v628
    %761 = vst [vmem:[#allocation15 + $0x68] sm:$0xff] %v629
    %762 = vst [vmem:[#allocation15 + $0x70] sm:$0xff] %v630
    %763 = vst [vmem:[#allocation15 + $0x78] sm:$0xff] %v631
    %764 = vst [vmem:[#allocation15 + $0x80] sm:$0xff] %v632
    %765 = vst [vmem:[#allocation15 + $0x88] sm:$0xff] %v633
    %766 = vst [vmem:[#allocation15 + $0x90] sm:$0xff] %v634
    %767 = vst [vmem:[#allocation15 + $0x98] sm:$0xff] %v635
    %768 = vst [vmem:[#allocation15 + $0xa0] sm:$0xff] %v636
    %769 = vst [vmem:[#allocation15 + $0xa8] sm:$0xff] %v637
    %770 = vst [vmem:[#allocation15 + $0xb0] sm:$0xff] %v638
    %771 = vst [vmem:[#allocation15 + $0xb8] sm:$0xff] %v639
    %772 = vst [vmem:[#allocation15 + $0xc0] sm:$0xff] %v640
    %773 = vst [vmem:[#allocation15 + $0xc8] sm:$0xff] %v641
    %774 = vst [vmem:[#allocation15 + $0xd0] sm:$0xff] %v642
    %775 = vst [vmem:[#allocation15 + $0xd8] sm:$0xff] %v643
    %776 = vst [vmem:[#allocation15 + $0xe0] sm:$0xff] %v644
    %777 = vst [vmem:[#allocation15 + $0xe8] sm:$0xff] %v645
    %778 = vst [vmem:[#allocation15 + $0xf0] sm:$0xff] %v646
    %779 = vst [vmem:[#allocation15 + $0xf8] sm:$0xff] %v647
    %780 = vst [vmem:[#allocation15 + $0x100] sm:$0xff] %v648
    %781 = vst [vmem:[#allocation15 + $0x108] sm:$0xff] %v649
    %782 = vst [vmem:[#allocation15 + $0x110] sm:$0xff] %v650
    %783 = vst [vmem:[#allocation15 + $0x118] sm:$0xff] %v651
    %784 = vst [vmem:[#allocation15 + $0x120] sm:$0xff] %v652
    %785 = vst [vmem:[#allocation15 + $0x128] sm:$0xff] %v653
    %786 = vst [vmem:[#allocation15 + $0x130] sm:$0xff] %v654
    %787 = vst [vmem:[#allocation15 + $0x138] sm:$0xff] %v655
    %788 = vst [vmem:[#allocation15 + $0x140] sm:$0xff] %v656
    %789 = vst [vmem:[#allocation15 + $0x148] sm:$0xff] %v657
    %790 = vst [vmem:[#allocation15 + $0x150] sm:$0xff] %v658
    %791 = vst [vmem:[#allocation15 + $0x158] sm:$0xff] %v659
    %792 = vst [vmem:[#allocation15 + $0x160] sm:$0xff] %v660
    %793 = vst [vmem:[#allocation15 + $0x168] sm:$0xff] %v661
    %794 = vst [vmem:[#allocation15 + $0x170] sm:$0xff] %v662
    %795 = vst [vmem:[#allocation15 + $0x178] sm:$0xff] %v663
    %796 = vst [vmem:[#allocation15 + $0x180] sm:$0xff] %v664
    %797 = vst [vmem:[#allocation15 + $0x188] sm:$0xff] %v665
    %798 = vst [vmem:[#allocation15 + $0x190] sm:$0xff] %v666
    %799 = vst [vmem:[#allocation15 + $0x198] sm:$0xff] %v667
    %800 = vst [vmem:[#allocation15 + $0x1a0] sm:$0xff] %v668
    %801 = vst [vmem:[#allocation15 + $0x1a8] sm:$0xff] %v669
    %802 = vst [vmem:[#allocation15 + $0x1b0] sm:$0xff] %v670
    %803 = vst [vmem:[#allocation15 + $0x1b8] sm:$0xff] %v671
    %804 = vst [vmem:[#allocation15 + $0x1c0] sm:$0xff] %v672
    %805 = vst [vmem:[#allocation15 + $0x1c8] sm:$0xff] %v673
    %806 = vst [vmem:[#allocation15 + $0x1d0] sm:$0xff] %v674
    %807 = vst [vmem:[#allocation15 + $0x1d8] sm:$0xff] %v675
    %808 = vst [vmem:[#allocation15 + $0x1e0] sm:$0xff] %v676
    %809 = vst [vmem:[#allocation15 + $0x1e8] sm:$0xff] %v677
    %810 = vst [vmem:[#allocation15 + $0x1f0] sm:$0xff] %v678
    %811 = vst [vmem:[#allocation15 + $0x1f8] sm:$0xff] %v679
    %812 = vst [vmem:[#allocation15 + $0x200] sm:$0xff] %v680
    %813 = vst [vmem:[#allocation15 + $0x208] sm:$0xff] %v681
    %814 = vst [vmem:[#allocation15 + $0x210] sm:$0xff] %v682
    %815 = vst [vmem:[#allocation15 + $0x218] sm:$0xff] %v683
    %816 = vst [vmem:[#allocation15 + $0x220] sm:$0xff] %v684
    %817 = vst [vmem:[#allocation15 + $0x228] sm:$0xff] %v685
    %818 = vst [vmem:[#allocation15 + $0x230] sm:$0xff] %v686
    %819 = vst [vmem:[#allocation15 + $0x238] sm:$0xff] %v687
    %820 = vst [vmem:[#allocation15 + $0x240] sm:$0xff] %v688
    %821 = vst [vmem:[#allocation15 + $0x248] sm:$0xff] %v689
    %822 = vst [vmem:[#allocation15 + $0x250] sm:$0xff] %v690
    %823 = vst [vmem:[#allocation15 + $0x258] sm:$0xff] %v691
    %824 = vst [vmem:[#allocation15 + $0x260] sm:$0xff] %v692
    %825 = vst [vmem:[#allocation15 + $0x268] sm:$0xff] %v693
    %826 = vst [vmem:[#allocation15 + $0x270] sm:$0xff] %v694
    %827 = vst [vmem:[#allocation15 + $0x278] sm:$0xff] %v695
    %828 = vst [vmem:[#allocation15 + $0x280] sm:$0xff] %v696
    %829 = vst [vmem:[#allocation15 + $0x288] sm:$0xff] %v697
    %830 = vst [vmem:[#allocation15 + $0x290] sm:$0xff] %v698
    %831 = vst [vmem:[#allocation15 + $0x298] sm:$0xff] %v699
    %832 = vst [vmem:[#allocation15 + $0x2a0] sm:$0xff] %v700
    %833 = vst [vmem:[#allocation15 + $0x2a8] sm:$0xff] %v701
    %834 = vst [vmem:[#allocation15 + $0x2b0] sm:$0xff] %v702
    %835 = vst [vmem:[#allocation15 + $0x2b8] sm:$0xff] %v703
    %836 = vst [vmem:[#allocation15 + $0x2c0] sm:$0xff] %v704
    %837 = vst [vmem:[#allocation15 + $0x2c8] sm:$0xff] %v705
    %838 = vst [vmem:[#allocation15 + $0x2d0] sm:$0xff] %v706
    %839 = vst [vmem:[#allocation15 + $0x2d8] sm:$0xff] %v707
    %840 = vst [vmem:[#allocation15 + $0x2e0] sm:$0xff] %v708
    %841 = vst [vmem:[#allocation15 + $0x2e8] sm:$0xff] %v709
    %842 = vst [vmem:[#allocation15 + $0x2f0] sm:$0xff] %v710
    %843 = vst [vmem:[#allocation15 + $0x2f8] sm:$0xff] %v711
    %844 = vst [vmem:[#allocation15 + $0x300] sm:$0xff] %v712
    %845 = vst [vmem:[#allocation15 + $0x308] sm:$0xff] %v713
    %846 = vst [vmem:[#allocation15 + $0x310] sm:$0xff] %v714
    %847 = vst [vmem:[#allocation15 + $0x318] sm:$0xff] %v715
    %848 = vst [vmem:[#allocation15 + $0x320] sm:$0xff] %v716
    %849 = vst [vmem:[#allocation15 + $0x328] sm:$0xff] %v717
    %850 = vst [vmem:[#allocation15 + $0x330] sm:$0xff] %v718
    %851 = vst [vmem:[#allocation15 + $0x338] sm:$0xff] %v719
    %852 = vst [vmem:[#allocation15 + $0x340] sm:$0xff] %v720
    %853 = vst [vmem:[#allocation15 + $0x348] sm:$0xff] %v721
    %854 = vst [vmem:[#allocation15 + $0x350] sm:$0xff] %v722
    %855 = vst [vmem:[#allocation15 + $0x358] sm:$0xff] %v723
    %856 = vst [vmem:[#allocation15 + $0x360] sm:$0xff] %v724
    %857 = vst [vmem:[#allocation15 + $0x368] sm:$0xff] %v725
    %858 = vst [vmem:[#allocation15 + $0x370] sm:$0xff] %v726
    %859 = vst [vmem:[#allocation15 + $0x378] sm:$0xff] %v727
    %860 = vst [vmem:[#allocation15 + $0x380] sm:$0xff] %v728
    %861 = vst [vmem:[#allocation15 + $0x388] sm:$0xff] %v729
    %862 = vst [vmem:[#allocation15 + $0x390] sm:$0xff] %v730
    %863 = vst [vmem:[#allocation15 + $0x398] sm:$0xff] %v731
    %864 = vst [vmem:[#allocation15 + $0x3a0] sm:$0xff] %v732
    %865 = vst [vmem:[#allocation15 + $0x3a8] sm:$0xff] %v733
    %866 = vst [vmem:[#allocation15 + $0x3b0] sm:$0xff] %v734
    %867 = vst [vmem:[#allocation15 + $0x3b8] sm:$0xff] %v735
    %868 = vst [vmem:[#allocation15 + $0x3c0] sm:$0xff] %v736
    %869 = vst [vmem:[#allocation15 + $0x3c8] sm:$0xff] %v737
    %870 = vst [vmem:[#allocation15 + $0x3d0] sm:$0xff] %v738
    %871 = vst [vmem:[#allocation15 + $0x3d8] sm:$0xff] %v739
    %872 = vst [vmem:[#allocation15 + $0x3e0] sm:$0xff] %v740
    %873 = vst [vmem:[#allocation15 + $0x3e8] sm:$0xff] %v741
    %874 = vst [vmem:[#allocation15 + $0x3f0] sm:$0xff] %v742
    %875 = vst [vmem:[#allocation15 + $0x3f8] sm:$0xff] %v743
    %876 = vst [vmem:[#allocation17] sm:$0x1] %v747
    %v877 = vpack.c.bf16 %v104, %v103
    %v878 = vpack.c.bf16 %v106, %v105
    %v879 = vpack.c.bf16 %v108, %v107
    %v880 = vpack.c.bf16 %v110, %v109
    %v881 = vpack.c.bf16 %v112, %v111
    %v882 = vpack.c.bf16 %v114, %v113
    %v883 = vpack.c.bf16 %v116, %v115
    %v884 = vpack.c.bf16 %v118, %v117
    %v885 = vpack.c.bf16 %v120, %v119
    %v886 = vpack.c.bf16 %v122, %v121
    %v887 = vpack.c.bf16 %v124, %v123
    %v888 = vpack.c.bf16 %v126, %v125
    %v889 = vpack.c.bf16 %v128, %v127
    %v890 = vpack.c.bf16 %v130, %v129
    %v891 = vpack.c.bf16 %v132, %v131
    %v892 = vpack.c.bf16 %v134, %v133
    %v893 = vpack.c.bf16 %v136, %v135
    %v894 = vpack.c.bf16 %v138, %v137
    %v895 = vpack.c.bf16 %v140, %v139
    %v896 = vpack.c.bf16 %v142, %v141
    %v897 = vpack.c.bf16 %v144, %v143
    %v898 = vpack.c.bf16 %v146, %v145
    %v899 = vpack.c.bf16 %v148, %v147
    %v900 = vpack.c.bf16 %v150, %v149
    %v901 = vpack.c.bf16 %v152, %v151
    %v902 = vpack.c.bf16 %v154, %v153
    %v903 = vpack.c.bf16 %v156, %v155
    %v904 = vpack.c.bf16 %v158, %v157
    %v905 = vpack.c.bf16 %v160, %v159
    %v906 = vpack.c.bf16 %v162, %v161
    %v907 = vpack.c.bf16 %v164, %v163
    %v908 = vpack.c.bf16 %v166, %v165
    %v909 = vpack.c.bf16 %v168, %v167
    %v910 = vpack.c.bf16 %v170, %v169
    %v911 = vpack.c.bf16 %v172, %v171
    %v912 = vpack.c.bf16 %v174, %v173
    %v913 = vpack.c.bf16 %v176, %v175
    %v914 = vpack.c.bf16 %v178, %v177
    %v915 = vpack.c.bf16 %v180, %v179
    %v916 = vpack.c.bf16 %v182, %v181
    %v917 = vpack.c.bf16 %v184, %v183
    %v918 = vpack.c.bf16 %v186, %v185
    %v919 = vpack.c.bf16 %v188, %v187
    %v920 = vpack.c.bf16 %v190, %v189
    %v921 = vpack.c.bf16 %v192, %v191
    %v922 = vpack.c.bf16 %v194, %v193
    %v923 = vpack.c.bf16 %v196, %v195
    %v924 = vpack.c.bf16 %v198, %v197
    %v925 = vpack.c.bf16 %v200, %v199
    %v926 = vpack.c.bf16 %v202, %v201
    %v927 = vpack.c.bf16 %v204, %v203
    %v928 = vpack.c.bf16 %v206, %v205
    %v929 = vpack.c.bf16 %v208, %v207
    %v930 = vpack.c.bf16 %v210, %v209
    %v931 = vpack.c.bf16 %v212, %v211
    %v932 = vpack.c.bf16 %v214, %v213
    %v933 = vpack.c.bf16 %v216, %v215
    %v934 = vpack.c.bf16 %v218, %v217
    %v935 = vpack.c.bf16 %v220, %v219
    %v936 = vpack.c.bf16 %v222, %v221
    %v937 = vpack.c.bf16 %v224, %v223
    %v938 = vpack.c.bf16 %v226, %v225
    %v939 = vpack.c.bf16 %v228, %v227
    %v940 = vpack.c.bf16 %v230, %v229
    %v941 = vpack.c.bf16 %v617, %v616
    %v942 = vpack.c.bf16 %v619, %v618
    %v943 = vpack.c.bf16 %v621, %v620
    %v944 = vpack.c.bf16 %v623, %v622
    %v945 = vpack.c.bf16 %v625, %v624
    %v946 = vpack.c.bf16 %v627, %v626
    %v947 = vpack.c.bf16 %v629, %v628
    %v948 = vpack.c.bf16 %v631, %v630
    %v949 = vpack.c.bf16 %v633, %v632
    %v950 = vpack.c.bf16 %v635, %v634
    %v951 = vpack.c.bf16 %v637, %v636
    %v952 = vpack.c.bf16 %v639, %v638
    %v953 = vpack.c.bf16 %v641, %v640
    %v954 = vpack.c.bf16 %v643, %v642
    %v955 = vpack.c.bf16 %v645, %v644
    %v956 = vpack.c.bf16 %v647, %v646
    %v957 = vpack.c.bf16 %v649, %v648
    %v958 = vpack.c.bf16 %v651, %v650
    %v959 = vpack.c.bf16 %v653, %v652
    %v960 = vpack.c.bf16 %v655, %v654
    %v961 = vpack.c.bf16 %v657, %v656
    %v962 = vpack.c.bf16 %v659, %v658
    %v963 = vpack.c.bf16 %v661, %v660
    %v964 = vpack.c.bf16 %v663, %v662
    %v965 = vpack.c.bf16 %v665, %v664
    %v966 = vpack.c.bf16 %v667, %v666
    %v967 = vpack.c.bf16 %v669, %v668
    %v968 = vpack.c.bf16 %v671, %v670
    %v969 = vpack.c.bf16 %v673, %v672
    %v970 = vpack.c.bf16 %v675, %v674
    %v971 = vpack.c.bf16 %v677, %v676
    %v972 = vpack.c.bf16 %v679, %v678
    %v973 = vpack.c.bf16 %v681, %v680
    %v974 = vpack.c.bf16 %v683, %v682
    %v975 = vpack.c.bf16 %v685, %v684
    %v976 = vpack.c.bf16 %v687, %v686
    %v977 = vpack.c.bf16 %v689, %v688
    %v978 = vpack.c.bf16 %v691, %v690
    %v979 = vpack.c.bf16 %v693, %v692
    %v980 = vpack.c.bf16 %v695, %v694
    %v981 = vpack.c.bf16 %v697, %v696
    %v982 = vpack.c.bf16 %v699, %v698
    %v983 = vpack.c.bf16 %v701, %v700
    %v984 = vpack.c.bf16 %v703, %v702
    %v985 = vpack.c.bf16 %v705, %v704
    %v986 = vpack.c.bf16 %v707, %v706
    %v987 = vpack.c.bf16 %v709, %v708
    %v988 = vpack.c.bf16 %v711, %v710
    %v989 = vpack.c.bf16 %v713, %v712
    %v990 = vpack.c.bf16 %v715, %v714
    %v991 = vpack.c.bf16 %v717, %v716
    %v992 = vpack.c.bf16 %v719, %v718
    %v993 = vpack.c.bf16 %v721, %v720
    %v994 = vpack.c.bf16 %v723, %v722
    %v995 = vpack.c.bf16 %v725, %v724
    %v996 = vpack.c.bf16 %v727, %v726
    %v997 = vpack.c.bf16 %v729, %v728
    %v998 = vpack.c.bf16 %v731, %v730
    %v999 = vpack.c.bf16 %v733, %v732
    %v1000 = vpack.c.bf16 %v735, %v734
    %v1001 = vpack.c.bf16 %v737, %v736
    %v1002 = vpack.c.bf16 %v739, %v738
    %v1003 = vpack.c.bf16 %v741, %v740
    %v1004 = vpack.c.bf16 %v743, %v742
    %v1005 = vld [vmem:[#allocation2] sm:$0xff]
    %v1006 = vld [vmem:[#allocation2 + $0x8] sm:$0xff]
    %v1007 = vld [vmem:[#allocation2 + $0x10] sm:$0xff]
    %v1008 = vld [vmem:[#allocation2 + $0x18] sm:$0xff]
    %v1009 = vld [vmem:[#allocation2 + $0x20] sm:$0xff]
    %v1010 = vld [vmem:[#allocation2 + $0x28] sm:$0xff]
    %v1011 = vld [vmem:[#allocation2 + $0x30] sm:$0xff]
    %v1012 = vld [vmem:[#allocation2 + $0x38] sm:$0xff]
    %v1013 = vld [vmem:[#allocation2 + $0x40] sm:$0xff]
    %v1014 = vld [vmem:[#allocation2 + $0x48] sm:$0xff]
    %v1015 = vld [vmem:[#allocation2 + $0x50] sm:$0xff]
    %v1016 = vld [vmem:[#allocation2 + $0x58] sm:$0xff]
    %v1017 = vld [vmem:[#allocation2 + $0x60] sm:$0xff]
    %v1018 = vld [vmem:[#allocation2 + $0x68] sm:$0xff]
    %v1019 = vld [vmem:[#allocation2 + $0x70] sm:$0xff]
    %v1020 = vld [vmem:[#allocation2 + $0x78] sm:$0xff]
    %v1021 = vpack.c.bf16 %v1013, %v1005
    %v1022 = vpack.c.bf16 %v1014, %v1006
    %v1023 = vpack.c.bf16 %v1015, %v1007
    %v1024 = vpack.c.bf16 %v1016, %v1008
    %v1025 = vpack.c.bf16 %v1017, %v1009
    %v1026 = vpack.c.bf16 %v1018, %v1010
    %v1027 = vpack.c.bf16 %v1019, %v1011
    %v1028 = vpack.c.bf16 %v1020, %v1012
    %v1029 = vld [vmem:[#allocation5] sm:$0xff]
    %v1030 = vld [vmem:[#allocation5 + $0x8] sm:$0xff]
    %v1031 = vld [vmem:[#allocation5 + $0x10] sm:$0xff]
    %v1032 = vld [vmem:[#allocation5 + $0x18] sm:$0xff]
    %v1033 = vld [vmem:[#allocation5 + $0x20] sm:$0xff]
    %v1034 = vld [vmem:[#allocation5 + $0x28] sm:$0xff]
    %v1035 = vld [vmem:[#allocation5 + $0x30] sm:$0xff]
    %v1036 = vld [vmem:[#allocation5 + $0x38] sm:$0xff]
    %v1037 = vld [vmem:[#allocation5 + $0x40] sm:$0xff]
    %v1038 = vld [vmem:[#allocation5 + $0x48] sm:$0xff]
    %v1039 = vld [vmem:[#allocation5 + $0x50] sm:$0xff]
    %v1040 = vld [vmem:[#allocation5 + $0x58] sm:$0xff]
    %v1041 = vld [vmem:[#allocation5 + $0x60] sm:$0xff]
    %v1042 = vld [vmem:[#allocation5 + $0x68] sm:$0xff]
    %v1043 = vld [vmem:[#allocation5 + $0x70] sm:$0xff]
    %v1044 = vld [vmem:[#allocation5 + $0x78] sm:$0xff]
    %v1045 = vpack.c.bf16 %v1037, %v1029
    %v1046 = vpack.c.bf16 %v1038, %v1030
    %v1047 = vpack.c.bf16 %v1039, %v1031
    %v1048 = vpack.c.bf16 %v1040, %v1032
    %v1049 = vpack.c.bf16 %v1041, %v1033
    %v1050 = vpack.c.bf16 %v1042, %v1034
    %v1051 = vpack.c.bf16 %v1043, %v1035
    %v1052 = vpack.c.bf16 %v1044, %v1036
    %v1054 = vlaneseq
    %v1055 = vshrl.u32 %v1054, 7
    %v1056 = vsub.s32 0, %v1055
    %v1057 = vrot.slane %v231, %v1056
    %1059 = vmatprep.subr.bf16.mxu0 0
    %1060 = vmatpush1.bf16.msra.mxu0 %v877
    %1061 = vmatprep.subr.bf16.mxu0 0
    %1062 = vmatpush1.bf16.msra.mxu0 %v878
    %1063 = vmatprep.subr.bf16.mxu0 0
    %1064 = vmatpush1.bf16.msra.mxu0 %v879
    %1065 = vmatprep.subr.bf16.mxu0 0
    %1066 = vmatpush1.bf16.msra.mxu0 %v880
    %1067 = vmatprep.subr.bf16.mxu0 0
    %1068 = vmatpush1.bf16.msra.mxu0 %v881
    %1069 = vmatprep.subr.bf16.mxu0 0
    %1070 = vmatpush1.bf16.msra.mxu0 %v882
    %1071 = vmatprep.subr.bf16.mxu0 0
    %1072 = vmatpush1.bf16.msra.mxu0 %v883
    %1073 = vmatprep.subr.bf16.mxu0 0
    %1074 = vmatpush1.bf16.msra.mxu0 %v884
    %1075 = vmatprep.subr.bf16.mxu0 0
    %1076 = vmatpush1.bf16.msra.mxu0 %v885
    %1077 = vmatprep.subr.bf16.mxu0 0
    %1078 = vmatpush1.bf16.msra.mxu0 %v886
    %1079 = vmatprep.subr.bf16.mxu0 0
    %1080 = vmatpush1.bf16.msra.mxu0 %v887
    %1081 = vmatprep.subr.bf16.mxu0 0
    %1082 = vmatpush1.bf16.msra.mxu0 %v888
    %1083 = vmatprep.subr.bf16.mxu0 0
    %1084 = vmatpush1.bf16.msra.mxu0 %v889
    %1085 = vmatprep.subr.bf16.mxu0 0
    %1086 = vmatpush1.bf16.msra.mxu0 %v890
    %1087 = vmatprep.subr.bf16.mxu0 0
    %1088 = vmatpush1.bf16.msra.mxu0 %v891
    %1089 = vmatprep.subr.bf16.mxu0 0
    %1090 = vmatpush1.bf16.msra.mxu0 %v892
    %1091 = vmatprep.mubr.bf16.mxu0 %v1022
    %1092 = vmatmul.mubr.bf16.gmra.mrb[0].mxu0 %v1021
    %v1093 = vpop.f32.mrb[0].mxu0
    %v1094 = vadd.f32 %v1057, %v1093
    %v1095 = vpop.f32.mrb[0].mxu0
    %v1096 = vpop.f32.mrb[0].mxu0
    %v1097 = vadd.f32 %v1057, %v1096
    %v1098 = vpop.f32.mrb[0].mxu0
    %1099 = vdwg.mxu0
    %1100 = vmatprep.subr.bf16.mxu0 0
    %1101 = vmatpush1.bf16.msra.mxu0 %v893
    %1102 = vmatprep.subr.bf16.mxu0 0
    %1103 = vmatpush1.bf16.msra.mxu0 %v894
    %1104 = vmatprep.subr.bf16.mxu0 0
    %1105 = vmatpush1.bf16.msra.mxu0 %v895
    %1106 = vmatprep.subr.bf16.mxu0 0
    %1107 = vmatpush1.bf16.msra.mxu0 %v896
    %1108 = vmatprep.subr.bf16.mxu0 0
    %1109 = vmatpush1.bf16.msra.mxu0 %v897
    %1110 = vmatprep.subr.bf16.mxu0 0
    %1111 = vmatpush1.bf16.msra.mxu0 %v898
    %1112 = vmatprep.subr.bf16.mxu0 0
    %1113 = vmatpush1.bf16.msra.mxu0 %v899
    %1114 = vmatprep.subr.bf16.mxu0 0
    %1115 = vmatpush1.bf16.msra.mxu0 %v900
    %1116 = vmatprep.subr.bf16.mxu0 0
    %1117 = vmatpush1.bf16.msra.mxu0 %v901
    %1118 = vmatprep.subr.bf16.mxu0 0
    %1119 = vmatpush1.bf16.msra.mxu0 %v902
    %1120 = vmatprep.subr.bf16.mxu0 0
    %1121 = vmatpush1.bf16.msra.mxu0 %v903
    %1122 = vmatprep.subr.bf16.mxu0 0
    %1123 = vmatpush1.bf16.msra.mxu0 %v904
    %1124 = vmatprep.subr.bf16.mxu0 0
    %1125 = vmatpush1.bf16.msra.mxu0 %v905
    %1126 = vmatprep.subr.bf16.mxu0 0
    %1127 = vmatpush1.bf16.msra.mxu0 %v906
    %1128 = vmatprep.subr.bf16.mxu0 0
    %1129 = vmatpush1.bf16.msra.mxu0 %v907
    %1130 = vmatprep.subr.bf16.mxu0 0
    %1131 = vmatpush1.bf16.msra.mxu0 %v908
    %1132 = vmatprep.mubr.bf16.mxu0 %v1024
    %1133 = vmatmul.mubr.bf16.gmra.mrb[0].mxu0 %v1023
    %v1134 = vpop.f32.mrb[0].mxu0
    %v1135 = vadd.f32 %v1094, %v1134
    %v1136 = vpop.f32.mrb[0].mxu0
    %v1137 = vpop.f32.mrb[0].mxu0
    %v1138 = vadd.f32 %v1097, %v1137
    %v1139 = vpop.f32.mrb[0].mxu0
    %1140 = vdwg.mxu0
    %1141 = vmatprep.subr.bf16.mxu0 0
    %1142 = vmatpush1.bf16.msra.mxu0 %v909
    %1143 = vmatprep.subr.bf16.mxu0 0
    %1144 = vmatpush1.bf16.msra.mxu0 %v910
    %1145 = vmatprep.subr.bf16.mxu0 0
    %1146 = vmatpush1.bf16.msra.mxu0 %v911
    %1147 = vmatprep.subr.bf16.mxu0 0
    %1148 = vmatpush1.bf16.msra.mxu0 %v912
    %1149 = vmatprep.subr.bf16.mxu0 0
    %1150 = vmatpush1.bf16.msra.mxu0 %v913
    %1151 = vmatprep.subr.bf16.mxu0 0
    %1152 = vmatpush1.bf16.msra.mxu0 %v914
    %1153 = vmatprep.subr.bf16.mxu0 0
    %1154 = vmatpush1.bf16.msra.mxu0 %v915
    %1155 = vmatprep.subr.bf16.mxu0 0
    %1156 = vmatpush1.bf16.msra.mxu0 %v916
    %1157 = vmatprep.subr.bf16.mxu0 0
    %1158 = vmatpush1.bf16.msra.mxu0 %v917
    %1159 = vmatprep.subr.bf16.mxu0 0
    %1160 = vmatpush1.bf16.msra.mxu0 %v918
    %1161 = vmatprep.subr.bf16.mxu0 0
    %1162 = vmatpush1.bf16.msra.mxu0 %v919
    %1163 = vmatprep.subr.bf16.mxu0 0
    %1164 = vmatpush1.bf16.msra.mxu0 %v920
    %1165 = vmatprep.subr.bf16.mxu0 0
    %1166 = vmatpush1.bf16.msra.mxu0 %v921
    %1167 = vmatprep.subr.bf16.mxu0 0
    %1168 = vmatpush1.bf16.msra.mxu0 %v922
    %1169 = vmatprep.subr.bf16.mxu0 0
    %1170 = vmatpush1.bf16.msra.mxu0 %v923
    %1171 = vmatprep.subr.bf16.mxu0 0
    %1172 = vmatpush1.bf16.msra.mxu0 %v924
    %1173 = vmatprep.mubr.bf16.mxu0 %v1026
    %1174 = vmatmul.mubr.bf16.gmra.mrb[0].mxu0 %v1025
    %v1175 = vpop.f32.mrb[0].mxu0
    %v1176 = vadd.f32 %v1135, %v1175
    %v1177 = vpop.f32.mrb[0].mxu0
    %v1178 = vpop.f32.mrb[0].mxu0
    %v1179 = vadd.f32 %v1138, %v1178
    %v1180 = vpop.f32.mrb[0].mxu0
    %1181 = vdwg.mxu0
    %1182 = vmatprep.subr.bf16.mxu0 0
    %1183 = vmatpush1.bf16.msra.mxu0 %v925
    %1184 = vmatprep.subr.bf16.mxu0 0
    %1185 = vmatpush1.bf16.msra.mxu0 %v926
    %1186 = vmatprep.subr.bf16.mxu0 0
    %1187 = vmatpush1.bf16.msra.mxu0 %v927
    %1188 = vmatprep.subr.bf16.mxu0 0
    %1189 = vmatpush1.bf16.msra.mxu0 %v928
    %1190 = vmatprep.subr.bf16.mxu0 0
    %1191 = vmatpush1.bf16.msra.mxu0 %v929
    %1192 = vmatprep.subr.bf16.mxu0 0
    %1193 = vmatpush1.bf16.msra.mxu0 %v930
    %1194 = vmatprep.subr.bf16.mxu0 0
    %1195 = vmatpush1.bf16.msra.mxu0 %v931
    %1196 = vmatprep.subr.bf16.mxu0 0
    %1197 = vmatpush1.bf16.msra.mxu0 %v932
    %1198 = vmatprep.subr.bf16.mxu0 0
    %1199 = vmatpush1.bf16.msra.mxu0 %v933
    %1200 = vmatprep.subr.bf16.mxu0 0
    %1201 = vmatpush1.bf16.msra.mxu0 %v934
    %1202 = vmatprep.subr.bf16.mxu0 0
    %1203 = vmatpush1.bf16.msra.mxu0 %v935
    %1204 = vmatprep.subr.bf16.mxu0 0
    %1205 = vmatpush1.bf16.msra.mxu0 %v936
    %1206 = vmatprep.subr.bf16.mxu0 0
    %1207 = vmatpush1.bf16.msra.mxu0 %v937
    %1208 = vmatprep.subr.bf16.mxu0 0
    %1209 = vmatpush1.bf16.msra.mxu0 %v938
    %1210 = vmatprep.subr.bf16.mxu0 0
    %1211 = vmatpush1.bf16.msra.mxu0 %v939
    %1212 = vmatprep.subr.bf16.mxu0 0
    %1213 = vmatpush1.bf16.msra.mxu0 %v940
    %1214 = vmatprep.mubr.bf16.mxu0 %v1028
    %1215 = vmatmul.mubr.bf16.gmra.mrb[0].mxu0 %v1027
    %v1216 = vpop.f32.mrb[0].mxu0
    %v1217 = vadd.f32 %v1176, %v1216
    %v1218 = vpop.f32.mrb[0].mxu0
    %v1219 = vpop.f32.mrb[0].mxu0
    %v1220 = vadd.f32 %v1179, %v1219
    %v1221 = vpop.f32.mrb[0].mxu0
    %1222 = vdwg.mxu0
    %v1223 = vmul.f32 %v1217, %v1217
    %v1224 = vmul.f32 %v1220, %v1220
    %1225 = vadd.xlane.f32.xlu0 %v1223
    %v1226 = vpop.xlane.xlu0 %1225
    %1227 = vadd.xlane.f32.xlu0 %v1224
    %v1228 = vpop.xlane.xlu0 %1227
    %v1229 = vmax.f32 %v1226, 1e-24
    %v1230 = vmax.f32 %v1228, 1e-24
    %v1231 = vrsqrt.pop %v1229
    %v1232 = vrsqrt.pop %v1230
    %v1233 = vmul.f32 %v1217, %v1231
    %v1234 = vmul.f32 %v1220, %v1232
    %1235 = vmatprep.subr.bf16.mxu0 0
    %1236 = vmatpush1.bf16.msra.mxu0 %v877
    %1237 = vmatprep.subr.bf16.mxu0 0
    %1238 = vmatpush1.bf16.msra.mxu0 %v878
    %1239 = vmatprep.subr.bf16.mxu0 0
    %1240 = vmatpush1.bf16.msra.mxu0 %v879
    %1241 = vmatprep.subr.bf16.mxu0 0
    %1242 = vmatpush1.bf16.msra.mxu0 %v880
    %1243 = vmatprep.subr.bf16.mxu0 0
    %1244 = vmatpush1.bf16.msra.mxu0 %v881
    %1245 = vmatprep.subr.bf16.mxu0 0
    %1246 = vmatpush1.bf16.msra.mxu0 %v882
    %1247 = vmatprep.subr.bf16.mxu0 0
    %1248 = vmatpush1.bf16.msra.mxu0 %v883
    %1249 = vmatprep.subr.bf16.mxu0 0
    %1250 = vmatpush1.bf16.msra.mxu0 %v884
    %1251 = vmatprep.subr.bf16.mxu0 0
    %1252 = vmatpush1.bf16.msra.mxu0 %v885
    %1253 = vmatprep.subr.bf16.mxu0 0
    %1254 = vmatpush1.bf16.msra.mxu0 %v886
    %1255 = vmatprep.subr.bf16.mxu0 0
    %1256 = vmatpush1.bf16.msra.mxu0 %v887
    %1257 = vmatprep.subr.bf16.mxu0 0
    %1258 = vmatpush1.bf16.msra.mxu0 %v888
    %1259 = vmatprep.subr.bf16.mxu0 0
    %1260 = vmatpush1.bf16.msra.mxu0 %v889
    %1261 = vmatprep.subr.bf16.mxu0 0
    %1262 = vmatpush1.bf16.msra.mxu0 %v890
    %1263 = vmatprep.subr.bf16.mxu0 0
    %1264 = vmatpush1.bf16.msra.mxu0 %v891
    %1265 = vmatprep.subr.bf16.mxu0 0
    %1266 = vmatpush1.bf16.msra.mxu0 %v892
    %1267 = vmatprep.mubr.bf16.mxu0 %v1046
    %1268 = vmatmul.mubr.bf16.gmra.mrb[0].mxu0 %v1045
    %v1269 = vpop.f32.mrb[0].mxu0
    %v1270 = vadd.f32 %v1057, %v1269
    %v1271 = vpop.f32.mrb[0].mxu0
    %v1272 = vpop.f32.mrb[0].mxu0
    %v1273 = vadd.f32 %v1057, %v1272
    %v1274 = vpop.f32.mrb[0].mxu0
    %1275 = vdwg.mxu0
    %1276 = vmatprep.subr.bf16.mxu0 0
    %1277 = vmatpush1.bf16.msra.mxu0 %v893
    %1278 = vmatprep.subr.bf16.mxu0 0
    %1279 = vmatpush1.bf16.msra.mxu0 %v894
    %1280 = vmatprep.subr.bf16.mxu0 0
    %1281 = vmatpush1.bf16.msra.mxu0 %v895
    %1282 = vmatprep.subr.bf16.mxu0 0
    %1283 = vmatpush1.bf16.msra.mxu0 %v896
    %1284 = vmatprep.subr.bf16.mxu0 0
    %1285 = vmatpush1.bf16.msra.mxu0 %v897
    %1286 = vmatprep.subr.bf16.mxu0 0
    %1287 = vmatpush1.bf16.msra.mxu0 %v898
    %1288 = vmatprep.subr.bf16.mxu0 0
    %1289 = vmatpush1.bf16.msra.mxu0 %v899
    %1290 = vmatprep.subr.bf16.mxu0 0
    %1291 = vmatpush1.bf16.msra.mxu0 %v900
    %1292 = vmatprep.subr.bf16.mxu0 0
    %1293 = vmatpush1.bf16.msra.mxu0 %v901
    %1294 = vmatprep.subr.bf16.mxu0 0
    %1295 = vmatpush1.bf16.msra.mxu0 %v902
    %1296 = vmatprep.subr.bf16.mxu0 0
    %1297 = vmatpush1.bf16.msra.mxu0 %v903
    %1298 = vmatprep.subr.bf16.mxu0 0
    %1299 = vmatpush1.bf16.msra.mxu0 %v904
    %1300 = vmatprep.subr.bf16.mxu0 0
    %1301 = vmatpush1.bf16.msra.mxu0 %v905
    %1302 = vmatprep.subr.bf16.mxu0 0
    %1303 = vmatpush1.bf16.msra.mxu0 %v906
    %1304 = vmatprep.subr.bf16.mxu0 0
    %1305 = vmatpush1.bf16.msra.mxu0 %v907
    %1306 = vmatprep.subr.bf16.mxu0 0
    %1307 = vmatpush1.bf16.msra.mxu0 %v908
    %1308 = vmatprep.mubr.bf16.mxu0 %v1048
    %1309 = vmatmul.mubr.bf16.gmra.mrb[0].mxu0 %v1047
    %v1310 = vpop.f32.mrb[0].mxu0
    %v1311 = vadd.f32 %v1270, %v1310
    %v1312 = vpop.f32.mrb[0].mxu0
    %v1313 = vpop.f32.mrb[0].mxu0
    %v1314 = vadd.f32 %v1273, %v1313
    %v1315 = vpop.f32.mrb[0].mxu0
    %1316 = vdwg.mxu0
    %1317 = vmatprep.subr.bf16.mxu0 0
    %1318 = vmatpush1.bf16.msra.mxu0 %v909
    %1319 = vmatprep.subr.bf16.mxu0 0
    %1320 = vmatpush1.bf16.msra.mxu0 %v910
    %1321 = vmatprep.subr.bf16.mxu0 0
    %1322 = vmatpush1.bf16.msra.mxu0 %v911
    %1323 = vmatprep.subr.bf16.mxu0 0
    %1324 = vmatpush1.bf16.msra.mxu0 %v912
    %1325 = vmatprep.subr.bf16.mxu0 0
    %1326 = vmatpush1.bf16.msra.mxu0 %v913
    %1327 = vmatprep.subr.bf16.mxu0 0
    %1328 = vmatpush1.bf16.msra.mxu0 %v914
    %1329 = vmatprep.subr.bf16.mxu0 0
    %1330 = vmatpush1.bf16.msra.mxu0 %v915
    %1331 = vmatprep.subr.bf16.mxu0 0
    %1332 = vmatpush1.bf16.msra.mxu0 %v916
    %1333 = vmatprep.subr.bf16.mxu0 0
    %1334 = vmatpush1.bf16.msra.mxu0 %v917
    %1335 = vmatprep.subr.bf16.mxu0 0
    %1336 = vmatpush1.bf16.msra.mxu0 %v918
    %1337 = vmatprep.subr.bf16.mxu0 0
    %1338 = vmatpush1.bf16.msra.mxu0 %v919
    %1339 = vmatprep.subr.bf16.mxu0 0
    %1340 = vmatpush1.bf16.msra.mxu0 %v920
    %1341 = vmatprep.subr.bf16.mxu0 0
    %1342 = vmatpush1.bf16.msra.mxu0 %v921
    %1343 = vmatprep.subr.bf16.mxu0 0
    %1344 = vmatpush1.bf16.msra.mxu0 %v922
    %1345 = vmatprep.subr.bf16.mxu0 0
    %1346 = vmatpush1.bf16.msra.mxu0 %v923
    %1347 = vmatprep.subr.bf16.mxu0 0
    %1348 = vmatpush1.bf16.msra.mxu0 %v924
    %1349 = vmatprep.mubr.bf16.mxu0 %v1050
    %1350 = vmatmul.mubr.bf16.gmra.mrb[0].mxu0 %v1049
    %v1351 = vpop.f32.mrb[0].mxu0
    %v1352 = vadd.f32 %v1311, %v1351
    %v1353 = vpop.f32.mrb[0].mxu0
    %v1354 = vpop.f32.mrb[0].mxu0
    %v1355 = vadd.f32 %v1314, %v1354
    %v1356 = vpop.f32.mrb[0].mxu0
    %1357 = vdwg.mxu0
    %1358 = vmatprep.subr.bf16.mxu0 0
    %1359 = vmatpush1.bf16.msra.mxu0 %v925
    %1360 = vmatprep.subr.bf16.mxu0 0
    %1361 = vmatpush1.bf16.msra.mxu0 %v926
    %1362 = vmatprep.subr.bf16.mxu0 0
    %1363 = vmatpush1.bf16.msra.mxu0 %v927
    %1364 = vmatprep.subr.bf16.mxu0 0
    %1365 = vmatpush1.bf16.msra.mxu0 %v928
    %1366 = vmatprep.subr.bf16.mxu0 0
    %1367 = vmatpush1.bf16.msra.mxu0 %v929
    %1368 = vmatprep.subr.bf16.mxu0 0
    %1369 = vmatpush1.bf16.msra.mxu0 %v930
    %1370 = vmatprep.subr.bf16.mxu0 0
    %1371 = vmatpush1.bf16.msra.mxu0 %v931
    %1372 = vmatprep.subr.bf16.mxu0 0
    %1373 = vmatpush1.bf16.msra.mxu0 %v932
    %1374 = vmatprep.subr.bf16.mxu0 0
    %1375 = vmatpush1.bf16.msra.mxu0 %v933
    %1376 = vmatprep.subr.bf16.mxu0 0
    %1377 = vmatpush1.bf16.msra.mxu0 %v934
    %1378 = vmatprep.subr.bf16.mxu0 0
    %1379 = vmatpush1.bf16.msra.mxu0 %v935
    %1380 = vmatprep.subr.bf16.mxu0 0
    %1381 = vmatpush1.bf16.msra.mxu0 %v936
    %1382 = vmatprep.subr.bf16.mxu0 0
    %1383 = vmatpush1.bf16.msra.mxu0 %v937
    %1384 = vmatprep.subr.bf16.mxu0 0
    %1385 = vmatpush1.bf16.msra.mxu0 %v938
    %1386 = vmatprep.subr.bf16.mxu0 0
    %1387 = vmatpush1.bf16.msra.mxu0 %v939
    %1388 = vmatprep.subr.bf16.mxu0 0
    %1389 = vmatpush1.bf16.msra.mxu0 %v940
    %1390 = vmatprep.mubr.bf16.mxu0 %v1052
    %1391 = vmatmul.mubr.bf16.gmra.mrb[0].mxu0 %v1051
    %v1392 = vpop.f32.mrb[0].mxu0
    %v1393 = vadd.f32 %v1352, %v1392
    %v1394 = vpop.f32.mrb[0].mxu0
    %v1395 = vpop.f32.mrb[0].mxu0
    %v1396 = vadd.f32 %v1355, %v1395
    %v1397 = vpop.f32.mrb[0].mxu0
    %1398 = vdwg.mxu0
    %v1399 = vmul.f32 %v1393, %v1393
    %v1400 = vmul.f32 %v1396, %v1396
    %1401 = vadd.xlane.f32.xlu0 %v1399
    %v1402 = vpop.xlane.xlu0 %1401
    %1403 = vadd.xlane.f32.xlu0 %v1400
    %v1404 = vpop.xlane.xlu0 %1403
    %v1405 = vmax.f32 %v1402, 1e-24
    %v1406 = vmax.f32 %v1404, 1e-24
    %v1407 = vrsqrt.pop %v1405
    %v1408 = vrsqrt.pop %v1406
    %v1409 = vmul.f32 %v1393, %v1407
    %v1410 = vmul.f32 %v1396, %v1408
    %v1412 = vlaneseq
    %v1413 = vshrl.u32 %v1412, 7
    %v1414 = vsub.s32 0, %v1413
    %v1415 = vrot.slane %v747, %v1414
    %1417 = vmatprep.subr.bf16.mxu0 0
    %1418 = vmatpush1.bf16.msra.mxu0 %v941
    %1419 = vmatprep.subr.bf16.mxu0 0
    %1420 = vmatpush1.bf16.msra.mxu0 %v942
    %1421 = vmatprep.subr.bf16.mxu0 0
    %1422 = vmatpush1.bf16.msra.mxu0 %v943
    %1423 = vmatprep.subr.bf16.mxu0 0
    %1424 = vmatpush1.bf16.msra.mxu0 %v944
    %1425 = vmatprep.subr.bf16.mxu0 0
    %1426 = vmatpush1.bf16.msra.mxu0 %v945
    %1427 = vmatprep.subr.bf16.mxu0 0
    %1428 = vmatpush1.bf16.msra.mxu0 %v946
    %1429 = vmatprep.subr.bf16.mxu0 0
    %1430 = vmatpush1.bf16.msra.mxu0 %v947
    %1431 = vmatprep.subr.bf16.mxu0 0
    %1432 = vmatpush1.bf16.msra.mxu0 %v948
    %1433 = vmatprep.subr.bf16.mxu0 0
    %1434 = vmatpush1.bf16.msra.mxu0 %v949
    %1435 = vmatprep.subr.bf16.mxu0 0
    %1436 = vmatpush1.bf16.msra.mxu0 %v950
    %1437 = vmatprep.subr.bf16.mxu0 0
    %1438 = vmatpush1.bf16.msra.mxu0 %v951
    %1439 = vmatprep.subr.bf16.mxu0 0
    %1440 = vmatpush1.bf16.msra.mxu0 %v952
    %1441 = vmatprep.subr.bf16.mxu0 0
    %1442 = vmatpush1.bf16.msra.mxu0 %v953
    %1443 = vmatprep.subr.bf16.mxu0 0
    %1444 = vmatpush1.bf16.msra.mxu0 %v954
    %1445 = vmatprep.subr.bf16.mxu0 0
    %1446 = vmatpush1.bf16.msra.mxu0 %v955
    %1447 = vmatprep.subr.bf16.mxu0 0
    %1448 = vmatpush1.bf16.msra.mxu0 %v956
    %1449 = vmatprep.mubr.bf16.mxu0 %v1022
    %1450 = vmatmul.mubr.bf16.gmra.mrb[0].mxu0 %v1021
    %v1451 = vpop.f32.mrb[0].mxu0
    %v1452 = vadd.f32 %v1415, %v1451
    %v1453 = vpop.f32.mrb[0].mxu0
    %v1454 = vpop.f32.mrb[0].mxu0
    %v1455 = vadd.f32 %v1415, %v1454
    %v1456 = vpop.f32.mrb[0].mxu0
    %1457 = vdwg.mxu0
    %1458 = vmatprep.subr.bf16.mxu0 0
    %1459 = vmatpush1.bf16.msra.mxu0 %v957
    %1460 = vmatprep.subr.bf16.mxu0 0
    %1461 = vmatpush1.bf16.msra.mxu0 %v958
    %1462 = vmatprep.subr.bf16.mxu0 0
    %1463 = vmatpush1.bf16.msra.mxu0 %v959
    %1464 = vmatprep.subr.bf16.mxu0 0
    %1465 = vmatpush1.bf16.msra.mxu0 %v960
    %1466 = vmatprep.subr.bf16.mxu0 0
    %1467 = vmatpush1.bf16.msra.mxu0 %v961
    %1468 = vmatprep.subr.bf16.mxu0 0
    %1469 = vmatpush1.bf16.msra.mxu0 %v962
    %1470 = vmatprep.subr.bf16.mxu0 0
    %1471 = vmatpush1.bf16.msra.mxu0 %v963
    %1472 = vmatprep.subr.bf16.mxu0 0
    %1473 = vmatpush1.bf16.msra.mxu0 %v964
    %1474 = vmatprep.subr.bf16.mxu0 0
    %1475 = vmatpush1.bf16.msra.mxu0 %v965
    %1476 = vmatprep.subr.bf16.mxu0 0
    %1477 = vmatpush1.bf16.msra.mxu0 %v966
    %1478 = vmatprep.subr.bf16.mxu0 0
    %1479 = vmatpush1.bf16.msra.mxu0 %v967
    %1480 = vmatprep.subr.bf16.mxu0 0
    %1481 = vmatpush1.bf16.msra.mxu0 %v968
    %1482 = vmatprep.subr.bf16.mxu0 0
    %1483 = vmatpush1.bf16.msra.mxu0 %v969
    %1484 = vmatprep.subr.bf16.mxu0 0
    %1485 = vmatpush1.bf16.msra.mxu0 %v970
    %1486 = vmatprep.subr.bf16.mxu0 0
    %1487 = vmatpush1.bf16.msra.mxu0 %v971
    %1488 = vmatprep.subr.bf16.mxu0 0
    %1489 = vmatpush1.bf16.msra.mxu0 %v972
    %1490 = vmatprep.mubr.bf16.mxu0 %v1024
    %1491 = vmatmul.mubr.bf16.gmra.mrb[0].mxu0 %v1023
    %v1492 = vpop.f32.mrb[0].mxu0
    %v1493 = vadd.f32 %v1452, %v1492
    %v1494 = vpop.f32.mrb[0].mxu0
    %v1495 = vpop.f32.mrb[0].mxu0
    %v1496 = vadd.f32 %v1455, %v1495
    %v1497 = vpop.f32.mrb[0].mxu0
    %1498 = vdwg.mxu0
    %1499 = vmatprep.subr.bf16.mxu0 0
    %1500 = vmatpush1.bf16.msra.mxu0 %v973
    %1501 = vmatprep.subr.bf16.mxu0 0
    %1502 = vmatpush1.bf16.msra.mxu0 %v974
    %1503 = vmatprep.subr.bf16.mxu0 0
    %1504 = vmatpush1.bf16.msra.mxu0 %v975
    %1505 = vmatprep.subr.bf16.mxu0 0
    %1506 = vmatpush1.bf16.msra.mxu0 %v976
    %1507 = vmatprep.subr.bf16.mxu0 0
    %1508 = vmatpush1.bf16.msra.mxu0 %v977
    %1509 = vmatprep.subr.bf16.mxu0 0
    %1510 = vmatpush1.bf16.msra.mxu0 %v978
    %1511 = vmatprep.subr.bf16.mxu0 0
    %1512 = vmatpush1.bf16.msra.mxu0 %v979
    %1513 = vmatprep.subr.bf16.mxu0 0
    %1514 = vmatpush1.bf16.msra.mxu0 %v980
    %1515 = vmatprep.subr.bf16.mxu0 0
    %1516 = vmatpush1.bf16.msra.mxu0 %v981
    %1517 = vmatprep.subr.bf16.mxu0 0
    %1518 = vmatpush1.bf16.msra.mxu0 %v982
    %1519 = vmatprep.subr.bf16.mxu0 0
    %1520 = vmatpush1.bf16.msra.mxu0 %v983
    %1521 = vmatprep.subr.bf16.mxu0 0
    %1522 = vmatpush1.bf16.msra.mxu0 %v984
    %1523 = vmatprep.subr.bf16.mxu0 0
    %1524 = vmatpush1.bf16.msra.mxu0 %v985
    %1525 = vmatprep.subr.bf16.mxu0 0
    %1526 = vmatpush1.bf16.msra.mxu0 %v986
    %1527 = vmatprep.subr.bf16.mxu0 0
    %1528 = vmatpush1.bf16.msra.mxu0 %v987
    %1529 = vmatprep.subr.bf16.mxu0 0
    %1530 = vmatpush1.bf16.msra.mxu0 %v988
    %1531 = vmatprep.mubr.bf16.mxu0 %v1026
    %1532 = vmatmul.mubr.bf16.gmra.mrb[0].mxu0 %v1025
    %v1533 = vpop.f32.mrb[0].mxu0
    %v1534 = vadd.f32 %v1493, %v1533
    %v1535 = vpop.f32.mrb[0].mxu0
    %v1536 = vpop.f32.mrb[0].mxu0
    %v1537 = vadd.f32 %v1496, %v1536
    %v1538 = vpop.f32.mrb[0].mxu0
    %1539 = vdwg.mxu0
    %1540 = vmatprep.subr.bf16.mxu0 0
    %1541 = vmatpush1.bf16.msra.mxu0 %v989
    %1542 = vmatprep.subr.bf16.mxu0 0
    %1543 = vmatpush1.bf16.msra.mxu0 %v990
    %1544 = vmatprep.subr.bf16.mxu0 0
    %1545 = vmatpush1.bf16.msra.mxu0 %v991
    %1546 = vmatprep.subr.bf16.mxu0 0
    %1547 = vmatpush1.bf16.msra.mxu0 %v992
    %1548 = vmatprep.subr.bf16.mxu0 0
    %1549 = vmatpush1.bf16.msra.mxu0 %v993
    %1550 = vmatprep.subr.bf16.mxu0 0
    %1551 = vmatpush1.bf16.msra.mxu0 %v994
    %1552 = vmatprep.subr.bf16.mxu0 0
    %1553 = vmatpush1.bf16.msra.mxu0 %v995
    %1554 = vmatprep.subr.bf16.mxu0 0
    %1555 = vmatpush1.bf16.msra.mxu0 %v996
    %1556 = vmatprep.subr.bf16.mxu0 0
    %1557 = vmatpush1.bf16.msra.mxu0 %v997
    %1558 = vmatprep.subr.bf16.mxu0 0
    %1559 = vmatpush1.bf16.msra.mxu0 %v998
    %1560 = vmatprep.subr.bf16.mxu0 0
    %1561 = vmatpush1.bf16.msra.mxu0 %v999
    %1562 = vmatprep.subr.bf16.mxu0 0
    %1563 = vmatpush1.bf16.msra.mxu0 %v1000
    %1564 = vmatprep.subr.bf16.mxu0 0
    %1565 = vmatpush1.bf16.msra.mxu0 %v1001
    %1566 = vmatprep.subr.bf16.mxu0 0
    %1567 = vmatpush1.bf16.msra.mxu0 %v1002
    %1568 = vmatprep.subr.bf16.mxu0 0
    %1569 = vmatpush1.bf16.msra.mxu0 %v1003
    %1570 = vmatprep.subr.bf16.mxu0 0
    %1571 = vmatpush1.bf16.msra.mxu0 %v1004
    %1572 = vmatprep.mubr.bf16.mxu0 %v1028
    %1573 = vmatmul.mubr.bf16.gmra.mrb[0].mxu0 %v1027
    %v1574 = vpop.f32.mrb[0].mxu0
    %v1575 = vadd.f32 %v1534, %v1574
    %v1576 = vpop.f32.mrb[0].mxu0
    %v1577 = vpop.f32.mrb[0].mxu0
    %v1578 = vadd.f32 %v1537, %v1577
    %v1579 = vpop.f32.mrb[0].mxu0
    %1580 = vdwg.mxu0
    %v1581 = vmul.f32 %v1575, %v1575
    %v1582 = vmul.f32 %v1578, %v1578
    %1583 = vadd.xlane.f32.xlu0 %v1581
    %v1584 = vpop.xlane.xlu0 %1583
    %1585 = vadd.xlane.f32.xlu0 %v1582
    %v1586 = vpop.xlane.xlu0 %1585
    %v1587 = vmax.f32 %v1584, 1e-24
    %v1588 = vmax.f32 %v1586, 1e-24
    %v1589 = vrsqrt.pop %v1587
    %v1590 = vrsqrt.pop %v1588
    %v1591 = vmul.f32 %v1575, %v1589
    %v1592 = vmul.f32 %v1578, %v1590
    %1593 = vmatprep.subr.bf16.mxu0 0
    %1594 = vmatpush1.bf16.msra.mxu0 %v941
    %1595 = vmatprep.subr.bf16.mxu0 0
    %1596 = vmatpush1.bf16.msra.mxu0 %v942
    %1597 = vmatprep.subr.bf16.mxu0 0
    %1598 = vmatpush1.bf16.msra.mxu0 %v943
    %1599 = vmatprep.subr.bf16.mxu0 0
    %1600 = vmatpush1.bf16.msra.mxu0 %v944
    %1601 = vmatprep.subr.bf16.mxu0 0
    %1602 = vmatpush1.bf16.msra.mxu0 %v945
    %1603 = vmatprep.subr.bf16.mxu0 0
    %1604 = vmatpush1.bf16.msra.mxu0 %v946
    %1605 = vmatprep.subr.bf16.mxu0 0
    %1606 = vmatpush1.bf16.msra.mxu0 %v947
    %1607 = vmatprep.subr.bf16.mxu0 0
    %1608 = vmatpush1.bf16.msra.mxu0 %v948
    %1609 = vmatprep.subr.bf16.mxu0 0
    %1610 = vmatpush1.bf16.msra.mxu0 %v949
    %1611 = vmatprep.subr.bf16.mxu0 0
    %1612 = vmatpush1.bf16.msra.mxu0 %v950
    %1613 = vmatprep.subr.bf16.mxu0 0
    %1614 = vmatpush1.bf16.msra.mxu0 %v951
    %1615 = vmatprep.subr.bf16.mxu0 0
    %1616 = vmatpush1.bf16.msra.mxu0 %v952
    %1617 = vmatprep.subr.bf16.mxu0 0
    %1618 = vmatpush1.bf16.msra.mxu0 %v953
    %1619 = vmatprep.subr.bf16.mxu0 0
    %1620 = vmatpush1.bf16.msra.mxu0 %v954
    %1621 = vmatprep.subr.bf16.mxu0 0
    %1622 = vmatpush1.bf16.msra.mxu0 %v955
    %1623 = vmatprep.subr.bf16.mxu0 0
    %1624 = vmatpush1.bf16.msra.mxu0 %v956
    %1625 = vmatprep.mubr.bf16.mxu0 %v1046
    %1626 = vmatmul.mubr.bf16.gmra.mrb[0].mxu0 %v1045
    %v1627 = vpop.f32.mrb[0].mxu0
    %v1628 = vadd.f32 %v1415, %v1627
    %v1629 = vpop.f32.mrb[0].mxu0
    %v1630 = vpop.f32.mrb[0].mxu0
    %v1631 = vadd.f32 %v1415, %v1630
    %v1632 = vpop.f32.mrb[0].mxu0
    %1633 = vdwg.mxu0
    %1634 = vmatprep.subr.bf16.mxu0 0
    %1635 = vmatpush1.bf16.msra.mxu0 %v957
    %1636 = vmatprep.subr.bf16.mxu0 0
    %1637 = vmatpush1.bf16.msra.mxu0 %v958
    %1638 = vmatprep.subr.bf16.mxu0 0
    %1639 = vmatpush1.bf16.msra.mxu0 %v959
    %1640 = vmatprep.subr.bf16.mxu0 0
    %1641 = vmatpush1.bf16.msra.mxu0 %v960
    %1642 = vmatprep.subr.bf16.mxu0 0
    %1643 = vmatpush1.bf16.msra.mxu0 %v961
    %1644 = vmatprep.subr.bf16.mxu0 0
    %1645 = vmatpush1.bf16.msra.mxu0 %v962
    %1646 = vmatprep.subr.bf16.mxu0 0
    %1647 = vmatpush1.bf16.msra.mxu0 %v963
    %1648 = vmatprep.subr.bf16.mxu0 0
    %1649 = vmatpush1.bf16.msra.mxu0 %v964
    %1650 = vmatprep.subr.bf16.mxu0 0
    %1651 = vmatpush1.bf16.msra.mxu0 %v965
    %1652 = vmatprep.subr.bf16.mxu0 0
    %1653 = vmatpush1.bf16.msra.mxu0 %v966
    %1654 = vmatprep.subr.bf16.mxu0 0
    %1655 = vmatpush1.bf16.msra.mxu0 %v967
    %1656 = vmatprep.subr.bf16.mxu0 0
    %1657 = vmatpush1.bf16.msra.mxu0 %v968
    %1658 = vmatprep.subr.bf16.mxu0 0
    %1659 = vmatpush1.bf16.msra.mxu0 %v969
    %1660 = vmatprep.subr.bf16.mxu0 0
    %1661 = vmatpush1.bf16.msra.mxu0 %v970
    %1662 = vmatprep.subr.bf16.mxu0 0
    %1663 = vmatpush1.bf16.msra.mxu0 %v971
    %1664 = vmatprep.subr.bf16.mxu0 0
    %1665 = vmatpush1.bf16.msra.mxu0 %v972
    %1666 = vmatprep.mubr.bf16.mxu0 %v1048
    %1667 = vmatmul.mubr.bf16.gmra.mrb[0].mxu0 %v1047
    %v1668 = vpop.f32.mrb[0].mxu0
    %v1669 = vadd.f32 %v1628, %v1668
    %v1670 = vpop.f32.mrb[0].mxu0
    %v1671 = vpop.f32.mrb[0].mxu0
    %v1672 = vadd.f32 %v1631, %v1671
    %v1673 = vpop.f32.mrb[0].mxu0
    %1674 = vdwg.mxu0
    %1675 = vmatprep.subr.bf16.mxu0 0
    %1676 = vmatpush1.bf16.msra.mxu0 %v973
    %1677 = vmatprep.subr.bf16.mxu0 0
    %1678 = vmatpush1.bf16.msra.mxu0 %v974
    %1679 = vmatprep.subr.bf16.mxu0 0
    %1680 = vmatpush1.bf16.msra.mxu0 %v975
    %1681 = vmatprep.subr.bf16.mxu0 0
    %1682 = vmatpush1.bf16.msra.mxu0 %v976
    %1683 = vmatprep.subr.bf16.mxu0 0
    %1684 = vmatpush1.bf16.msra.mxu0 %v977
    %1685 = vmatprep.subr.bf16.mxu0 0
    %1686 = vmatpush1.bf16.msra.mxu0 %v978
    %1687 = vmatprep.subr.bf16.mxu0 0
    %1688 = vmatpush1.bf16.msra.mxu0 %v979
    %1689 = vmatprep.subr.bf16.mxu0 0
    %1690 = vmatpush1.bf16.msra.mxu0 %v980
    %1691 = vmatprep.subr.bf16.mxu0 0
    %1692 = vmatpush1.bf16.msra.mxu0 %v981
    %1693 = vmatprep.subr.bf16.mxu0 0
    %1694 = vmatpush1.bf16.msra.mxu0 %v982
    %1695 = vmatprep.subr.bf16.mxu0 0
    %1696 = vmatpush1.bf16.msra.mxu0 %v983
    %1697 = vmatprep.subr.bf16.mxu0 0
    %1698 = vmatpush1.bf16.msra.mxu0 %v984
    %1699 = vmatprep.subr.bf16.mxu0 0
    %1700 = vmatpush1.bf16.msra.mxu0 %v985
    %1701 = vmatprep.subr.bf16.mxu0 0
    %1702 = vmatpush1.bf16.msra.mxu0 %v986
    %1703 = vmatprep.subr.bf16.mxu0 0
    %1704 = vmatpush1.bf16.msra.mxu0 %v987
    %1705 = vmatprep.subr.bf16.mxu0 0
    %1706 = vmatpush1.bf16.msra.mxu0 %v988
    %1707 = vmatprep.mubr.bf16.mxu0 %v1050
    %1708 = vmatmul.mubr.bf16.gmra.mrb[0].mxu0 %v1049
    %v1709 = vpop.f32.mrb[0].mxu0
    %v1710 = vadd.f32 %v1669, %v1709
    %v1711 = vpop.f32.mrb[0].mxu0
    %v1712 = vpop.f32.mrb[0].mxu0
    %v1713 = vadd.f32 %v1672, %v1712
    %v1714 = vpop.f32.mrb[0].mxu0
    %1715 = vdwg.mxu0
    %1716 = vmatprep.subr.bf16.mxu0 0
    %1717 = vmatpush1.bf16.msra.mxu0 %v989
    %1718 = vmatprep.subr.bf16.mxu0 0
    %1719 = vmatpush1.bf16.msra.mxu0 %v990
    %1720 = vmatprep.subr.bf16.mxu0 0
    %1721 = vmatpush1.bf16.msra.mxu0 %v991
    %1722 = vmatprep.subr.bf16.mxu0 0
    %1723 = vmatpush1.bf16.msra.mxu0 %v992
    %1724 = vmatprep.subr.bf16.mxu0 0
    %1725 = vmatpush1.bf16.msra.mxu0 %v993
    %1726 = vmatprep.subr.bf16.mxu0 0
    %1727 = vmatpush1.bf16.msra.mxu0 %v994
    %1728 = vmatprep.subr.bf16.mxu0 0
    %1729 = vmatpush1.bf16.msra.mxu0 %v995
    %1730 = vmatprep.subr.bf16.mxu0 0
    %1731 = vmatpush1.bf16.msra.mxu0 %v996
    %1732 = vmatprep.subr.bf16.mxu0 0
    %1733 = vmatpush1.bf16.msra.mxu0 %v997
    %1734 = vmatprep.subr.bf16.mxu0 0
    %1735 = vmatpush1.bf16.msra.mxu0 %v998
    %1736 = vmatprep.subr.bf16.mxu0 0
    %1737 = vmatpush1.bf16.msra.mxu0 %v999
    %1738 = vmatprep.subr.bf16.mxu0 0
    %1739 = vmatpush1.bf16.msra.mxu0 %v1000
    %1740 = vmatprep.subr.bf16.mxu0 0
    %1741 = vmatpush1.bf16.msra.mxu0 %v1001
    %1742 = vmatprep.subr.bf16.mxu0 0
    %1743 = vmatpush1.bf16.msra.mxu0 %v1002
    %1744 = vmatprep.subr.bf16.mxu0 0
    %1745 = vmatpush1.bf16.msra.mxu0 %v1003
    %1746 = vmatprep.subr.bf16.mxu0 0
    %1747 = vmatpush1.bf16.msra.mxu0 %v1004
    %1748 = vmatprep.mubr.bf16.mxu0 %v1052
    %1749 = vmatmul.mubr.bf16.gmra.mrb[0].mxu0 %v1051
    %v1750 = vpop.f32.mrb[0].mxu0
    %v1751 = vadd.f32 %v1710, %v1750
    %v1752 = vpop.f32.mrb[0].mxu0
    %v1753 = vpop.f32.mrb[0].mxu0
    %v1754 = vadd.f32 %v1713, %v1753
    %v1755 = vpop.f32.mrb[0].mxu0
    %1756 = vdwg.mxu0
    %v1757 = vmul.f32 %v1751, %v1751
    %v1758 = vmul.f32 %v1754, %v1754
    %1759 = vadd.xlane.f32.xlu0 %v1757
    %v1760 = vpop.xlane.xlu0 %1759
    %1761 = vadd.xlane.f32.xlu0 %v1758
    %v1762 = vpop.xlane.xlu0 %1761
    %v1763 = vmax.f32 %v1760, 1e-24
    %v1764 = vmax.f32 %v1762, 1e-24
    %v1765 = vrsqrt.pop %v1763
    %v1766 = vrsqrt.pop %v1764
    %v1767 = vmul.f32 %v1751, %v1765
    %v1768 = vmul.f32 %v1754, %v1766
    %v1769 = vpack.c.bf16 %v1592, %v1591
    %v1771 = vunpack.c.l.b16 %v1769
    %v1772 = vunpack.c.h.b16 %v1769
    %v1773 = vpack.c.b16 %v1771, %v1771
    %v1774 = vpack.c.b16 %v1772, %v1772
    %1777 = vst [vmem:[#allocation12] sm:$0xf] %v1773
    %1778 = vst [vmem:[#allocation12 + $0x4] sm:$0xf] %v1774
    %v1779 = vpack.c.bf16 %v1768, %v1767
    %v1781 = vunpack.c.l.b16 %v1779
    %v1782 = vunpack.c.h.b16 %v1779
    %v1783 = vpack.c.b16 %v1781, %v1781
    %v1784 = vpack.c.b16 %v1782, %v1782
    %1787 = vst [vmem:[#allocation14] sm:$0xf] %v1783
    %1788 = vst [vmem:[#allocation14 + $0x4] sm:$0xf] %v1784
    %v1789 = vmul.f32 %v1233, %v1767
    %v1790 = vmul.f32 %v1234, %v1768
    %v1791 = vmul.f32 %v1409, %v1591
    %v1792 = vmul.f32 %v1410, %v1592
    %1793 = vadd.xlane.f32.xlu0 %v1789
    %v1794 = vpop.xlane.xlu0 %1793
    %1795 = vadd.xlane.f32.xlu0 %v1790
    %v1796 = vpop.xlane.xlu0 %1795
    %1797 = vadd.xlane.f32.xlu0 %v1791
    %v1798 = vpop.xlane.xlu0 %1797
    %1799 = vadd.xlane.f32.xlu0 %v1792
    %v1800 = vpop.xlane.xlu0 %1799
    %v1801 = vpack.c.bf16 %v1234, %v1233
    %v1802 = vpack.c.bf16 %v1410, %v1409
    %v1803 = vsub.f32 %v1794, 1.0
    %v1804 = vsub.f32 %v1796, 1.0
    %v1805 = vsub.f32 %v1798, 1.0
    %v1806 = vsub.f32 %v1800, 1.0
    %v1807 = vmul.f32 %v1803, 10.0
    %v1808 = vmul.f32 %v1804, 10.0
    %v1809 = vmul.f32 %v1805, 10.0
    %v1810 = vmul.f32 %v1806, 10.0
    %v1811 = vmul.f32 %v1807, 1.442695
    %v1812 = vpow.pop %v1811
    %v1813 = vmul.f32 %v1808, 1.442695
    %v1814 = vpow.pop %v1813
    %v1815 = vmul.f32 %v1809, 1.442695
    %v1816 = vpow.pop %v1815
    %v1817 = vmul.f32 %v1810, 1.442695
    %v1818 = vpow.pop %v1817
    %v1819 = vld [vmem:[#allocation10] sm:$0xff]
    %v1820 = vld [vmem:[#allocation10 + $0x8] sm:$0xff]
    %v1821 = vld [vmem:[#allocation10 + $0x80] sm:$0xff]
    %v1822 = vld [vmem:[#allocation10 + $0x88] sm:$0xff]
    %v1823 = vld [vmem:[#allocation10 + $0x100] sm:$0xff]
    %v1824 = vld [vmem:[#allocation10 + $0x108] sm:$0xff]
    %v1825 = vld [vmem:[#allocation10 + $0x180] sm:$0xff]
    %v1826 = vld [vmem:[#allocation10 + $0x188] sm:$0xff]
    %v1827 = vld [vmem:[#allocation10 + $0x200] sm:$0xff]
    %v1828 = vld [vmem:[#allocation10 + $0x208] sm:$0xff]
    %v1829 = vld [vmem:[#allocation10 + $0x280] sm:$0xff]
    %v1830 = vld [vmem:[#allocation10 + $0x288] sm:$0xff]
    %v1831 = vld [vmem:[#allocation10 + $0x300] sm:$0xff]
    %v1832 = vld [vmem:[#allocation10 + $0x308] sm:$0xff]
    %v1833 = vld [vmem:[#allocation10 + $0x380] sm:$0xff]
    %v1834 = vld [vmem:[#allocation10 + $0x388] sm:$0xff]
    %v1835 = vld [vmem:[#allocation10 + $0x400] sm:$0xff]
    %v1836 = vld [vmem:[#allocation10 + $0x408] sm:$0xff]
    %v1837 = vld [vmem:[#allocation10 + $0x480] sm:$0xff]
    %v1838 = vld [vmem:[#allocation10 + $0x488] sm:$0xff]
    %v1839 = vld [vmem:[#allocation10 + $0x500] sm:$0xff]
    %v1840 = vld [vmem:[#allocation10 + $0x508] sm:$0xff]
    %v1841 = vld [vmem:[#allocation10 + $0x580] sm:$0xff]
    %v1842 = vld [vmem:[#allocation10 + $0x588] sm:$0xff]
    %v1843 = vld [vmem:[#allocation10 + $0x600] sm:$0xff]
    %v1844 = vld [vmem:[#allocation10 + $0x608] sm:$0xff]
    %v1845 = vld [vmem:[#allocation10 + $0x680] sm:$0xff]
    %v1846 = vld [vmem:[#allocation10 + $0x688] sm:$0xff]
    %v1847 = vld [vmem:[#allocation10 + $0x700] sm:$0xff]
    %v1848 = vld [vmem:[#allocation10 + $0x708] sm:$0xff]
    %v1849 = vld [vmem:[#allocation10 + $0x780] sm:$0xff]
    %v1850 = vld [vmem:[#allocation10 + $0x788] sm:$0xff]
    %v1883 = vunpack.c.l.b16 %v1819
    %v1884 = vunpack.c.h.b16 %v1819
    %v1885 = vunpack.c.l.b16 %v1820
    %v1886 = vunpack.c.h.b16 %v1820
    %v1887 = vunpack.c.l.b16 %v1821
    %v1888 = vunpack.c.h.b16 %v1821
    %v1889 = vunpack.c.l.b16 %v1822
    %v1890 = vunpack.c.h.b16 %v1822
    %v1891 = vunpack.c.l.b16 %v1823
    %v1892 = vunpack.c.h.b16 %v1823
    %v1893 = vunpack.c.l.b16 %v1824
    %v1894 = vunpack.c.h.b16 %v1824
    %v1895 = vunpack.c.l.b16 %v1825
    %v1896 = vunpack.c.h.b16 %v1825
    %v1897 = vunpack.c.l.b16 %v1826
    %v1898 = vunpack.c.h.b16 %v1826
    %v1899 = vunpack.c.l.b16 %v1827
    %v1900 = vunpack.c.h.b16 %v1827
    %v1901 = vunpack.c.l.b16 %v1828
    %v1902 = vunpack.c.h.b16 %v1828
    %v1903 = vunpack.c.l.b16 %v1829
    %v1904 = vunpack.c.h.b16 %v1829
    %v1905 = vunpack.c.l.b16 %v1830
    %v1906 = vunpack.c.h.b16 %v1830
    %v1907 = vunpack.c.l.b16 %v1831
    %v1908 = vunpack.c.h.b16 %v1831
    %v1909 = vunpack.c.l.b16 %v1832
    %v1910 = vunpack.c.h.b16 %v1832
    %v1911 = vunpack.c.l.b16 %v1833
    %v1912 = vunpack.c.h.b16 %v1833
    %v1913 = vunpack.c.l.b16 %v1834
    %v1914 = vunpack.c.h.b16 %v1834
    %v1915 = vunpack.c.l.b16 %v1835
    %v1916 = vunpack.c.h.b16 %v1835
    %v1917 = vunpack.c.l.b16 %v1836
    %v1918 = vunpack.c.h.b16 %v1836
    %v1919 = vunpack.c.l.b16 %v1837
    %v1920 = vunpack.c.h.b16 %v1837
    %v1921 = vunpack.c.l.b16 %v1838
    %v1922 = vunpack.c.h.b16 %v1838
    %v1923 = vunpack.c.l.b16 %v1839
    %v1924 = vunpack.c.h.b16 %v1839
    %v1925 = vunpack.c.l.b16 %v1840
    %v1926 = vunpack.c.h.b16 %v1840
    %v1927 = vunpack.c.l.b16 %v1841
    %v1928 = vunpack.c.h.b16 %v1841
    %v1929 = vunpack.c.l.b16 %v1842
    %v1930 = vunpack.c.h.b16 %v1842
    %v1931 = vunpack.c.l.b16 %v1843
    %v1932 = vunpack.c.h.b16 %v1843
    %v1933 = vunpack.c.l.b16 %v1844
    %v1934 = vunpack.c.h.b16 %v1844
    %v1935 = vunpack.c.l.b16 %v1845
    %v1936 = vunpack.c.h.b16 %v1845
    %v1937 = vunpack.c.l.b16 %v1846
    %v1938 = vunpack.c.h.b16 %v1846
    %v1939 = vunpack.c.l.b16 %v1847
    %v1940 = vunpack.c.h.b16 %v1847
    %v1941 = vunpack.c.l.b16 %v1848
    %v1942 = vunpack.c.h.b16 %v1848
    %v1943 = vunpack.c.l.b16 %v1849
    %v1944 = vunpack.c.h.b16 %v1849
    %v1945 = vunpack.c.l.b16 %v1850
    %v1946 = vunpack.c.h.b16 %v1850
    %v1947 = vpack.c.b16 %v1887, %v1883
    %v1948 = vpack.c.b16 %v1888, %v1884
    %v1949 = vpack.c.b16 %v1889, %v1885
    %v1950 = vpack.c.b16 %v1890, %v1886
    %v1951 = vpack.c.b16 %v1895, %v1891
    %v1952 = vpack.c.b16 %v1896, %v1892
    %v1953 = vpack.c.b16 %v1897, %v1893
    %v1954 = vpack.c.b16 %v1898, %v1894
    %v1955 = vpack.c.b16 %v1903, %v1899
    %v1956 = vpack.c.b16 %v1904, %v1900
    %v1957 = vpack.c.b16 %v1905, %v1901
    %v1958 = vpack.c.b16 %v1906, %v1902
    %v1959 = vpack.c.b16 %v1911, %v1907
    %v1960 = vpack.c.b16 %v1912, %v1908
    %v1961 = vpack.c.b16 %v1913, %v1909
    %v1962 = vpack.c.b16 %v1914, %v1910
    %v1963 = vpack.c.b16 %v1919, %v1915
    %v1964 = vpack.c.b16 %v1920, %v1916
    %v1965 = vpack.c.b16 %v1921, %v1917
    %v1966 = vpack.c.b16 %v1922, %v1918
    %v1967 = vpack.c.b16 %v1927, %v1923
    %v1968 = vpack.c.b16 %v1928, %v1924
    %v1969 = vpack.c.b16 %v1929, %v1925
    %v1970 = vpack.c.b16 %v1930, %v1926
    %v1971 = vpack.c.b16 %v1935, %v1931
    %v1972 = vpack.c.b16 %v1936, %v1932
    %v1973 = vpack.c.b16 %v1937, %v1933
    %v1974 = vpack.c.b16 %v1938, %v1934
    %v1975 = vpack.c.b16 %v1943, %v1939
    %v1976 = vpack.c.b16 %v1944, %v1940
    %v1977 = vpack.c.b16 %v1945, %v1941
    %v1978 = vpack.c.b16 %v1946, %v1942
    %2011 = vmatprep.subr.bf16.mxu0 %v1948
    %2012 = vmatpush1.bf16.msra.mxu0 %v1947
    %2013 = vmatprep.subr.bf16.mxu0 %v1952
    %2014 = vmatpush1.bf16.msra.mxu0 %v1951
    %2015 = vmatprep.subr.bf16.mxu0 %v1956
    %2016 = vmatpush1.bf16.msra.mxu0 %v1955
    %2017 = vmatprep.subr.bf16.mxu0 %v1960
    %2018 = vmatpush1.bf16.msra.mxu0 %v1959
    %2019 = vmatprep.subr.bf16.mxu0 %v1964
    %2020 = vmatpush1.bf16.msra.mxu0 %v1963
    %2021 = vmatprep.subr.bf16.mxu0 %v1968
    %2022 = vmatpush1.bf16.msra.mxu0 %v1967
    %2023 = vmatprep.subr.bf16.mxu0 %v1972
    %2024 = vmatpush1.bf16.msra.mxu0 %v1971
    %2025 = vmatprep.subr.bf16.mxu0 %v1976
    %2026 = vmatpush1.bf16.msra.mxu0 %v1975
    %2027 = vmatprep.subr.bf16.mxu0 0
    %2028 = vmatpush1.bf16.msra.mxu0 0
    %2029 = vmatprep.subr.bf16.mxu0 0
    %2030 = vmatpush1.bf16.msra.mxu0 0
    %2031 = vmatprep.subr.bf16.mxu0 0
    %2032 = vmatpush1.bf16.msra.mxu0 0
    %2033 = vmatprep.subr.bf16.mxu0 0
    %2034 = vmatpush1.bf16.msra.mxu0 0
    %2035 = vmatprep.subr.bf16.mxu0 0
    %2036 = vmatpush1.bf16.msra.mxu0 0
    %2037 = vmatprep.subr.bf16.mxu0 0
    %2038 = vmatpush1.bf16.msra.mxu0 0
    %2039 = vmatprep.subr.bf16.mxu0 0
    %2040 = vmatpush1.bf16.msra.mxu0 0
    %2041 = vmatprep.subr.bf16.mxu0 0
    %2042 = vmatpush1.bf16.msra.mxu0 0
    %2043 = vmatprep.mubr.bf16.mxu0 0
    %2044 = vmatmul.mubr.bf16.gmra.mrb[0].mxu0 %v1801
    %v2045 = vpop.f32.mrb[0].mxu0
    %v2046 = vadd.f32 0.0, %v2045
    %v2047 = vpop.f32.mrb[0].mxu0
    %v2048 = vadd.f32 0.0, %v2047
    %v2049 = vpop.f32.mrb[0].mxu0
    %v2050 = vadd.f32 0.0, %v2049
    %v2051 = vpop.f32.mrb[0].mxu0
    %v2052 = vadd.f32 0.0, %v2051
    %2053 = vmatprep.mubr.bf16.mxu0 0
    %2054 = vmatmul.mubr.bf16.gmra.mrb[0].mxu0 %v1802
    %v2055 = vpop.f32.mrb[0].mxu0
    %v2056 = vadd.f32 0.0, %v2055
    %v2057 = vpop.f32.mrb[0].mxu0
    %v2058 = vadd.f32 0.0, %v2057
    %v2059 = vpop.f32.mrb[0].mxu0
    %v2060 = vadd.f32 0.0, %v2059
    %v2061 = vpop.f32.mrb[0].mxu0
    %v2062 = vadd.f32 0.0, %v2061
    %2063 = vdwg.mxu0
    %2064 = vmatprep.subr.bf16.mxu0 %v1950
    %2065 = vmatpush1.bf16.msra.mxu0 %v1949
    %2066 = vmatprep.subr.bf16.mxu0 %v1954
    %2067 = vmatpush1.bf16.msra.mxu0 %v1953
    %2068 = vmatprep.subr.bf16.mxu0 %v1958
    %2069 = vmatpush1.bf16.msra.mxu0 %v1957
    %2070 = vmatprep.subr.bf16.mxu0 %v1962
    %2071 = vmatpush1.bf16.msra.mxu0 %v1961
    %2072 = vmatprep.subr.bf16.mxu0 %v1966
    %2073 = vmatpush1.bf16.msra.mxu0 %v1965
    %2074 = vmatprep.subr.bf16.mxu0 %v1970
    %2075 = vmatpush1.bf16.msra.mxu0 %v1969
    %2076 = vmatprep.subr.bf16.mxu0 %v1974
    %2077 = vmatpush1.bf16.msra.mxu0 %v1973
    %2078 = vmatprep.subr.bf16.mxu0 %v1978
    %2079 = vmatpush1.bf16.msra.mxu0 %v1977
    %2080 = vmatprep.subr.bf16.mxu0 0
    %2081 = vmatpush1.bf16.msra.mxu0 0
    %2082 = vmatprep.subr.bf16.mxu0 0
    %2083 = vmatpush1.bf16.msra.mxu0 0
    %2084 = vmatprep.subr.bf16.mxu0 0
    %2085 = vmatpush1.bf16.msra.mxu0 0
    %2086 = vmatprep.subr.bf16.mxu0 0
    %2087 = vmatpush1.bf16.msra.mxu0 0
    %2088 = vmatprep.subr.bf16.mxu0 0
    %2089 = vmatpush1.bf16.msra.mxu0 0
    %2090 = vmatprep.subr.bf16.mxu0 0
    %2091 = vmatpush1.bf16.msra.mxu0 0
    %2092 = vmatprep.subr.bf16.mxu0 0
    %2093 = vmatpush1.bf16.msra.mxu0 0
    %2094 = vmatprep.subr.bf16.mxu0 0
    %2095 = vmatpush1.bf16.msra.mxu0 0
    %2096 = vmatprep.mubr.bf16.mxu0 0
    %2097 = vmatmul.mubr.bf16.gmra.mrb[0].mxu0 %v1801
    %v2098 = vpop.f32.mrb[0].mxu0
    %v2099 = vadd.f32 0.0, %v2098
    %v2100 = vpop.f32.mrb[0].mxu0
    %v2101 = vadd.f32 0.0, %v2100
    %v2102 = vpop.f32.mrb[0].mxu0
    %v2103 = vadd.f32 0.0, %v2102
    %v2104 = vpop.f32.mrb[0].mxu0
    %v2105 = vadd.f32 0.0, %v2104
    %2106 = vmatprep.mubr.bf16.mxu0 0
    %2107 = vmatmul.mubr.bf16.gmra.mrb[0].mxu0 %v1802
    %v2108 = vpop.f32.mrb[0].mxu0
    %v2109 = vadd.f32 0.0, %v2108
    %v2110 = vpop.f32.mrb[0].mxu0
    %v2111 = vadd.f32 0.0, %v2110
    %v2112 = vpop.f32.mrb[0].mxu0
    %v2113 = vadd.f32 0.0, %v2112
    %v2114 = vpop.f32.mrb[0].mxu0
    %v2115 = vadd.f32 0.0, %v2114
    %2116 = vdwg.mxu0
    %v2117 = vsub.f32 %v2046, 1.0
    %v2118 = vsub.f32 %v2048, 1.0
    %v2119 = vsub.f32 %v2099, 1.0
    %v2120 = vsub.f32 %v2101, 1.0
    %v2121 = vsub.f32 %v2050, 1.0
    %v2122 = vsub.f32 %v2052, 1.0
    %v2123 = vsub.f32 %v2103, 1.0
    %v2124 = vsub.f32 %v2105, 1.0
    %v2125 = vsub.f32 %v2056, 1.0
    %v2126 = vsub.f32 %v2058, 1.0
    %v2127 = vsub.f32 %v2109, 1.0
    %v2128 = vsub.f32 %v2111, 1.0
    %v2129 = vsub.f32 %v2060, 1.0
    %v2130 = vsub.f32 %v2062, 1.0
    %v2131 = vsub.f32 %v2113, 1.0
    %v2132 = vsub.f32 %v2115, 1.0
    %v2133 = vmul.f32 %v2117, 10.0
    %v2134 = vmul.f32 %v2118, 10.0
    %v2135 = vmul.f32 %v2119, 10.0
    %v2136 = vmul.f32 %v2120, 10.0
    %v2137 = vmul.f32 %v2121, 10.0
    %v2138 = vmul.f32 %v2122, 10.0
    %v2139 = vmul.f32 %v2123, 10.0
    %v2140 = vmul.f32 %v2124, 10.0
    %v2141 = vmul.f32 %v2125, 10.0
    %v2142 = vmul.f32 %v2126, 10.0
    %v2143 = vmul.f32 %v2127, 10.0
    %v2144 = vmul.f32 %v2128, 10.0
    %v2145 = vmul.f32 %v2129, 10.0
    %v2146 = vmul.f32 %v2130, 10.0
    %v2147 = vmul.f32 %v2131, 10.0
    %v2148 = vmul.f32 %v2132, 10.0
    %v2149 = vmul.f32 %v2133, 1.442695
    %v2150 = vpow.pop %v2149
    %v2151 = vmul.f32 %v2134, 1.442695
    %v2152 = vpow.pop %v2151
    %v2153 = vmul.f32 %v2135, 1.442695
    %v2154 = vpow.pop %v2153
    %v2155 = vmul.f32 %v2136, 1.442695
    %v2156 = vpow.pop %v2155
    %v2157 = vmul.f32 %v2137, 1.442695
    %v2158 = vpow.pop %v2157
    %v2159 = vmul.f32 %v2138, 1.442695
    %v2160 = vpow.pop %v2159
    %v2161 = vmul.f32 %v2139, 1.442695
    %v2162 = vpow.pop %v2161
    %v2163 = vmul.f32 %v2140, 1.442695
    %v2164 = vpow.pop %v2163
    %v2165 = vmul.f32 %v2141, 1.442695
    %v2166 = vpow.pop %v2165
    %v2167 = vmul.f32 %v2142, 1.442695
    %v2168 = vpow.pop %v2167
    %v2169 = vmul.f32 %v2143, 1.442695
    %v2170 = vpow.pop %v2169
    %v2171 = vmul.f32 %v2144, 1.442695
    %v2172 = vpow.pop %v2171
    %v2173 = vmul.f32 %v2145, 1.442695
    %v2174 = vpow.pop %v2173
    %v2175 = vmul.f32 %v2146, 1.442695
    %v2176 = vpow.pop %v2175
    %v2177 = vmul.f32 %v2147, 1.442695
    %v2178 = vpow.pop %v2177
    %v2179 = vmul.f32 %v2148, 1.442695
    %v2180 = vpow.pop %v2179
    %v2181 = vadd.f32 %v2150, %v2152
    %v2182 = vadd.f32 %v2181, %v2154
    %v2183 = vadd.f32 %v2182, %v2156
    %2184 = vadd.xlane.f32.xlu0 %v2183
    %v2185 = vpop.xlane.xlu0 %2184
    %v2186 = vadd.f32 %v2158, %v2160
    %v2187 = vadd.f32 %v2186, %v2162
    %v2188 = vadd.f32 %v2187, %v2164
    %2189 = vadd.xlane.f32.xlu0 %v2188
    %v2190 = vpop.xlane.xlu0 %2189
    %v2191 = vadd.f32 %v2166, %v2168
    %v2192 = vadd.f32 %v2191, %v2170
    %v2193 = vadd.f32 %v2192, %v2172
    %2194 = vadd.xlane.f32.xlu0 %v2193
    %v2195 = vpop.xlane.xlu0 %2194
    %v2196 = vadd.f32 %v2174, %v2176
    %v2197 = vadd.f32 %v2196, %v2178
    %v2198 = vadd.f32 %v2197, %v2180
    %2199 = vadd.xlane.f32.xlu0 %v2198
    %v2200 = vpop.xlane.xlu0 %2199
    %v2201 = vadd.f32 %v1812, %v2185
    %v2202 = vadd.f32 %v1814, %v2190
    %v2203 = vadd.f32 %v1816, %v2195
    %v2204 = vadd.f32 %v1818, %v2200
    %v2205 = vld [vmem:[#allocation10 + $0x10] sm:$0xff]
    %v2206 = vld [vmem:[#allocation10 + $0x18] sm:$0xff]
    %v2207 = vld [vmem:[#allocation10 + $0x90] sm:$0xff]
    %v2208 = vld [vmem:[#allocation10 + $0x98] sm:$0xff]
    %v2209 = vld [vmem:[#allocation10 + $0x110] sm:$0xff]
    %v2210 = vld [vmem:[#allocation10 + $0x118] sm:$0xff]
    %v2211 = vld [vmem:[#allocation10 + $0x190] sm:$0xff]
    %v2212 = vld [vmem:[#allocation10 + $0x198] sm:$0xff]
    %v2213 = vld [vmem:[#allocation10 + $0x210] sm:$0xff]
    %v2214 = vld [vmem:[#allocation10 + $0x218] sm:$0xff]
    %v2215 = vld [vmem:[#allocation10 + $0x290] sm:$0xff]
    %v2216 = vld [vmem:[#allocation10 + $0x298] sm:$0xff]
    %v2217 = vld [vmem:[#allocation10 + $0x310] sm:$0xff]
    %v2218 = vld [vmem:[#allocation10 + $0x318] sm:$0xff]
    %v2219 = vld [vmem:[#allocation10 + $0x390] sm:$0xff]
    %v2220 = vld [vmem:[#allocation10 + $0x398] sm:$0xff]
    %v2221 = vld [vmem:[#allocation10 + $0x410] sm:$0xff]
    %v2222 = vld [vmem:[#allocation10 + $0x418] sm:$0xff]
    %v2223 = vld [vmem:[#allocation10 + $0x490] sm:$0xff]
    %v2224 = vld [vmem:[#allocation10 + $0x498] sm:$0xff]
    %v2225 = vld [vmem:[#allocation10 + $0x510] sm:$0xff]
    %v2226 = vld [vmem:[#allocation10 + $0x518] sm:$0xff]
    %v2227 = vld [vmem:[#allocation10 + $0x590] sm:$0xff]
    %v2228 = vld [vmem:[#allocation10 + $0x598] sm:$0xff]
    %v2229 = vld [vmem:[#allocation10 + $0x610] sm:$0xff]
    %v2230 = vld [vmem:[#allocation10 + $0x618] sm:$0xff]
    %v2231 = vld [vmem:[#allocation10 + $0x690] sm:$0xff]
    %v2232 = vld [vmem:[#allocation10 + $0x698] sm:$0xff]
    %v2233 = vld [vmem:[#allocation10 + $0x710] sm:$0xff]
    %v2234 = vld [vmem:[#allocation10 + $0x718] sm:$0xff]
    %v2235 = vld [vmem:[#allocation10 + $0x790] sm:$0xff]
    %v2236 = vld [vmem:[#allocation10 + $0x798] sm:$0xff]
    %v2269 = vunpack.c.l.b16 %v2205
    %v2270 = vunpack.c.h.b16 %v2205
    %v2271 = vunpack.c.l.b16 %v2206
    %v2272 = vunpack.c.h.b16 %v2206
    %v2273 = vunpack.c.l.b16 %v2207
    %v2274 = vunpack.c.h.b16 %v2207
    %v2275 = vunpack.c.l.b16 %v2208
    %v2276 = vunpack.c.h.b16 %v2208
    %v2277 = vunpack.c.l.b16 %v2209
    %v2278 = vunpack.c.h.b16 %v2209
    %v2279 = vunpack.c.l.b16 %v2210
    %v2280 = vunpack.c.h.b16 %v2210
    %v2281 = vunpack.c.l.b16 %v2211
    %v2282 = vunpack.c.h.b16 %v2211
    %v2283 = vunpack.c.l.b16 %v2212
    %v2284 = vunpack.c.h.b16 %v2212
    %v2285 = vunpack.c.l.b16 %v2213
    %v2286 = vunpack.c.h.b16 %v2213
    %v2287 = vunpack.c.l.b16 %v2214
    %v2288 = vunpack.c.h.b16 %v2214
    %v2289 = vunpack.c.l.b16 %v2215
    %v2290 = vunpack.c.h.b16 %v2215
    %v2291 = vunpack.c.l.b16 %v2216
    %v2292 = vunpack.c.h.b16 %v2216
    %v2293 = vunpack.c.l.b16 %v2217
    %v2294 = vunpack.c.h.b16 %v2217
    %v2295 = vunpack.c.l.b16 %v2218
    %v2296 = vunpack.c.h.b16 %v2218
    %v2297 = vunpack.c.l.b16 %v2219
    %v2298 = vunpack.c.h.b16 %v2219
    %v2299 = vunpack.c.l.b16 %v2220
    %v2300 = vunpack.c.h.b16 %v2220
    %v2301 = vunpack.c.l.b16 %v2221
    %v2302 = vunpack.c.h.b16 %v2221
    %v2303 = vunpack.c.l.b16 %v2222
    %v2304 = vunpack.c.h.b16 %v2222
    %v2305 = vunpack.c.l.b16 %v2223
    %v2306 = vunpack.c.h.b16 %v2223
    %v2307 = vunpack.c.l.b16 %v2224
    %v2308 = vunpack.c.h.b16 %v2224
    %v2309 = vunpack.c.l.b16 %v2225
    %v2310 = vunpack.c.h.b16 %v2225
    %v2311 = vunpack.c.l.b16 %v2226
    %v2312 = vunpack.c.h.b16 %v2226
    %v2313 = vunpack.c.l.b16 %v2227
    %v2314 = vunpack.c.h.b16 %v2227
    %v2315 = vunpack.c.l.b16 %v2228
    %v2316 = vunpack.c.h.b16 %v2228
    %v2317 = vunpack.c.l.b16 %v2229
    %v2318 = vunpack.c.h.b16 %v2229
    %v2319 = vunpack.c.l.b16 %v2230
    %v2320 = vunpack.c.h.b16 %v2230
    %v2321 = vunpack.c.l.b16 %v2231
    %v2322 = vunpack.c.h.b16 %v2231
    %v2323 = vunpack.c.l.b16 %v2232
    %v2324 = vunpack.c.h.b16 %v2232
    %v2325 = vunpack.c.l.b16 %v2233
    %v2326 = vunpack.c.h.b16 %v2233
    %v2327 = vunpack.c.l.b16 %v2234
    %v2328 = vunpack.c.h.b16 %v2234
    %v2329 = vunpack.c.l.b16 %v2235
    %v2330 = vunpack.c.h.b16 %v2235
    %v2331 = vunpack.c.l.b16 %v2236
    %v2332 = vunpack.c.h.b16 %v2236
    %v2333 = vpack.c.b16 %v2273, %v2269
    %v2334 = vpack.c.b16 %v2274, %v2270
    %v2335 = vpack.c.b16 %v2275, %v2271
    %v2336 = vpack.c.b16 %v2276, %v2272
    %v2337 = vpack.c.b16 %v2281, %v2277
    %v2338 = vpack.c.b16 %v2282, %v2278
    %v2339 = vpack.c.b16 %v2283, %v2279
    %v2340 = vpack.c.b16 %v2284, %v2280
    %v2341 = vpack.c.b16 %v2289, %v2285
    %v2342 = vpack.c.b16 %v2290, %v2286
    %v2343 = vpack.c.b16 %v2291, %v2287
    %v2344 = vpack.c.b16 %v2292, %v2288
    %v2345 = vpack.c.b16 %v2297, %v2293
    %v2346 = vpack.c.b16 %v2298, %v2294
    %v2347 = vpack.c.b16 %v2299, %v2295
    %v2348 = vpack.c.b16 %v2300, %v2296
    %v2349 = vpack.c.b16 %v2305, %v2301
    %v2350 = vpack.c.b16 %v2306, %v2302
    %v2351 = vpack.c.b16 %v2307, %v2303
    %v2352 = vpack.c.b16 %v2308, %v2304
    %v2353 = vpack.c.b16 %v2313, %v2309
    %v2354 = vpack.c.b16 %v2314, %v2310
    %v2355 = vpack.c.b16 %v2315, %v2311
    %v2356 = vpack.c.b16 %v2316, %v2312
    %v2357 = vpack.c.b16 %v2321, %v2317
    %v2358 = vpack.c.b16 %v2322, %v2318
    %v2359 = vpack.c.b16 %v2323, %v2319
    %v2360 = vpack.c.b16 %v2324, %v2320
    %v2361 = vpack.c.b16 %v2329, %v2325
    %v2362 = vpack.c.b16 %v2330, %v2326
    %v2363 = vpack.c.b16 %v2331, %v2327
    %v2364 = vpack.c.b16 %v2332, %v2328
    %2397 = vmatprep.subr.bf16.mxu0 %v2334
    %2398 = vmatpush1.bf16.msra.mxu0 %v2333
    %2399 = vmatprep.subr.bf16.mxu0 %v2338
    %2400 = vmatpush1.bf16.msra.mxu0 %v2337
    %2401 = vmatprep.subr.bf16.mxu0 %v2342
    %2402 = vmatpush1.bf16.msra.mxu0 %v2341
    %2403 = vmatprep.subr.bf16.mxu0 %v2346
    %2404 = vmatpush1.bf16.msra.mxu0 %v2345
    %2405 = vmatprep.subr.bf16.mxu0 %v2350
    %2406 = vmatpush1.bf16.msra.mxu0 %v2349
    %2407 = vmatprep.subr.bf16.mxu0 %v2354
    %2408 = vmatpush1.bf16.msra.mxu0 %v2353
    %2409 = vmatprep.subr.bf16.mxu0 %v2358
    %2410 = vmatpush1.bf16.msra.mxu0 %v2357
    %2411 = vmatprep.subr.bf16.mxu0 %v2362
    %2412 = vmatpush1.bf16.msra.mxu0 %v2361
    %2413 = vmatprep.subr.bf16.mxu0 0
    %2414 = vmatpush1.bf16.msra.mxu0 0
    %2415 = vmatprep.subr.bf16.mxu0 0
    %2416 = vmatpush1.bf16.msra.mxu0 0
    %2417 = vmatprep.subr.bf16.mxu0 0
    %2418 = vmatpush1.bf16.msra.mxu0 0
    %2419 = vmatprep.subr.bf16.mxu0 0
    %2420 = vmatpush1.bf16.msra.mxu0 0
    %2421 = vmatprep.subr.bf16.mxu0 0
    %2422 = vmatpush1.bf16.msra.mxu0 0
    %2423 = vmatprep.subr.bf16.mxu0 0
    %2424 = vmatpush1.bf16.msra.mxu0 0
    %2425 = vmatprep.subr.bf16.mxu0 0
    %2426 = vmatpush1.bf16.msra.mxu0 0
    %2427 = vmatprep.subr.bf16.mxu0 0
    %2428 = vmatpush1.bf16.msra.mxu0 0
    %2429 = vmatprep.mubr.bf16.mxu0 0
    %2430 = vmatmul.mubr.bf16.gmra.mrb[0].mxu0 %v1801
    %v2431 = vpop.f32.mrb[0].mxu0
    %v2432 = vadd.f32 0.0, %v2431
    %v2433 = vpop.f32.mrb[0].mxu0
    %v2434 = vadd.f32 0.0, %v2433
    %v2435 = vpop.f32.mrb[0].mxu0
    %v2436 = vadd.f32 0.0, %v2435
    %v2437 = vpop.f32.mrb[0].mxu0
    %v2438 = vadd.f32 0.0, %v2437
    %2439 = vmatprep.mubr.bf16.mxu0 0
    %2440 = vmatmul.mubr.bf16.gmra.mrb[0].mxu0 %v1802
    %v2441 = vpop.f32.mrb[0].mxu0
    %v2442 = vadd.f32 0.0, %v2441
    %v2443 = vpop.f32.mrb[0].mxu0
    %v2444 = vadd.f32 0.0, %v2443
    %v2445 = vpop.f32.mrb[0].mxu0
    %v2446 = vadd.f32 0.0, %v2445
    %v2447 = vpop.f32.mrb[0].mxu0
    %v2448 = vadd.f32 0.0, %v2447
    %2449 = vdwg.mxu0
    %2450 = vmatprep.subr.bf16.mxu0 %v2336
    %2451 = vmatpush1.bf16.msra.mxu0 %v2335
    %2452 = vmatprep.subr.bf16.mxu0 %v2340
    %2453 = vmatpush1.bf16.msra.mxu0 %v2339
    %2454 = vmatprep.subr.bf16.mxu0 %v2344
    %2455 = vmatpush1.bf16.msra.mxu0 %v2343
    %2456 = vmatprep.subr.bf16.mxu0 %v2348
    %2457 = vmatpush1.bf16.msra.mxu0 %v2347
    %2458 = vmatprep.subr.bf16.mxu0 %v2352
    %2459 = vmatpush1.bf16.msra.mxu0 %v2351
    %2460 = vmatprep.subr.bf16.mxu0 %v2356
    %2461 = vmatpush1.bf16.msra.mxu0 %v2355
    %2462 = vmatprep.subr.bf16.mxu0 %v2360
    %2463 = vmatpush1.bf16.msra.mxu0 %v2359
    %2464 = vmatprep.subr.bf16.mxu0 %v2364
    %2465 = vmatpush1.bf16.msra.mxu0 %v2363
    %2466 = vmatprep.subr.bf16.mxu0 0
    %2467 = vmatpush1.bf16.msra.mxu0 0
    %2468 = vmatprep.subr.bf16.mxu0 0
    %2469 = vmatpush1.bf16.msra.mxu0 0
    %2470 = vmatprep.subr.bf16.mxu0 0
    %2471 = vmatpush1.bf16.msra.mxu0 0
    %2472 = vmatprep.subr.bf16.mxu0 0
    %2473 = vmatpush1.bf16.msra.mxu0 0
    %2474 = vmatprep.subr.bf16.mxu0 0
    %2475 = vmatpush1.bf16.msra.mxu0 0
    %2476 = vmatprep.subr.bf16.mxu0 0
    %2477 = vmatpush1.bf16.msra.mxu0 0
    %2478 = vmatprep.subr.bf16.mxu0 0
    %2479 = vmatpush1.bf16.msra.mxu0 0
    %2480 = vmatprep.subr.bf16.mxu0 0
    %2481 = vmatpush1.bf16.msra.mxu0 0
    %2482 = vmatprep.mubr.bf16.mxu0 0
    %2483 = vmatmul.mubr.bf16.gmra.mrb[0].mxu0 %v1801
    %v2484 = vpop.f32.mrb[0].mxu0
    %v2485 = vadd.f32 0.0, %v2484
    %v2486 = vpop.f32.mrb[0].mxu0
    %v2487 = vadd.f32 0.0, %v2486
    %v2488 = vpop.f32.mrb[0].mxu0
    %v2489 = vadd.f32 0.0, %v2488
    %v2490 = vpop.f32.mrb[0].mxu0
    %v2491 = vadd.f32 0.0, %v2490
    %2492 = vmatprep.mubr.bf16.mxu0 0
    %2493 = vmatmul.mubr.bf16.gmra.mrb[0].mxu0 %v1802
    %v2494 = vpop.f32.mrb[0].mxu0
    %v2495 = vadd.f32 0.0, %v2494
    %v2496 = vpop.f32.mrb[0].mxu0
    %v2497 = vadd.f32 0.0, %v2496
    %v2498 = vpop.f32.mrb[0].mxu0
    %v2499 = vadd.f32 0.0, %v2498
    %v2500 = vpop.f32.mrb[0].mxu0
    %v2501 = vadd.f32 0.0, %v2500
    %2502 = vdwg.mxu0
    %v2503 = vsub.f32 %v2432, 1.0
    %v2504 = vsub.f32 %v2434, 1.0
    %v2505 = vsub.f32 %v2485, 1.0
    %v2506 = vsub.f32 %v2487, 1.0
    %v2507 = vsub.f32 %v2436, 1.0
    %v2508 = vsub.f32 %v2438, 1.0
    %v2509 = vsub.f32 %v2489, 1.0
    %v2510 = vsub.f32 %v2491, 1.0
    %v2511 = vsub.f32 %v2442, 1.0
    %v2512 = vsub.f32 %v2444, 1.0
    %v2513 = vsub.f32 %v2495, 1.0
    %v2514 = vsub.f32 %v2497, 1.0
    %v2515 = vsub.f32 %v2446, 1.0
    %v2516 = vsub.f32 %v2448, 1.0
    %v2517 = vsub.f32 %v2499, 1.0
    %v2518 = vsub.f32 %v2501, 1.0
    %v2519 = vmul.f32 %v2503, 10.0
    %v2520 = vmul.f32 %v2504, 10.0
    %v2521 = vmul.f32 %v2505, 10.0
    %v2522 = vmul.f32 %v2506, 10.0
    %v2523 = vmul.f32 %v2507, 10.0
    %v2524 = vmul.f32 %v2508, 10.0
    %v2525 = vmul.f32 %v2509, 10.0
    %v2526 = vmul.f32 %v2510, 10.0
    %v2527 = vmul.f32 %v2511, 10.0
    %v2528 = vmul.f32 %v2512, 10.0
    %v2529 = vmul.f32 %v2513, 10.0
    %v2530 = vmul.f32 %v2514, 10.0
    %v2531 = vmul.f32 %v2515, 10.0
    %v2532 = vmul.f32 %v2516, 10.0
    %v2533 = vmul.f32 %v2517, 10.0
    %v2534 = vmul.f32 %v2518, 10.0
    %v2535 = vmul.f32 %v2519, 1.442695
    %v2536 = vpow.pop %v2535
    %v2537 = vmul.f32 %v2520, 1.442695
    %v2538 = vpow.pop %v2537
    %v2539 = vmul.f32 %v2521, 1.442695
    %v2540 = vpow.pop %v2539
    %v2541 = vmul.f32 %v2522, 1.442695
    %v2542 = vpow.pop %v2541
    %v2543 = vmul.f32 %v2523, 1.442695
    %v2544 = vpow.pop %v2543
    %v2545 = vmul.f32 %v2524, 1.442695
    %v2546 = vpow.pop %v2545
    %v2547 = vmul.f32 %v2525, 1.442695
    %v2548 = vpow.pop %v2547
    %v2549 = vmul.f32 %v2526, 1.442695
    %v2550 = vpow.pop %v2549
    %v2551 = vmul.f32 %v2527, 1.442695
    %v2552 = vpow.pop %v2551
    %v2553 = vmul.f32 %v2528, 1.442695
    %v2554 = vpow.pop %v2553
    %v2555 = vmul.f32 %v2529, 1.442695
    %v2556 = vpow.pop %v2555
    %v2557 = vmul.f32 %v2530, 1.442695
    %v2558 = vpow.pop %v2557
    %v2559 = vmul.f32 %v2531, 1.442695
    %v2560 = vpow.pop %v2559
    %v2561 = vmul.f32 %v2532, 1.442695
    %v2562 = vpow.pop %v2561
    %v2563 = vmul.f32 %v2533, 1.442695
    %v2564 = vpow.pop %v2563
    %v2565 = vmul.f32 %v2534, 1.442695
    %v2566 = vpow.pop %v2565
    %v2567 = vadd.f32 %v2536, %v2538
    %v2568 = vadd.f32 %v2567, %v2540
    %v2569 = vadd.f32 %v2568, %v2542
    %2570 = vadd.xlane.f32.xlu0 %v2569
    %v2571 = vpop.xlane.xlu0 %2570
    %v2572 = vadd.f32 %v2544, %v2546
    %v2573 = vadd.f32 %v2572, %v2548
    %v2574 = vadd.f32 %v2573, %v2550
    %2575 = vadd.xlane.f32.xlu0 %v2574
    %v2576 = vpop.xlane.xlu0 %2575
    %v2577 = vadd.f32 %v2552, %v2554
    %v2578 = vadd.f32 %v2577, %v2556
    %v2579 = vadd.f32 %v2578, %v2558
    %2580 = vadd.xlane.f32.xlu0 %v2579
    %v2581 = vpop.xlane.xlu0 %2580
    %v2582 = vadd.f32 %v2560, %v2562
    %v2583 = vadd.f32 %v2582, %v2564
    %v2584 = vadd.f32 %v2583, %v2566
    %2585 = vadd.xlane.f32.xlu0 %v2584
    %v2586 = vpop.xlane.xlu0 %2585
    %v2587 = vadd.f32 %v2201, %v2571
    %v2588 = vadd.f32 %v2202, %v2576
    %v2589 = vadd.f32 %v2203, %v2581
    %v2590 = vadd.f32 %v2204, %v2586
    %v2591 = vld [vmem:[#allocation10 + $0x20] sm:$0xff]
    %v2592 = vld [vmem:[#allocation10 + $0x28] sm:$0xff]
    %v2593 = vld [vmem:[#allocation10 + $0xa0] sm:$0xff]
    %v2594 = vld [vmem:[#allocation10 + $0xa8] sm:$0xff]
    %v2595 = vld [vmem:[#allocation10 + $0x120] sm:$0xff]
    %v2596 = vld [vmem:[#allocation10 + $0x128] sm:$0xff]
    %v2597 = vld [vmem:[#allocation10 + $0x1a0] sm:$0xff]
    %v2598 = vld [vmem:[#allocation10 + $0x1a8] sm:$0xff]
    %v2599 = vld [vmem:[#allocation10 + $0x220] sm:$0xff]
    %v2600 = vld [vmem:[#allocation10 + $0x228] sm:$0xff]
    %v2601 = vld [vmem:[#allocation10 + $0x2a0] sm:$0xff]
    %v2602 = vld [vmem:[#allocation10 + $0x2a8] sm:$0xff]
    %v2603 = vld [vmem:[#allocation10 + $0x320] sm:$0xff]
    %v2604 = vld [vmem:[#allocation10 + $0x328] sm:$0xff]
    %v2605 = vld [vmem:[#allocation10 + $0x3a0] sm:$0xff]
    %v2606 = vld [vmem:[#allocation10 + $0x3a8] sm:$0xff]
    %v2607 = vld [vmem:[#allocation10 + $0x420] sm:$0xff]
    %v2608 = vld [vmem:[#allocation10 + $0x428] sm:$0xff]
    %v2609 = vld [vmem:[#allocation10 + $0x4a0] sm:$0xff]
    %v2610 = vld [vmem:[#allocation10 + $0x4a8] sm:$0xff]
    %v2611 = vld [vmem:[#allocation10 + $0x520] sm:$0xff]
    %v2612 = vld [vmem:[#allocation10 + $0x528] sm:$0xff]
    %v2613 = vld [vmem:[#allocation10 + $0x5a0] sm:$0xff]
    %v2614 = vld [vmem:[#allocation10 + $0x5a8] sm:$0xff]
    %v2615 = vld [vmem:[#allocation10 + $0x620] sm:$0xff]
    %v2616 = vld [vmem:[#allocation10 + $0x628] sm:$0xff]
    %v2617 = vld [vmem:[#allocation10 + $0x6a0] sm:$0xff]
    %v2618 = vld [vmem:[#allocation10 + $0x6a8] sm:$0xff]
    %v2619 = vld [vmem:[#allocation10 + $0x720] sm:$0xff]
    %v2620 = vld [vmem:[#allocation10 + $0x728] sm:$0xff]
    %v2621 = vld [vmem:[#allocation10 + $0x7a0] sm:$0xff]
    %v2622 = vld [vmem:[#allocation10 + $0x7a8] sm:$0xff]
    %v2655 = vunpack.c.l.b16 %v2591
    %v2656 = vunpack.c.h.b16 %v2591
    %v2657 = vunpack.c.l.b16 %v2592
    %v2658 = vunpack.c.h.b16 %v2592
    %v2659 = vunpack.c.l.b16 %v2593
    %v2660 = vunpack.c.h.b16 %v2593
    %v2661 = vunpack.c.l.b16 %v2594
    %v2662 = vunpack.c.h.b16 %v2594
    %v2663 = vunpack.c.l.b16 %v2595
    %v2664 = vunpack.c.h.b16 %v2595
    %v2665 = vunpack.c.l.b16 %v2596
    %v2666 = vunpack.c.h.b16 %v2596
    %v2667 = vunpack.c.l.b16 %v2597
    %v2668 = vunpack.c.h.b16 %v2597
    %v2669 = vunpack.c.l.b16 %v2598
    %v2670 = vunpack.c.h.b16 %v2598
    %v2671 = vunpack.c.l.b16 %v2599
    %v2672 = vunpack.c.h.b16 %v2599
    %v2673 = vunpack.c.l.b16 %v2600
    %v2674 = vunpack.c.h.b16 %v2600
    %v2675 = vunpack.c.l.b16 %v2601
    %v2676 = vunpack.c.h.b16 %v2601
    %v2677 = vunpack.c.l.b16 %v2602
    %v2678 = vunpack.c.h.b16 %v2602
    %v2679 = vunpack.c.l.b16 %v2603
    %v2680 = vunpack.c.h.b16 %v2603
    %v2681 = vunpack.c.l.b16 %v2604
    %v2682 = vunpack.c.h.b16 %v2604
    %v2683 = vunpack.c.l.b16 %v2605
    %v2684 = vunpack.c.h.b16 %v2605
    %v2685 = vunpack.c.l.b16 %v2606
    %v2686 = vunpack.c.h.b16 %v2606
    %v2687 = vunpack.c.l.b16 %v2607
    %v2688 = vunpack.c.h.b16 %v2607
    %v2689 = vunpack.c.l.b16 %v2608
    %v2690 = vunpack.c.h.b16 %v2608
    %v2691 = vunpack.c.l.b16 %v2609
    %v2692 = vunpack.c.h.b16 %v2609
    %v2693 = vunpack.c.l.b16 %v2610
    %v2694 = vunpack.c.h.b16 %v2610
    %v2695 = vunpack.c.l.b16 %v2611
    %v2696 = vunpack.c.h.b16 %v2611
    %v2697 = vunpack.c.l.b16 %v2612
    %v2698 = vunpack.c.h.b16 %v2612
    %v2699 = vunpack.c.l.b16 %v2613
    %v2700 = vunpack.c.h.b16 %v2613
    %v2701 = vunpack.c.l.b16 %v2614
    %v2702 = vunpack.c.h.b16 %v2614
    %v2703 = vunpack.c.l.b16 %v2615
    %v2704 = vunpack.c.h.b16 %v2615
    %v2705 = vunpack.c.l.b16 %v2616
    %v2706 = vunpack.c.h.b16 %v2616
    %v2707 = vunpack.c.l.b16 %v2617
    %v2708 = vunpack.c.h.b16 %v2617
    %v2709 = vunpack.c.l.b16 %v2618
    %v2710 = vunpack.c.h.b16 %v2618
    %v2711 = vunpack.c.l.b16 %v2619
    %v2712 = vunpack.c.h.b16 %v2619
    %v2713 = vunpack.c.l.b16 %v2620
    %v2714 = vunpack.c.h.b16 %v2620
    %v2715 = vunpack.c.l.b16 %v2621
    %v2716 = vunpack.c.h.b16 %v2621
    %v2717 = vunpack.c.l.b16 %v2622
    %v2718 = vunpack.c.h.b16 %v2622
    %v2719 = vpack.c.b16 %v2659, %v2655
    %v2720 = vpack.c.b16 %v2660, %v2656
    %v2721 = vpack.c.b16 %v2661, %v2657
    %v2722 = vpack.c.b16 %v2662, %v2658
    %v2723 = vpack.c.b16 %v2667, %v2663
    %v2724 = vpack.c.b16 %v2668, %v2664
    %v2725 = vpack.c.b16 %v2669, %v2665
    %v2726 = vpack.c.b16 %v2670, %v2666
    %v2727 = vpack.c.b16 %v2675, %v2671
    %v2728 = vpack.c.b16 %v2676, %v2672
    %v2729 = vpack.c.b16 %v2677, %v2673
    %v2730 = vpack.c.b16 %v2678, %v2674
    %v2731 = vpack.c.b16 %v2683, %v2679
    %v2732 = vpack.c.b16 %v2684, %v2680
    %v2733 = vpack.c.b16 %v2685, %v2681
    %v2734 = vpack.c.b16 %v2686, %v2682
    %v2735 = vpack.c.b16 %v2691, %v2687
    %v2736 = vpack.c.b16 %v2692, %v2688
    %v2737 = vpack.c.b16 %v2693, %v2689
    %v2738 = vpack.c.b16 %v2694, %v2690
    %v2739 = vpack.c.b16 %v2699, %v2695
    %v2740 = vpack.c.b16 %v2700, %v2696
    %v2741 = vpack.c.b16 %v2701, %v2697
    %v2742 = vpack.c.b16 %v2702, %v2698
    %v2743 = vpack.c.b16 %v2707, %v2703
    %v2744 = vpack.c.b16 %v2708, %v2704
    %v2745 = vpack.c.b16 %v2709, %v2705
    %v2746 = vpack.c.b16 %v2710, %v2706
    %v2747 = vpack.c.b16 %v2715, %v2711
    %v2748 = vpack.c.b16 %v2716, %v2712
    %v2749 = vpack.c.b16 %v2717, %v2713
    %v2750 = vpack.c.b16 %v2718, %v2714
    %2783 = vmatprep.subr.bf16.mxu0 %v2720
    %2784 = vmatpush1.bf16.msra.mxu0 %v2719
    %2785 = vmatprep.subr.bf16.mxu0 %v2724
    %2786 = vmatpush1.bf16.msra.mxu0 %v2723
    %2787 = vmatprep.subr.bf16.mxu0 %v2728
    %2788 = vmatpush1.bf16.msra.mxu0 %v2727
    %2789 = vmatprep.subr.bf16.mxu0 %v2732
    %2790 = vmatpush1.bf16.msra.mxu0 %v2731
    %2791 = vmatprep.subr.bf16.mxu0 %v2736
    %2792 = vmatpush1.bf16.msra.mxu0 %v2735
    %2793 = vmatprep.subr.bf16.mxu0 %v2740
    %2794 = vmatpush1.bf16.msra.mxu0 %v2739
    %2795 = vmatprep.subr.bf16.mxu0 %v2744
    %2796 = vmatpush1.bf16.msra.mxu0 %v2743
    %2797 = vmatprep.subr.bf16.mxu0 %v2748
    %2798 = vmatpush1.bf16.msra.mxu0 %v2747
    %2799 = vmatprep.subr.bf16.mxu0 0
    %2800 = vmatpush1.bf16.msra.mxu0 0
    %2801 = vmatprep.subr.bf16.mxu0 0
    %2802 = vmatpush1.bf16.msra.mxu0 0
    %2803 = vmatprep.subr.bf16.mxu0 0
    %2804 = vmatpush1.bf16.msra.mxu0 0
    %2805 = vmatprep.subr.bf16.mxu0 0
    %2806 = vmatpush1.bf16.msra.mxu0 0
    %2807 = vmatprep.subr.bf16.mxu0 0
    %2808 = vmatpush1.bf16.msra.mxu0 0
    %2809 = vmatprep.subr.bf16.mxu0 0
    %2810 = vmatpush1.bf16.msra.mxu0 0
    %2811 = vmatprep.subr.bf16.mxu0 0
    %2812 = vmatpush1.bf16.msra.mxu0 0
    %2813 = vmatprep.subr.bf16.mxu0 0
    %2814 = vmatpush1.bf16.msra.mxu0 0
    %2815 = vmatprep.mubr.bf16.mxu0 0
    %2816 = vmatmul.mubr.bf16.gmra.mrb[0].mxu0 %v1801
    %v2817 = vpop.f32.mrb[0].mxu0
    %v2818 = vadd.f32 0.0, %v2817
    %v2819 = vpop.f32.mrb[0].mxu0
    %v2820 = vadd.f32 0.0, %v2819
    %v2821 = vpop.f32.mrb[0].mxu0
    %v2822 = vadd.f32 0.0, %v2821
    %v2823 = vpop.f32.mrb[0].mxu0
    %v2824 = vadd.f32 0.0, %v2823
    %2825 = vmatprep.mubr.bf16.mxu0 0
    %2826 = vmatmul.mubr.bf16.gmra.mrb[0].mxu0 %v1802
    %v2827 = vpop.f32.mrb[0].mxu0
    %v2828 = vadd.f32 0.0, %v2827
    %v2829 = vpop.f32.mrb[0].mxu0
    %v2830 = vadd.f32 0.0, %v2829
    %v2831 = vpop.f32.mrb[0].mxu0
    %v2832 = vadd.f32 0.0, %v2831
    %v2833 = vpop.f32.mrb[0].mxu0
    %v2834 = vadd.f32 0.0, %v2833
    %2835 = vdwg.mxu0
    %2836 = vmatprep.subr.bf16.mxu0 %v2722
    %2837 = vmatpush1.bf16.msra.mxu0 %v2721
    %2838 = vmatprep.subr.bf16.mxu0 %v2726
    %2839 = vmatpush1.bf16.msra.mxu0 %v2725
    %2840 = vmatprep.subr.bf16.mxu0 %v2730
    %2841 = vmatpush1.bf16.msra.mxu0 %v2729
    %2842 = vmatprep.subr.bf16.mxu0 %v2734
    %2843 = vmatpush1.bf16.msra.mxu0 %v2733
    %2844 = vmatprep.subr.bf16.mxu0 %v2738
    %2845 = vmatpush1.bf16.msra.mxu0 %v2737
    %2846 = vmatprep.subr.bf16.mxu0 %v2742
    %2847 = vmatpush1.bf16.msra.mxu0 %v2741
    %2848 = vmatprep.subr.bf16.mxu0 %v2746
    %2849 = vmatpush1.bf16.msra.mxu0 %v2745
    %2850 = vmatprep.subr.bf16.mxu0 %v2750
    %2851 = vmatpush1.bf16.msra.mxu0 %v2749
    %2852 = vmatprep.subr.bf16.mxu0 0
    %2853 = vmatpush1.bf16.msra.mxu0 0
    %2854 = vmatprep.subr.bf16.mxu0 0
    %2855 = vmatpush1.bf16.msra.mxu0 0
    %2856 = vmatprep.subr.bf16.mxu0 0
    %2857 = vmatpush1.bf16.msra.mxu0 0
    %2858 = vmatprep.subr.bf16.mxu0 0
    %2859 = vmatpush1.bf16.msra.mxu0 0
    %2860 = vmatprep.subr.bf16.mxu0 0
    %2861 = vmatpush1.bf16.msra.mxu0 0
    %2862 = vmatprep.subr.bf16.mxu0 0
    %2863 = vmatpush1.bf16.msra.mxu0 0
    %2864 = vmatprep.subr.bf16.mxu0 0
    %2865 = vmatpush1.bf16.msra.mxu0 0
    %2866 = vmatprep.subr.bf16.mxu0 0
    %2867 = vmatpush1.bf16.msra.mxu0 0
    %2868 = vmatprep.mubr.bf16.mxu0 0
    %2869 = vmatmul.mubr.bf16.gmra.mrb[0].mxu0 %v1801
    %v2870 = vpop.f32.mrb[0].mxu0
    %v2871 = vadd.f32 0.0, %v2870
    %v2872 = vpop.f32.mrb[0].mxu0
    %v2873 = vadd.f32 0.0, %v2872
    %v2874 = vpop.f32.mrb[0].mxu0
    %v2875 = vadd.f32 0.0, %v2874
    %v2876 = vpop.f32.mrb[0].mxu0
    %v2877 = vadd.f32 0.0, %v2876
    %2878 = vmatprep.mubr.bf16.mxu0 0
    %2879 = vmatmul.mubr.bf16.gmra.mrb[0].mxu0 %v1802
    %v2880 = vpop.f32.mrb[0].mxu0
    %v2881 = vadd.f32 0.0, %v2880
    %v2882 = vpop.f32.mrb[0].mxu0
    %v2883 = vadd.f32 0.0, %v2882
    %v2884 = vpop.f32.mrb[0].mxu0
    %v2885 = vadd.f32 0.0, %v2884
    %v2886 = vpop.f32.mrb[0].mxu0
    %v2887 = vadd.f32 0.0, %v2886
    %2888 = vdwg.mxu0
    %v2889 = vsub.f32 %v2818, 1.0
    %v2890 = vsub.f32 %v2820, 1.0
    %v2891 = vsub.f32 %v2871, 1.0
    %v2892 = vsub.f32 %v2873, 1.0
    %v2893 = vsub.f32 %v2822, 1.0
    %v2894 = vsub.f32 %v2824, 1.0
    %v2895 = vsub.f32 %v2875, 1.0
    %v2896 = vsub.f32 %v2877, 1.0
    %v2897 = vsub.f32 %v2828, 1.0
    %v2898 = vsub.f32 %v2830, 1.0
    %v2899 = vsub.f32 %v2881, 1.0
    %v2900 = vsub.f32 %v2883, 1.0
    %v2901 = vsub.f32 %v2832, 1.0
    %v2902 = vsub.f32 %v2834, 1.0
    %v2903 = vsub.f32 %v2885, 1.0
    %v2904 = vsub.f32 %v2887, 1.0
    %v2905 = vmul.f32 %v2889, 10.0
    %v2906 = vmul.f32 %v2890, 10.0
    %v2907 = vmul.f32 %v2891, 10.0
    %v2908 = vmul.f32 %v2892, 10.0
    %v2909 = vmul.f32 %v2893, 10.0
    %v2910 = vmul.f32 %v2894, 10.0
    %v2911 = vmul.f32 %v2895, 10.0
    %v2912 = vmul.f32 %v2896, 10.0
    %v2913 = vmul.f32 %v2897, 10.0
    %v2914 = vmul.f32 %v2898, 10.0
    %v2915 = vmul.f32 %v2899, 10.0
    %v2916 = vmul.f32 %v2900, 10.0
    %v2917 = vmul.f32 %v2901, 10.0
    %v2918 = vmul.f32 %v2902, 10.0
    %v2919 = vmul.f32 %v2903, 10.0
    %v2920 = vmul.f32 %v2904, 10.0
    %v2921 = vmul.f32 %v2905, 1.442695
    %v2922 = vpow.pop %v2921
    %v2923 = vmul.f32 %v2906, 1.442695
    %v2924 = vpow.pop %v2923
    %v2925 = vmul.f32 %v2907, 1.442695
    %v2926 = vpow.pop %v2925
    %v2927 = vmul.f32 %v2908, 1.442695
    %v2928 = vpow.pop %v2927
    %v2929 = vmul.f32 %v2909, 1.442695
    %v2930 = vpow.pop %v2929
    %v2931 = vmul.f32 %v2910, 1.442695
    %v2932 = vpow.pop %v2931
    %v2933 = vmul.f32 %v2911, 1.442695
    %v2934 = vpow.pop %v2933
    %v2935 = vmul.f32 %v2912, 1.442695
    %v2936 = vpow.pop %v2935
    %v2937 = vmul.f32 %v2913, 1.442695
    %v2938 = vpow.pop %v2937
    %v2939 = vmul.f32 %v2914, 1.442695
    %v2940 = vpow.pop %v2939
    %v2941 = vmul.f32 %v2915, 1.442695
    %v2942 = vpow.pop %v2941
    %v2943 = vmul.f32 %v2916, 1.442695
    %v2944 = vpow.pop %v2943
    %v2945 = vmul.f32 %v2917, 1.442695
    %v2946 = vpow.pop %v2945
    %v2947 = vmul.f32 %v2918, 1.442695
    %v2948 = vpow.pop %v2947
    %v2949 = vmul.f32 %v2919, 1.442695
    %v2950 = vpow.pop %v2949
    %v2951 = vmul.f32 %v2920, 1.442695
    %v2952 = vpow.pop %v2951
    %v2953 = vadd.f32 %v2922, %v2924
    %v2954 = vadd.f32 %v2953, %v2926
    %v2955 = vadd.f32 %v2954, %v2928
    %2956 = vadd.xlane.f32.xlu0 %v2955
    %v2957 = vpop.xlane.xlu0 %2956
    %v2958 = vadd.f32 %v2930, %v2932
    %v2959 = vadd.f32 %v2958, %v2934
    %v2960 = vadd.f32 %v2959, %v2936
    %2961 = vadd.xlane.f32.xlu0 %v2960
    %v2962 = vpop.xlane.xlu0 %2961
    %v2963 = vadd.f32 %v2938, %v2940
    %v2964 = vadd.f32 %v2963, %v2942
    %v2965 = vadd.f32 %v2964, %v2944
    %2966 = vadd.xlane.f32.xlu0 %v2965
    %v2967 = vpop.xlane.xlu0 %2966
    %v2968 = vadd.f32 %v2946, %v2948
    %v2969 = vadd.f32 %v2968, %v2950
    %v2970 = vadd.f32 %v2969, %v2952
    %2971 = vadd.xlane.f32.xlu0 %v2970
    %v2972 = vpop.xlane.xlu0 %2971
    %v2973 = vadd.f32 %v2587, %v2957
    %v2974 = vadd.f32 %v2588, %v2962
    %v2975 = vadd.f32 %v2589, %v2967
    %v2976 = vadd.f32 %v2590, %v2972
    %v2977 = vld [vmem:[#allocation10 + $0x30] sm:$0xff]
    %v2978 = vld [vmem:[#allocation10 + $0x38] sm:$0xff]
    %v2979 = vld [vmem:[#allocation10 + $0xb0] sm:$0xff]
    %v2980 = vld [vmem:[#allocation10 + $0xb8] sm:$0xff]
    %v2981 = vld [vmem:[#allocation10 + $0x130] sm:$0xff]
    %v2982 = vld [vmem:[#allocation10 + $0x138] sm:$0xff]
    %v2983 = vld [vmem:[#allocation10 + $0x1b0] sm:$0xff]
    %v2984 = vld [vmem:[#allocation10 + $0x1b8] sm:$0xff]
    %v2985 = vld [vmem:[#allocation10 + $0x230] sm:$0xff]
    %v2986 = vld [vmem:[#allocation10 + $0x238] sm:$0xff]
    %v2987 = vld [vmem:[#allocation10 + $0x2b0] sm:$0xff]
    %v2988 = vld [vmem:[#allocation10 + $0x2b8] sm:$0xff]
    %v2989 = vld [vmem:[#allocation10 + $0x330] sm:$0xff]
    %v2990 = vld [vmem:[#allocation10 + $0x338] sm:$0xff]
    %v2991 = vld [vmem:[#allocation10 + $0x3b0] sm:$0xff]
    %v2992 = vld [vmem:[#allocation10 + $0x3b8] sm:$0xff]
    %v2993 = vld [vmem:[#allocation10 + $0x430] sm:$0xff]
    %v2994 = vld [vmem:[#allocation10 + $0x438] sm:$0xff]
    %v2995 = vld [vmem:[#allocation10 + $0x4b0] sm:$0xff]
    %v2996 = vld [vmem:[#allocation10 + $0x4b8] sm:$0xff]
    %v2997 = vld [vmem:[#allocation10 + $0x530] sm:$0xff]
    %v2998 = vld [vmem:[#allocation10 + $0x538] sm:$0xff]
    %v2999 = vld [vmem:[#allocation10 + $0x5b0] sm:$0xff]
    %v3000 = vld [vmem:[#allocation10 + $0x5b8] sm:$0xff]
    %v3001 = vld [vmem:[#allocation10 + $0x630] sm:$0xff]
    %v3002 = vld [vmem:[#allocation10 + $0x638] sm:$0xff]
    %v3003 = vld [vmem:[#allocation10 + $0x6b0] sm:$0xff]
    %v3004 = vld [vmem:[#allocation10 + $0x6b8] sm:$0xff]
    %v3005 = vld [vmem:[#allocation10 + $0x730] sm:$0xff]
    %v3006 = vld [vmem:[#allocation10 + $0x738] sm:$0xff]
    %v3007 = vld [vmem:[#allocation10 + $0x7b0] sm:$0xff]
    %v3008 = vld [vmem:[#allocation10 + $0x7b8] sm:$0xff]
    %v3041 = vunpack.c.l.b16 %v2977
    %v3042 = vunpack.c.h.b16 %v2977
    %v3043 = vunpack.c.l.b16 %v2978
    %v3044 = vunpack.c.h.b16 %v2978
    %v3045 = vunpack.c.l.b16 %v2979
    %v3046 = vunpack.c.h.b16 %v2979
    %v3047 = vunpack.c.l.b16 %v2980
    %v3048 = vunpack.c.h.b16 %v2980
    %v3049 = vunpack.c.l.b16 %v2981
    %v3050 = vunpack.c.h.b16 %v2981
    %v3051 = vunpack.c.l.b16 %v2982
    %v3052 = vunpack.c.h.b16 %v2982
    %v3053 = vunpack.c.l.b16 %v2983
    %v3054 = vunpack.c.h.b16 %v2983
    %v3055 = vunpack.c.l.b16 %v2984
    %v3056 = vunpack.c.h.b16 %v2984
    %v3057 = vunpack.c.l.b16 %v2985
    %v3058 = vunpack.c.h.b16 %v2985
    %v3059 = vunpack.c.l.b16 %v2986
    %v3060 = vunpack.c.h.b16 %v2986
    %v3061 = vunpack.c.l.b16 %v2987
    %v3062 = vunpack.c.h.b16 %v2987
    %v3063 = vunpack.c.l.b16 %v2988
    %v3064 = vunpack.c.h.b16 %v2988
    %v3065 = vunpack.c.l.b16 %v2989
    %v3066 = vunpack.c.h.b16 %v2989
    %v3067 = vunpack.c.l.b16 %v2990
    %v3068 = vunpack.c.h.b16 %v2990
    %v3069 = vunpack.c.l.b16 %v2991
    %v3070 = vunpack.c.h.b16 %v2991
    %v3071 = vunpack.c.l.b16 %v2992
    %v3072 = vunpack.c.h.b16 %v2992
    %v3073 = vunpack.c.l.b16 %v2993
    %v3074 = vunpack.c.h.b16 %v2993
    %v3075 = vunpack.c.l.b16 %v2994
    %v3076 = vunpack.c.h.b16 %v2994
    %v3077 = vunpack.c.l.b16 %v2995
    %v3078 = vunpack.c.h.b16 %v2995
    %v3079 = vunpack.c.l.b16 %v2996
    %v3080 = vunpack.c.h.b16 %v2996
    %v3081 = vunpack.c.l.b16 %v2997
    %v3082 = vunpack.c.h.b16 %v2997
    %v3083 = vunpack.c.l.b16 %v2998
    %v3084 = vunpack.c.h.b16 %v2998
    %v3085 = vunpack.c.l.b16 %v2999
    %v3086 = vunpack.c.h.b16 %v2999
    %v3087 = vunpack.c.l.b16 %v3000
    %v3088 = vunpack.c.h.b16 %v3000
    %v3089 = vunpack.c.l.b16 %v3001
    %v3090 = vunpack.c.h.b16 %v3001
    %v3091 = vunpack.c.l.b16 %v3002
    %v3092 = vunpack.c.h.b16 %v3002
    %v3093 = vunpack.c.l.b16 %v3003
    %v3094 = vunpack.c.h.b16 %v3003
    %v3095 = vunpack.c.l.b16 %v3004
    %v3096 = vunpack.c.h.b16 %v3004
    %v3097 = vunpack.c.l.b16 %v3005
    %v3098 = vunpack.c.h.b16 %v3005
    %v3099 = vunpack.c.l.b16 %v3006
    %v3100 = vunpack.c.h.b16 %v3006
    %v3101 = vunpack.c.l.b16 %v3007
    %v3102 = vunpack.c.h.b16 %v3007
    %v3103 = vunpack.c.l.b16 %v3008
    %v3104 = vunpack.c.h.b16 %v3008
    %v3105 = vpack.c.b16 %v3045, %v3041
    %v3106 = vpack.c.b16 %v3046, %v3042
    %v3107 = vpack.c.b16 %v3047, %v3043
    %v3108 = vpack.c.b16 %v3048, %v3044
    %v3109 = vpack.c.b16 %v3053, %v3049
    %v3110 = vpack.c.b16 %v3054, %v3050
    %v3111 = vpack.c.b16 %v3055, %v3051
    %v3112 = vpack.c.b16 %v3056, %v3052
    %v3113 = vpack.c.b16 %v3061, %v3057
    %v3114 = vpack.c.b16 %v3062, %v3058
    %v3115 = vpack.c.b16 %v3063, %v3059
    %v3116 = vpack.c.b16 %v3064, %v3060
    %v3117 = vpack.c.b16 %v3069, %v3065
    %v3118 = vpack.c.b16 %v3070, %v3066
    %v3119 = vpack.c.b16 %v3071, %v3067
    %v3120 = vpack.c.b16 %v3072, %v3068
    %v3121 = vpack.c.b16 %v3077, %v3073
    %v3122 = vpack.c.b16 %v3078, %v3074
    %v3123 = vpack.c.b16 %v3079, %v3075
    %v3124 = vpack.c.b16 %v3080, %v3076
    %v3125 = vpack.c.b16 %v3085, %v3081
    %v3126 = vpack.c.b16 %v3086, %v3082
    %v3127 = vpack.c.b16 %v3087, %v3083
    %v3128 = vpack.c.b16 %v3088, %v3084
    %v3129 = vpack.c.b16 %v3093, %v3089
    %v3130 = vpack.c.b16 %v3094, %v3090
    %v3131 = vpack.c.b16 %v3095, %v3091
    %v3132 = vpack.c.b16 %v3096, %v3092
    %v3133 = vpack.c.b16 %v3101, %v3097
    %v3134 = vpack.c.b16 %v3102, %v3098
    %v3135 = vpack.c.b16 %v3103, %v3099
    %v3136 = vpack.c.b16 %v3104, %v3100
    %3169 = vmatprep.subr.bf16.mxu0 %v3106
    %3170 = vmatpush1.bf16.msra.mxu0 %v3105
    %3171 = vmatprep.subr.bf16.mxu0 %v3110
    %3172 = vmatpush1.bf16.msra.mxu0 %v3109
    %3173 = vmatprep.subr.bf16.mxu0 %v3114
    %3174 = vmatpush1.bf16.msra.mxu0 %v3113
    %3175 = vmatprep.subr.bf16.mxu0 %v3118
    %3176 = vmatpush1.bf16.msra.mxu0 %v3117
    %3177 = vmatprep.subr.bf16.mxu0 %v3122
    %3178 = vmatpush1.bf16.msra.mxu0 %v3121
    %3179 = vmatprep.subr.bf16.mxu0 %v3126
    %3180 = vmatpush1.bf16.msra.mxu0 %v3125
    %3181 = vmatprep.subr.bf16.mxu0 %v3130
    %3182 = vmatpush1.bf16.msra.mxu0 %v3129
    %3183 = vmatprep.subr.bf16.mxu0 %v3134
    %3184 = vmatpush1.bf16.msra.mxu0 %v3133
    %3185 = vmatprep.subr.bf16.mxu0 0
    %3186 = vmatpush1.bf16.msra.mxu0 0
    %3187 = vmatprep.subr.bf16.mxu0 0
    %3188 = vmatpush1.bf16.msra.mxu0 0
    %3189 = vmatprep.subr.bf16.mxu0 0
    %3190 = vmatpush1.bf16.msra.mxu0 0
    %3191 = vmatprep.subr.bf16.mxu0 0
    %3192 = vmatpush1.bf16.msra.mxu0 0
    %3193 = vmatprep.subr.bf16.mxu0 0
    %3194 = vmatpush1.bf16.msra.mxu0 0
    %3195 = vmatprep.subr.bf16.mxu0 0
    %3196 = vmatpush1.bf16.msra.mxu0 0
    %3197 = vmatprep.subr.bf16.mxu0 0
    %3198 = vmatpush1.bf16.msra.mxu0 0
    %3199 = vmatprep.subr.bf16.mxu0 0
    %3200 = vmatpush1.bf16.msra.mxu0 0
    %3201 = vmatprep.mubr.bf16.mxu0 0
    %3202 = vmatmul.mubr.bf16.gmra.mrb[0].mxu0 %v1801
    %v3203 = vpop.f32.mrb[0].mxu0
    %v3204 = vadd.f32 0.0, %v3203
    %v3205 = vpop.f32.mrb[0].mxu0
    %v3206 = vadd.f32 0.0, %v3205
    %v3207 = vpop.f32.mrb[0].mxu0
    %v3208 = vadd.f32 0.0, %v3207
    %v3209 = vpop.f32.mrb[0].mxu0
    %v3210 = vadd.f32 0.0, %v3209
    %3211 = vmatprep.mubr.bf16.mxu0 0
    %3212 = vmatmul.mubr.bf16.gmra.mrb[0].mxu0 %v1802
    %v3213 = vpop.f32.mrb[0].mxu0
    %v3214 = vadd.f32 0.0, %v3213
    %v3215 = vpop.f32.mrb[0].mxu0
    %v3216 = vadd.f32 0.0, %v3215
    %v3217 = vpop.f32.mrb[0].mxu0
    %v3218 = vadd.f32 0.0, %v3217
    %v3219 = vpop.f32.mrb[0].mxu0
    %v3220 = vadd.f32 0.0, %v3219
    %3221 = vdwg.mxu0
    %3222 = vmatprep.subr.bf16.mxu0 %v3108
    %3223 = vmatpush1.bf16.msra.mxu0 %v3107
    %3224 = vmatprep.subr.bf16.mxu0 %v3112
    %3225 = vmatpush1.bf16.msra.mxu0 %v3111
    %3226 = vmatprep.subr.bf16.mxu0 %v3116
    %3227 = vmatpush1.bf16.msra.mxu0 %v3115
    %3228 = vmatprep.subr.bf16.mxu0 %v3120
    %3229 = vmatpush1.bf16.msra.mxu0 %v3119
    %3230 = vmatprep.subr.bf16.mxu0 %v3124
    %3231 = vmatpush1.bf16.msra.mxu0 %v3123
    %3232 = vmatprep.subr.bf16.mxu0 %v3128
    %3233 = vmatpush1.bf16.msra.mxu0 %v3127
    %3234 = vmatprep.subr.bf16.mxu0 %v3132
    %3235 = vmatpush1.bf16.msra.mxu0 %v3131
    %3236 = vmatprep.subr.bf16.mxu0 %v3136
    %3237 = vmatpush1.bf16.msra.mxu0 %v3135
    %3238 = vmatprep.subr.bf16.mxu0 0
    %3239 = vmatpush1.bf16.msra.mxu0 0
    %3240 = vmatprep.subr.bf16.mxu0 0
    %3241 = vmatpush1.bf16.msra.mxu0 0
    %3242 = vmatprep.subr.bf16.mxu0 0
    %3243 = vmatpush1.bf16.msra.mxu0 0
    %3244 = vmatprep.subr.bf16.mxu0 0
    %3245 = vmatpush1.bf16.msra.mxu0 0
    %3246 = vmatprep.subr.bf16.mxu0 0
    %3247 = vmatpush1.bf16.msra.mxu0 0
    %3248 = vmatprep.subr.bf16.mxu0 0
    %3249 = vmatpush1.bf16.msra.mxu0 0
    %3250 = vmatprep.subr.bf16.mxu0 0
    %3251 = vmatpush1.bf16.msra.mxu0 0
    %3252 = vmatprep.subr.bf16.mxu0 0
    %3253 = vmatpush1.bf16.msra.mxu0 0
    %3254 = vmatprep.mubr.bf16.mxu0 0
    %3255 = vmatmul.mubr.bf16.gmra.mrb[0].mxu0 %v1801
    %v3256 = vpop.f32.mrb[0].mxu0
    %v3257 = vadd.f32 0.0, %v3256
    %v3258 = vpop.f32.mrb[0].mxu0
    %v3259 = vadd.f32 0.0, %v3258
    %v3260 = vpop.f32.mrb[0].mxu0
    %v3261 = vadd.f32 0.0, %v3260
    %v3262 = vpop.f32.mrb[0].mxu0
    %v3263 = vadd.f32 0.0, %v3262
    %3264 = vmatprep.mubr.bf16.mxu0 0
    %3265 = vmatmul.mubr.bf16.gmra.mrb[0].mxu0 %v1802
    %v3266 = vpop.f32.mrb[0].mxu0
    %v3267 = vadd.f32 0.0, %v3266
    %v3268 = vpop.f32.mrb[0].mxu0
    %v3269 = vadd.f32 0.0, %v3268
    %v3270 = vpop.f32.mrb[0].mxu0
    %v3271 = vadd.f32 0.0, %v3270
    %v3272 = vpop.f32.mrb[0].mxu0
    %v3273 = vadd.f32 0.0, %v3272
    %3274 = vdwg.mxu0
    %v3275 = vsub.f32 %v3204, 1.0
    %v3276 = vsub.f32 %v3206, 1.0
    %v3277 = vsub.f32 %v3257, 1.0
    %v3278 = vsub.f32 %v3259, 1.0
    %v3279 = vsub.f32 %v3208, 1.0
    %v3280 = vsub.f32 %v3210, 1.0
    %v3281 = vsub.f32 %v3261, 1.0
    %v3282 = vsub.f32 %v3263, 1.0
    %v3283 = vsub.f32 %v3214, 1.0
    %v3284 = vsub.f32 %v3216, 1.0
    %v3285 = vsub.f32 %v3267, 1.0
    %v3286 = vsub.f32 %v3269, 1.0
    %v3287 = vsub.f32 %v3218, 1.0
    %v3288 = vsub.f32 %v3220, 1.0
    %v3289 = vsub.f32 %v3271, 1.0
    %v3290 = vsub.f32 %v3273, 1.0
    %v3291 = vmul.f32 %v3275, 10.0
    %v3292 = vmul.f32 %v3276, 10.0
    %v3293 = vmul.f32 %v3277, 10.0
    %v3294 = vmul.f32 %v3278, 10.0
    %v3295 = vmul.f32 %v3279, 10.0
    %v3296 = vmul.f32 %v3280, 10.0
    %v3297 = vmul.f32 %v3281, 10.0
    %v3298 = vmul.f32 %v3282, 10.0
    %v3299 = vmul.f32 %v3283, 10.0
    %v3300 = vmul.f32 %v3284, 10.0
    %v3301 = vmul.f32 %v3285, 10.0
    %v3302 = vmul.f32 %v3286, 10.0
    %v3303 = vmul.f32 %v3287, 10.0
    %v3304 = vmul.f32 %v3288, 10.0
    %v3305 = vmul.f32 %v3289, 10.0
    %v3306 = vmul.f32 %v3290, 10.0
    %v3307 = vmul.f32 %v3291, 1.442695
    %v3308 = vpow.pop %v3307
    %v3309 = vmul.f32 %v3292, 1.442695
    %v3310 = vpow.pop %v3309
    %v3311 = vmul.f32 %v3293, 1.442695
    %v3312 = vpow.pop %v3311
    %v3313 = vmul.f32 %v3294, 1.442695
    %v3314 = vpow.pop %v3313
    %v3315 = vmul.f32 %v3295, 1.442695
    %v3316 = vpow.pop %v3315
    %v3317 = vmul.f32 %v3296, 1.442695
    %v3318 = vpow.pop %v3317
    %v3319 = vmul.f32 %v3297, 1.442695
    %v3320 = vpow.pop %v3319
    %v3321 = vmul.f32 %v3298, 1.442695
    %v3322 = vpow.pop %v3321
    %v3323 = vmul.f32 %v3299, 1.442695
    %v3324 = vpow.pop %v3323
    %v3325 = vmul.f32 %v3300, 1.442695
    %v3326 = vpow.pop %v3325
    %v3327 = vmul.f32 %v3301, 1.442695
    %v3328 = vpow.pop %v3327
    %v3329 = vmul.f32 %v3302, 1.442695
    %v3330 = vpow.pop %v3329
    %v3331 = vmul.f32 %v3303, 1.442695
    %v3332 = vpow.pop %v3331
    %v3333 = vmul.f32 %v3304, 1.442695
    %v3334 = vpow.pop %v3333
    %v3335 = vmul.f32 %v3305, 1.442695
    %v3336 = vpow.pop %v3335
    %v3337 = vmul.f32 %v3306, 1.442695
    %v3338 = vpow.pop %v3337
    %v3339 = vadd.f32 %v3308, %v3310
    %v3340 = vadd.f32 %v3339, %v3312
    %v3341 = vadd.f32 %v3340, %v3314
    %3342 = vadd.xlane.f32.xlu0 %v3341
    %v3343 = vpop.xlane.xlu0 %3342
    %v3344 = vadd.f32 %v3316, %v3318
    %v3345 = vadd.f32 %v3344, %v3320
    %v3346 = vadd.f32 %v3345, %v3322
    %3347 = vadd.xlane.f32.xlu0 %v3346
    %v3348 = vpop.xlane.xlu0 %3347
    %v3349 = vadd.f32 %v3324, %v3326
    %v3350 = vadd.f32 %v3349, %v3328
    %v3351 = vadd.f32 %v3350, %v3330
    %3352 = vadd.xlane.f32.xlu0 %v3351
    %v3353 = vpop.xlane.xlu0 %3352
    %v3354 = vadd.f32 %v3332, %v3334
    %v3355 = vadd.f32 %v3354, %v3336
    %v3356 = vadd.f32 %v3355, %v3338
    %3357 = vadd.xlane.f32.xlu0 %v3356
    %v3358 = vpop.xlane.xlu0 %3357
    %v3359 = vadd.f32 %v2973, %v3343
    %v3360 = vadd.f32 %v2974, %v3348
    %v3361 = vadd.f32 %v2975, %v3353
    %v3362 = vadd.f32 %v2976, %v3358
    %v3363 = vld [vmem:[#allocation10 + $0x40] sm:$0xff]
    %v3364 = vld [vmem:[#allocation10 + $0x48] sm:$0xff]
    %v3365 = vld [vmem:[#allocation10 + $0xc0] sm:$0xff]
    %v3366 = vld [vmem:[#allocation10 + $0xc8] sm:$0xff]
    %v3367 = vld [vmem:[#allocation10 + $0x140] sm:$0xff]
    %v3368 = vld [vmem:[#allocation10 + $0x148] sm:$0xff]
    %v3369 = vld [vmem:[#allocation10 + $0x1c0] sm:$0xff]
    %v3370 = vld [vmem:[#allocation10 + $0x1c8] sm:$0xff]
    %v3371 = vld [vmem:[#allocation10 + $0x240] sm:$0xff]
    %v3372 = vld [vmem:[#allocation10 + $0x248] sm:$0xff]
    %v3373 = vld [vmem:[#allocation10 + $0x2c0] sm:$0xff]
    %v3374 = vld [vmem:[#allocation10 + $0x2c8] sm:$0xff]
    %v3375 = vld [vmem:[#allocation10 + $0x340] sm:$0xff]
    %v3376 = vld [vmem:[#allocation10 + $0x348] sm:$0xff]
    %v3377 = vld [vmem:[#allocation10 + $0x3c0] sm:$0xff]
    %v3378 = vld [vmem:[#allocation10 + $0x3c8] sm:$0xff]
    %v3379 = vld [vmem:[#allocation10 + $0x440] sm:$0xff]
    %v3380 = vld [vmem:[#allocation10 + $0x448] sm:$0xff]
    %v3381 = vld [vmem:[#allocation10 + $0x4c0] sm:$0xff]
    %v3382 = vld [vmem:[#allocation10 + $0x4c8] sm:$0xff]
    %v3383 = vld [vmem:[#allocation10 + $0x540] sm:$0xff]
    %v3384 = vld [vmem:[#allocation10 + $0x548] sm:$0xff]
    %v3385 = vld [vmem:[#allocation10 + $0x5c0] sm:$0xff]
    %v3386 = vld [vmem:[#allocation10 + $0x5c8] sm:$0xff]
    %v3387 = vld [vmem:[#allocation10 + $0x640] sm:$0xff]
    %v3388 = vld [vmem:[#allocation10 + $0x648] sm:$0xff]
    %v3389 = vld [vmem:[#allocation10 + $0x6c0] sm:$0xff]
    %v3390 = vld [vmem:[#allocation10 + $0x6c8] sm:$0xff]
    %v3391 = vld [vmem:[#allocation10 + $0x740] sm:$0xff]
    %v3392 = vld [vmem:[#allocation10 + $0x748] sm:$0xff]
    %v3393 = vld [vmem:[#allocation10 + $0x7c0] sm:$0xff]
    %v3394 = vld [vmem:[#allocation10 + $0x7c8] sm:$0xff]
    %v3427 = vunpack.c.l.b16 %v3363
    %v3428 = vunpack.c.h.b16 %v3363
    %v3429 = vunpack.c.l.b16 %v3364
    %v3430 = vunpack.c.h.b16 %v3364
    %v3431 = vunpack.c.l.b16 %v3365
    %v3432 = vunpack.c.h.b16 %v3365
    %v3433 = vunpack.c.l.b16 %v3366
    %v3434 = vunpack.c.h.b16 %v3366
    %v3435 = vunpack.c.l.b16 %v3367
    %v3436 = vunpack.c.h.b16 %v3367
    %v3437 = vunpack.c.l.b16 %v3368
    %v3438 = vunpack.c.h.b16 %v3368
    %v3439 = vunpack.c.l.b16 %v3369
    %v3440 = vunpack.c.h.b16 %v3369
    %v3441 = vunpack.c.l.b16 %v3370
    %v3442 = vunpack.c.h.b16 %v3370
    %v3443 = vunpack.c.l.b16 %v3371
    %v3444 = vunpack.c.h.b16 %v3371
    %v3445 = vunpack.c.l.b16 %v3372
    %v3446 = vunpack.c.h.b16 %v3372
    %v3447 = vunpack.c.l.b16 %v3373
    %v3448 = vunpack.c.h.b16 %v3373
    %v3449 = vunpack.c.l.b16 %v3374
    %v3450 = vunpack.c.h.b16 %v3374
    %v3451 = vunpack.c.l.b16 %v3375
    %v3452 = vunpack.c.h.b16 %v3375
    %v3453 = vunpack.c.l.b16 %v3376
    %v3454 = vunpack.c.h.b16 %v3376
    %v3455 = vunpack.c.l.b16 %v3377
    %v3456 = vunpack.c.h.b16 %v3377
    %v3457 = vunpack.c.l.b16 %v3378
    %v3458 = vunpack.c.h.b16 %v3378
    %v3459 = vunpack.c.l.b16 %v3379
    %v3460 = vunpack.c.h.b16 %v3379
    %v3461 = vunpack.c.l.b16 %v3380
    %v3462 = vunpack.c.h.b16 %v3380
    %v3463 = vunpack.c.l.b16 %v3381
    %v3464 = vunpack.c.h.b16 %v3381
    %v3465 = vunpack.c.l.b16 %v3382
    %v3466 = vunpack.c.h.b16 %v3382
    %v3467 = vunpack.c.l.b16 %v3383
    %v3468 = vunpack.c.h.b16 %v3383
    %v3469 = vunpack.c.l.b16 %v3384
    %v3470 = vunpack.c.h.b16 %v3384
    %v3471 = vunpack.c.l.b16 %v3385
    %v3472 = vunpack.c.h.b16 %v3385
    %v3473 = vunpack.c.l.b16 %v3386
    %v3474 = vunpack.c.h.b16 %v3386
    %v3475 = vunpack.c.l.b16 %v3387
    %v3476 = vunpack.c.h.b16 %v3387
    %v3477 = vunpack.c.l.b16 %v3388
    %v3478 = vunpack.c.h.b16 %v3388
    %v3479 = vunpack.c.l.b16 %v3389
    %v3480 = vunpack.c.h.b16 %v3389
    %v3481 = vunpack.c.l.b16 %v3390
    %v3482 = vunpack.c.h.b16 %v3390
    %v3483 = vunpack.c.l.b16 %v3391
    %v3484 = vunpack.c.h.b16 %v3391
    %v3485 = vunpack.c.l.b16 %v3392
    %v3486 = vunpack.c.h.b16 %v3392
    %v3487 = vunpack.c.l.b16 %v3393
    %v3488 = vunpack.c.h.b16 %v3393
    %v3489 = vunpack.c.l.b16 %v3394
    %v3490 = vunpack.c.h.b16 %v3394
    %v3491 = vpack.c.b16 %v3431, %v3427
    %v3492 = vpack.c.b16 %v3432, %v3428
    %v3493 = vpack.c.b16 %v3433, %v3429
    %v3494 = vpack.c.b16 %v3434, %v3430
    %v3495 = vpack.c.b16 %v3439, %v3435
    %v3496 = vpack.c.b16 %v3440, %v3436
    %v3497 = vpack.c.b16 %v3441, %v3437
    %v3498 = vpack.c.b16 %v3442, %v3438
    %v3499 = vpack.c.b16 %v3447, %v3443
    %v3500 = vpack.c.b16 %v3448, %v3444
    %v3501 = vpack.c.b16 %v3449, %v3445
    %v3502 = vpack.c.b16 %v3450, %v3446
    %v3503 = vpack.c.b16 %v3455, %v3451
    %v3504 = vpack.c.b16 %v3456, %v3452
    %v3505 = vpack.c.b16 %v3457, %v3453
    %v3506 = vpack.c.b16 %v3458, %v3454
    %v3507 = vpack.c.b16 %v3463, %v3459
    %v3508 = vpack.c.b16 %v3464, %v3460
    %v3509 = vpack.c.b16 %v3465, %v3461
    %v3510 = vpack.c.b16 %v3466, %v3462
    %v3511 = vpack.c.b16 %v3471, %v3467
    %v3512 = vpack.c.b16 %v3472, %v3468
    %v3513 = vpack.c.b16 %v3473, %v3469
    %v3514 = vpack.c.b16 %v3474, %v3470
    %v3515 = vpack.c.b16 %v3479, %v3475
    %v3516 = vpack.c.b16 %v3480, %v3476
    %v3517 = vpack.c.b16 %v3481, %v3477
    %v3518 = vpack.c.b16 %v3482, %v3478
    %v3519 = vpack.c.b16 %v3487, %v3483
    %v3520 = vpack.c.b16 %v3488, %v3484
    %v3521 = vpack.c.b16 %v3489, %v3485
    %v3522 = vpack.c.b16 %v3490, %v3486
    %3555 = vmatprep.subr.bf16.mxu0 %v3492
    %3556 = vmatpush1.bf16.msra.mxu0 %v3491
    %3557 = vmatprep.subr.bf16.mxu0 %v3496
    %3558 = vmatpush1.bf16.msra.mxu0 %v3495
    %3559 = vmatprep.subr.bf16.mxu0 %v3500
    %3560 = vmatpush1.bf16.msra.mxu0 %v3499
    %3561 = vmatprep.subr.bf16.mxu0 %v3504
    %3562 = vmatpush1.bf16.msra.mxu0 %v3503
    %3563 = vmatprep.subr.bf16.mxu0 %v3508
    %3564 = vmatpush1.bf16.msra.mxu0 %v3507
    %3565 = vmatprep.subr.bf16.mxu0 %v3512
    %3566 = vmatpush1.bf16.msra.mxu0 %v3511
    %3567 = vmatprep.subr.bf16.mxu0 %v3516
    %3568 = vmatpush1.bf16.msra.mxu0 %v3515
    %3569 = vmatprep.subr.bf16.mxu0 %v3520
    %3570 = vmatpush1.bf16.msra.mxu0 %v3519
    %3571 = vmatprep.subr.bf16.mxu0 0
    %3572 = vmatpush1.bf16.msra.mxu0 0
    %3573 = vmatprep.subr.bf16.mxu0 0
    %3574 = vmatpush1.bf16.msra.mxu0 0
    %3575 = vmatprep.subr.bf16.mxu0 0
    %3576 = vmatpush1.bf16.msra.mxu0 0
    %3577 = vmatprep.subr.bf16.mxu0 0
    %3578 = vmatpush1.bf16.msra.mxu0 0
    %3579 = vmatprep.subr.bf16.mxu0 0
    %3580 = vmatpush1.bf16.msra.mxu0 0
    %3581 = vmatprep.subr.bf16.mxu0 0
    %3582 = vmatpush1.bf16.msra.mxu0 0
    %3583 = vmatprep.subr.bf16.mxu0 0
    %3584 = vmatpush1.bf16.msra.mxu0 0
    %3585 = vmatprep.subr.bf16.mxu0 0
    %3586 = vmatpush1.bf16.msra.mxu0 0
    %3587 = vmatprep.mubr.bf16.mxu0 0
    %3588 = vmatmul.mubr.bf16.gmra.mrb[0].mxu0 %v1801
    %v3589 = vpop.f32.mrb[0].mxu0
    %v3590 = vadd.f32 0.0, %v3589
    %v3591 = vpop.f32.mrb[0].mxu0
    %v3592 = vadd.f32 0.0, %v3591
    %v3593 = vpop.f32.mrb[0].mxu0
    %v3594 = vadd.f32 0.0, %v3593
    %v3595 = vpop.f32.mrb[0].mxu0
    %v3596 = vadd.f32 0.0, %v3595
    %3597 = vmatprep.mubr.bf16.mxu0 0
    %3598 = vmatmul.mubr.bf16.gmra.mrb[0].mxu0 %v1802
    %v3599 = vpop.f32.mrb[0].mxu0
    %v3600 = vadd.f32 0.0, %v3599
    %v3601 = vpop.f32.mrb[0].mxu0
    %v3602 = vadd.f32 0.0, %v3601
    %v3603 = vpop.f32.mrb[0].mxu0
    %v3604 = vadd.f32 0.0, %v3603
    %v3605 = vpop.f32.mrb[0].mxu0
    %v3606 = vadd.f32 0.0, %v3605
    %3607 = vdwg.mxu0
    %3608 = vmatprep.subr.bf16.mxu0 %v3494
    %3609 = vmatpush1.bf16.msra.mxu0 %v3493
    %3610 = vmatprep.subr.bf16.mxu0 %v3498
    %3611 = vmatpush1.bf16.msra.mxu0 %v3497
    %3612 = vmatprep.subr.bf16.mxu0 %v3502
    %3613 = vmatpush1.bf16.msra.mxu0 %v3501
    %3614 = vmatprep.subr.bf16.mxu0 %v3506
    %3615 = vmatpush1.bf16.msra.mxu0 %v3505
    %3616 = vmatprep.subr.bf16.mxu0 %v3510
    %3617 = vmatpush1.bf16.msra.mxu0 %v3509
    %3618 = vmatprep.subr.bf16.mxu0 %v3514
    %3619 = vmatpush1.bf16.msra.mxu0 %v3513
    %3620 = vmatprep.subr.bf16.mxu0 %v3518
    %3621 = vmatpush1.bf16.msra.mxu0 %v3517
    %3622 = vmatprep.subr.bf16.mxu0 %v3522
    %3623 = vmatpush1.bf16.msra.mxu0 %v3521
    %3624 = vmatprep.subr.bf16.mxu0 0
    %3625 = vmatpush1.bf16.msra.mxu0 0
    %3626 = vmatprep.subr.bf16.mxu0 0
    %3627 = vmatpush1.bf16.msra.mxu0 0
    %3628 = vmatprep.subr.bf16.mxu0 0
    %3629 = vmatpush1.bf16.msra.mxu0 0
    %3630 = vmatprep.subr.bf16.mxu0 0
    %3631 = vmatpush1.bf16.msra.mxu0 0
    %3632 = vmatprep.subr.bf16.mxu0 0
    %3633 = vmatpush1.bf16.msra.mxu0 0
    %3634 = vmatprep.subr.bf16.mxu0 0
    %3635 = vmatpush1.bf16.msra.mxu0 0
    %3636 = vmatprep.subr.bf16.mxu0 0
    %3637 = vmatpush1.bf16.msra.mxu0 0
    %3638 = vmatprep.subr.bf16.mxu0 0
    %3639 = vmatpush1.bf16.msra.mxu0 0
    %3640 = vmatprep.mubr.bf16.mxu0 0
    %3641 = vmatmul.mubr.bf16.gmra.mrb[0].mxu0 %v1801
    %v3642 = vpop.f32.mrb[0].mxu0
    %v3643 = vadd.f32 0.0, %v3642
    %v3644 = vpop.f32.mrb[0].mxu0
    %v3645 = vadd.f32 0.0, %v3644
    %v3646 = vpop.f32.mrb[0].mxu0
    %v3647 = vadd.f32 0.0, %v3646
    %v3648 = vpop.f32.mrb[0].mxu0
    %v3649 = vadd.f32 0.0, %v3648
    %3650 = vmatprep.mubr.bf16.mxu0 0
    %3651 = vmatmul.mubr.bf16.gmra.mrb[0].mxu0 %v1802
    %v3652 = vpop.f32.mrb[0].mxu0
    %v3653 = vadd.f32 0.0, %v3652
    %v3654 = vpop.f32.mrb[0].mxu0
    %v3655 = vadd.f32 0.0, %v3654
    %v3656 = vpop.f32.mrb[0].mxu0
    %v3657 = vadd.f32 0.0, %v3656
    %v3658 = vpop.f32.mrb[0].mxu0
    %v3659 = vadd.f32 0.0, %v3658
    %3660 = vdwg.mxu0
    %v3661 = vsub.f32 %v3590, 1.0
    %v3662 = vsub.f32 %v3592, 1.0
    %v3663 = vsub.f32 %v3643, 1.0
    %v3664 = vsub.f32 %v3645, 1.0
    %v3665 = vsub.f32 %v3594, 1.0
    %v3666 = vsub.f32 %v3596, 1.0
    %v3667 = vsub.f32 %v3647, 1.0
    %v3668 = vsub.f32 %v3649, 1.0
    %v3669 = vsub.f32 %v3600, 1.0
    %v3670 = vsub.f32 %v3602, 1.0
    %v3671 = vsub.f32 %v3653, 1.0
    %v3672 = vsub.f32 %v3655, 1.0
    %v3673 = vsub.f32 %v3604, 1.0
    %v3674 = vsub.f32 %v3606, 1.0
    %v3675 = vsub.f32 %v3657, 1.0
    %v3676 = vsub.f32 %v3659, 1.0
    %v3677 = vmul.f32 %v3661, 10.0
    %v3678 = vmul.f32 %v3662, 10.0
    %v3679 = vmul.f32 %v3663, 10.0
    %v3680 = vmul.f32 %v3664, 10.0
    %v3681 = vmul.f32 %v3665, 10.0
    %v3682 = vmul.f32 %v3666, 10.0
    %v3683 = vmul.f32 %v3667, 10.0
    %v3684 = vmul.f32 %v3668, 10.0
    %v3685 = vmul.f32 %v3669, 10.0
    %v3686 = vmul.f32 %v3670, 10.0
    %v3687 = vmul.f32 %v3671, 10.0
    %v3688 = vmul.f32 %v3672, 10.0
    %v3689 = vmul.f32 %v3673, 10.0
    %v3690 = vmul.f32 %v3674, 10.0
    %v3691 = vmul.f32 %v3675, 10.0
    %v3692 = vmul.f32 %v3676, 10.0
    %v3693 = vmul.f32 %v3677, 1.442695
    %v3694 = vpow.pop %v3693
    %v3695 = vmul.f32 %v3678, 1.442695
    %v3696 = vpow.pop %v3695
    %v3697 = vmul.f32 %v3679, 1.442695
    %v3698 = vpow.pop %v3697
    %v3699 = vmul.f32 %v3680, 1.442695
    %v3700 = vpow.pop %v3699
    %v3701 = vmul.f32 %v3681, 1.442695
    %v3702 = vpow.pop %v3701
    %v3703 = vmul.f32 %v3682, 1.442695
    %v3704 = vpow.pop %v3703
    %v3705 = vmul.f32 %v3683, 1.442695
    %v3706 = vpow.pop %v3705
    %v3707 = vmul.f32 %v3684, 1.442695
    %v3708 = vpow.pop %v3707
    %v3709 = vmul.f32 %v3685, 1.442695
    %v3710 = vpow.pop %v3709
    %v3711 = vmul.f32 %v3686, 1.442695
    %v3712 = vpow.pop %v3711
    %v3713 = vmul.f32 %v3687, 1.442695
    %v3714 = vpow.pop %v3713
    %v3715 = vmul.f32 %v3688, 1.442695
    %v3716 = vpow.pop %v3715
    %v3717 = vmul.f32 %v3689, 1.442695
    %v3718 = vpow.pop %v3717
    %v3719 = vmul.f32 %v3690, 1.442695
    %v3720 = vpow.pop %v3719
    %v3721 = vmul.f32 %v3691, 1.442695
    %v3722 = vpow.pop %v3721
    %v3723 = vmul.f32 %v3692, 1.442695
    %v3724 = vpow.pop %v3723
    %v3725 = vadd.f32 %v3694, %v3696
    %v3726 = vadd.f32 %v3725, %v3698
    %v3727 = vadd.f32 %v3726, %v3700
    %3728 = vadd.xlane.f32.xlu0 %v3727
    %v3729 = vpop.xlane.xlu0 %3728
    %v3730 = vadd.f32 %v3702, %v3704
    %v3731 = vadd.f32 %v3730, %v3706
    %v3732 = vadd.f32 %v3731, %v3708
    %3733 = vadd.xlane.f32.xlu0 %v3732
    %v3734 = vpop.xlane.xlu0 %3733
    %v3735 = vadd.f32 %v3710, %v3712
    %v3736 = vadd.f32 %v3735, %v3714
    %v3737 = vadd.f32 %v3736, %v3716
    %3738 = vadd.xlane.f32.xlu0 %v3737
    %v3739 = vpop.xlane.xlu0 %3738
    %v3740 = vadd.f32 %v3718, %v3720
    %v3741 = vadd.f32 %v3740, %v3722
    %v3742 = vadd.f32 %v3741, %v3724
    %3743 = vadd.xlane.f32.xlu0 %v3742
    %v3744 = vpop.xlane.xlu0 %3743
    %v3745 = vadd.f32 %v3359, %v3729
    %v3746 = vadd.f32 %v3360, %v3734
    %v3747 = vadd.f32 %v3361, %v3739
    %v3748 = vadd.f32 %v3362, %v3744
    %v3749 = vld [vmem:[#allocation10 + $0x50] sm:$0xff]
    %v3750 = vld [vmem:[#allocation10 + $0x58] sm:$0xff]
    %v3751 = vld [vmem:[#allocation10 + $0xd0] sm:$0xff]
    %v3752 = vld [vmem:[#allocation10 + $0xd8] sm:$0xff]
    %v3753 = vld [vmem:[#allocation10 + $0x150] sm:$0xff]
    %v3754 = vld [vmem:[#allocation10 + $0x158] sm:$0xff]
    %v3755 = vld [vmem:[#allocation10 + $0x1d0] sm:$0xff]
    %v3756 = vld [vmem:[#allocation10 + $0x1d8] sm:$0xff]
    %v3757 = vld [vmem:[#allocation10 + $0x250] sm:$0xff]
    %v3758 = vld [vmem:[#allocation10 + $0x258] sm:$0xff]
    %v3759 = vld [vmem:[#allocation10 + $0x2d0] sm:$0xff]
    %v3760 = vld [vmem:[#allocation10 + $0x2d8] sm:$0xff]
    %v3761 = vld [vmem:[#allocation10 + $0x350] sm:$0xff]
    %v3762 = vld [vmem:[#allocation10 + $0x358] sm:$0xff]
    %v3763 = vld [vmem:[#allocation10 + $0x3d0] sm:$0xff]
    %v3764 = vld [vmem:[#allocation10 + $0x3d8] sm:$0xff]
    %v3765 = vld [vmem:[#allocation10 + $0x450] sm:$0xff]
    %v3766 = vld [vmem:[#allocation10 + $0x458] sm:$0xff]
    %v3767 = vld [vmem:[#allocation10 + $0x4d0] sm:$0xff]
    %v3768 = vld [vmem:[#allocation10 + $0x4d8] sm:$0xff]
    %v3769 = vld [vmem:[#allocation10 + $0x550] sm:$0xff]
    %v3770 = vld [vmem:[#allocation10 + $0x558] sm:$0xff]
    %v3771 = vld [vmem:[#allocation10 + $0x5d0] sm:$0xff]
    %v3772 = vld [vmem:[#allocation10 + $0x5d8] sm:$0xff]
    %v3773 = vld [vmem:[#allocation10 + $0x650] sm:$0xff]
    %v3774 = vld [vmem:[#allocation10 + $0x658] sm:$0xff]
    %v3775 = vld [vmem:[#allocation10 + $0x6d0] sm:$0xff]
    %v3776 = vld [vmem:[#allocation10 + $0x6d8] sm:$0xff]
    %v3777 = vld [vmem:[#allocation10 + $0x750] sm:$0xff]
    %v3778 = vld [vmem:[#allocation10 + $0x758] sm:$0xff]
    %v3779 = vld [vmem:[#allocation10 + $0x7d0] sm:$0xff]
    %v3780 = vld [vmem:[#allocation10 + $0x7d8] sm:$0xff]
    %v3813 = vunpack.c.l.b16 %v3749
    %v3814 = vunpack.c.h.b16 %v3749
    %v3815 = vunpack.c.l.b16 %v3750
    %v3816 = vunpack.c.h.b16 %v3750
    %v3817 = vunpack.c.l.b16 %v3751
    %v3818 = vunpack.c.h.b16 %v3751
    %v3819 = vunpack.c.l.b16 %v3752
    %v3820 = vunpack.c.h.b16 %v3752
    %v3821 = vunpack.c.l.b16 %v3753
    %v3822 = vunpack.c.h.b16 %v3753
    %v3823 = vunpack.c.l.b16 %v3754
    %v3824 = vunpack.c.h.b16 %v3754
    %v3825 = vunpack.c.l.b16 %v3755
    %v3826 = vunpack.c.h.b16 %v3755
    %v3827 = vunpack.c.l.b16 %v3756
    %v3828 = vunpack.c.h.b16 %v3756
    %v3829 = vunpack.c.l.b16 %v3757
    %v3830 = vunpack.c.h.b16 %v3757
    %v3831 = vunpack.c.l.b16 %v3758
    %v3832 = vunpack.c.h.b16 %v3758
    %v3833 = vunpack.c.l.b16 %v3759
    %v3834 = vunpack.c.h.b16 %v3759
    %v3835 = vunpack.c.l.b16 %v3760
    %v3836 = vunpack.c.h.b16 %v3760
    %v3837 = vunpack.c.l.b16 %v3761
    %v3838 = vunpack.c.h.b16 %v3761
    %v3839 = vunpack.c.l.b16 %v3762
    %v3840 = vunpack.c.h.b16 %v3762
    %v3841 = vunpack.c.l.b16 %v3763
    %v3842 = vunpack.c.h.b16 %v3763
    %v3843 = vunpack.c.l.b16 %v3764
    %v3844 = vunpack.c.h.b16 %v3764
    %v3845 = vunpack.c.l.b16 %v3765
    %v3846 = vunpack.c.h.b16 %v3765
    %v3847 = vunpack.c.l.b16 %v3766
    %v3848 = vunpack.c.h.b16 %v3766
    %v3849 = vunpack.c.l.b16 %v3767
    %v3850 = vunpack.c.h.b16 %v3767
    %v3851 = vunpack.c.l.b16 %v3768
    %v3852 = vunpack.c.h.b16 %v3768
    %v3853 = vunpack.c.l.b16 %v3769
    %v3854 = vunpack.c.h.b16 %v3769
    %v3855 = vunpack.c.l.b16 %v3770
    %v3856 = vunpack.c.h.b16 %v3770
    %v3857 = vunpack.c.l.b16 %v3771
    %v3858 = vunpack.c.h.b16 %v3771
    %v3859 = vunpack.c.l.b16 %v3772
    %v3860 = vunpack.c.h.b16 %v3772
    %v3861 = vunpack.c.l.b16 %v3773
    %v3862 = vunpack.c.h.b16 %v3773
    %v3863 = vunpack.c.l.b16 %v3774
    %v3864 = vunpack.c.h.b16 %v3774
    %v3865 = vunpack.c.l.b16 %v3775
    %v3866 = vunpack.c.h.b16 %v3775
    %v3867 = vunpack.c.l.b16 %v3776
    %v3868 = vunpack.c.h.b16 %v3776
    %v3869 = vunpack.c.l.b16 %v3777
    %v3870 = vunpack.c.h.b16 %v3777
    %v3871 = vunpack.c.l.b16 %v3778
    %v3872 = vunpack.c.h.b16 %v3778
    %v3873 = vunpack.c.l.b16 %v3779
    %v3874 = vunpack.c.h.b16 %v3779
    %v3875 = vunpack.c.l.b16 %v3780
    %v3876 = vunpack.c.h.b16 %v3780
    %v3877 = vpack.c.b16 %v3817, %v3813
    %v3878 = vpack.c.b16 %v3818, %v3814
    %v3879 = vpack.c.b16 %v3819, %v3815
    %v3880 = vpack.c.b16 %v3820, %v3816
    %v3881 = vpack.c.b16 %v3825, %v3821
    %v3882 = vpack.c.b16 %v3826, %v3822
    %v3883 = vpack.c.b16 %v3827, %v3823
    %v3884 = vpack.c.b16 %v3828, %v3824
    %v3885 = vpack.c.b16 %v3833, %v3829
    %v3886 = vpack.c.b16 %v3834, %v3830
    %v3887 = vpack.c.b16 %v3835, %v3831
    %v3888 = vpack.c.b16 %v3836, %v3832
    %v3889 = vpack.c.b16 %v3841, %v3837
    %v3890 = vpack.c.b16 %v3842, %v3838
    %v3891 = vpack.c.b16 %v3843, %v3839
    %v3892 = vpack.c.b16 %v3844, %v3840
    %v3893 = vpack.c.b16 %v3849, %v3845
    %v3894 = vpack.c.b16 %v3850, %v3846
    %v3895 = vpack.c.b16 %v3851, %v3847
    %v3896 = vpack.c.b16 %v3852, %v3848
    %v3897 = vpack.c.b16 %v3857, %v3853
    %v3898 = vpack.c.b16 %v3858, %v3854
    %v3899 = vpack.c.b16 %v3859, %v3855
    %v3900 = vpack.c.b16 %v3860, %v3856
    %v3901 = vpack.c.b16 %v3865, %v3861
    %v3902 = vpack.c.b16 %v3866, %v3862
    %v3903 = vpack.c.b16 %v3867, %v3863
    %v3904 = vpack.c.b16 %v3868, %v3864
    %v3905 = vpack.c.b16 %v3873, %v3869
    %v3906 = vpack.c.b16 %v3874, %v3870
    %v3907 = vpack.c.b16 %v3875, %v3871
    %v3908 = vpack.c.b16 %v3876, %v3872
    %3941 = vmatprep.subr.bf16.mxu0 %v3878
    %3942 = vmatpush1.bf16.msra.mxu0 %v3877
    %3943 = vmatprep.subr.bf16.mxu0 %v3882
    %3944 = vmatpush1.bf16.msra.mxu0 %v3881
    %3945 = vmatprep.subr.bf16.mxu0 %v3886
    %3946 = vmatpush1.bf16.msra.mxu0 %v3885
    %3947 = vmatprep.subr.bf16.mxu0 %v3890
    %3948 = vmatpush1.bf16.msra.mxu0 %v3889
    %3949 = vmatprep.subr.bf16.mxu0 %v3894
    %3950 = vmatpush1.bf16.msra.mxu0 %v3893
    %3951 = vmatprep.subr.bf16.mxu0 %v3898
    %3952 = vmatpush1.bf16.msra.mxu0 %v3897
    %3953 = vmatprep.subr.bf16.mxu0 %v3902
    %3954 = vmatpush1.bf16.msra.mxu0 %v3901
    %3955 = vmatprep.subr.bf16.mxu0 %v3906
    %3956 = vmatpush1.bf16.msra.mxu0 %v3905
    %3957 = vmatprep.subr.bf16.mxu0 0
    %3958 = vmatpush1.bf16.msra.mxu0 0
    %3959 = vmatprep.subr.bf16.mxu0 0
    %3960 = vmatpush1.bf16.msra.mxu0 0
    %3961 = vmatprep.subr.bf16.mxu0 0
    %3962 = vmatpush1.bf16.msra.mxu0 0
    %3963 = vmatprep.subr.bf16.mxu0 0
    %3964 = vmatpush1.bf16.msra.mxu0 0
    %3965 = vmatprep.subr.bf16.mxu0 0
    %3966 = vmatpush1.bf16.msra.mxu0 0
    %3967 = vmatprep.subr.bf16.mxu0 0
    %3968 = vmatpush1.bf16.msra.mxu0 0
    %3969 = vmatprep.subr.bf16.mxu0 0
    %3970 = vmatpush1.bf16.msra.mxu0 0
    %3971 = vmatprep.subr.bf16.mxu0 0
    %3972 = vmatpush1.bf16.msra.mxu0 0
    %3973 = vmatprep.mubr.bf16.mxu0 0
    %3974 = vmatmul.mubr.bf16.gmra.mrb[0].mxu0 %v1801
    %v3975 = vpop.f32.mrb[0].mxu0
    %v3976 = vadd.f32 0.0, %v3975
    %v3977 = vpop.f32.mrb[0].mxu0
    %v3978 = vadd.f32 0.0, %v3977
    %v3979 = vpop.f32.mrb[0].mxu0
    %v3980 = vadd.f32 0.0, %v3979
    %v3981 = vpop.f32.mrb[0].mxu0
    %v3982 = vadd.f32 0.0, %v3981
    %3983 = vmatprep.mubr.bf16.mxu0 0
    %3984 = vmatmul.mubr.bf16.gmra.mrb[0].mxu0 %v1802
    %v3985 = vpop.f32.mrb[0].mxu0
    %v3986 = vadd.f32 0.0, %v3985
    %v3987 = vpop.f32.mrb[0].mxu0
    %v3988 = vadd.f32 0.0, %v3987
    %v3989 = vpop.f32.mrb[0].mxu0
    %v3990 = vadd.f32 0.0, %v3989
    %v3991 = vpop.f32.mrb[0].mxu0
    %v3992 = vadd.f32 0.0, %v3991
    %3993 = vdwg.mxu0
    %3994 = vmatprep.subr.bf16.mxu0 %v3880
    %3995 = vmatpush1.bf16.msra.mxu0 %v3879
    %3996 = vmatprep.subr.bf16.mxu0 %v3884
    %3997 = vmatpush1.bf16.msra.mxu0 %v3883
    %3998 = vmatprep.subr.bf16.mxu0 %v3888
    %3999 = vmatpush1.bf16.msra.mxu0 %v3887
    %4000 = vmatprep.subr.bf16.mxu0 %v3892
    %4001 = vmatpush1.bf16.msra.mxu0 %v3891
    %4002 = vmatprep.subr.bf16.mxu0 %v3896
    %4003 = vmatpush1.bf16.msra.mxu0 %v3895
    %4004 = vmatprep.subr.bf16.mxu0 %v3900
    %4005 = vmatpush1.bf16.msra.mxu0 %v3899
    %4006 = vmatprep.subr.bf16.mxu0 %v3904
    %4007 = vmatpush1.bf16.msra.mxu0 %v3903
    %4008 = vmatprep.subr.bf16.mxu0 %v3908
    %4009 = vmatpush1.bf16.msra.mxu0 %v3907
    %4010 = vmatprep.subr.bf16.mxu0 0
    %4011 = vmatpush1.bf16.msra.mxu0 0
    %4012 = vmatprep.subr.bf16.mxu0 0
    %4013 = vmatpush1.bf16.msra.mxu0 0
    %4014 = vmatprep.subr.bf16.mxu0 0
    %4015 = vmatpush1.bf16.msra.mxu0 0
    %4016 = vmatprep.subr.bf16.mxu0 0
    %4017 = vmatpush1.bf16.msra.mxu0 0
    %4018 = vmatprep.subr.bf16.mxu0 0
    %4019 = vmatpush1.bf16.msra.mxu0 0
    %4020 = vmatprep.subr.bf16.mxu0 0
    %4021 = vmatpush1.bf16.msra.mxu0 0
    %4022 = vmatprep.subr.bf16.mxu0 0
    %4023 = vmatpush1.bf16.msra.mxu0 0
    %4024 = vmatprep.subr.bf16.mxu0 0
    %4025 = vmatpush1.bf16.msra.mxu0 0
    %4026 = vmatprep.mubr.bf16.mxu0 0
    %4027 = vmatmul.mubr.bf16.gmra.mrb[0].mxu0 %v1801
    %v4028 = vpop.f32.mrb[0].mxu0
    %v4029 = vadd.f32 0.0, %v4028
    %v4030 = vpop.f32.mrb[0].mxu0
    %v4031 = vadd.f32 0.0, %v4030
    %v4032 = vpop.f32.mrb[0].mxu0
    %v4033 = vadd.f32 0.0, %v4032
    %v4034 = vpop.f32.mrb[0].mxu0
    %v4035 = vadd.f32 0.0, %v4034
    %4036 = vmatprep.mubr.bf16.mxu0 0
    %4037 = vmatmul.mubr.bf16.gmra.mrb[0].mxu0 %v1802
    %v4038 = vpop.f32.mrb[0].mxu0
    %v4039 = vadd.f32 0.0, %v4038
    %v4040 = vpop.f32.mrb[0].mxu0
    %v4041 = vadd.f32 0.0, %v4040
    %v4042 = vpop.f32.mrb[0].mxu0
    %v4043 = vadd.f32 0.0, %v4042
    %v4044 = vpop.f32.mrb[0].mxu0
    %v4045 = vadd.f32 0.0, %v4044
    %4046 = vdwg.mxu0
    %v4047 = vsub.f32 %v3976, 1.0
    %v4048 = vsub.f32 %v3978, 1.0
    %v4049 = vsub.f32 %v4029, 1.0
    %v4050 = vsub.f32 %v4031, 1.0
    %v4051 = vsub.f32 %v3980, 1.0
    %v4052 = vsub.f32 %v3982, 1.0
    %v4053 = vsub.f32 %v4033, 1.0
    %v4054 = vsub.f32 %v4035, 1.0
    %v4055 = vsub.f32 %v3986, 1.0
    %v4056 = vsub.f32 %v3988, 1.0
    %v4057 = vsub.f32 %v4039, 1.0
    %v4058 = vsub.f32 %v4041, 1.0
    %v4059 = vsub.f32 %v3990, 1.0
    %v4060 = vsub.f32 %v3992, 1.0
    %v4061 = vsub.f32 %v4043, 1.0
    %v4062 = vsub.f32 %v4045, 1.0
    %v4063 = vmul.f32 %v4047, 10.0
    %v4064 = vmul.f32 %v4048, 10.0
    %v4065 = vmul.f32 %v4049, 10.0
    %v4066 = vmul.f32 %v4050, 10.0
    %v4067 = vmul.f32 %v4051, 10.0
    %v4068 = vmul.f32 %v4052, 10.0
    %v4069 = vmul.f32 %v4053, 10.0
    %v4070 = vmul.f32 %v4054, 10.0
    %v4071 = vmul.f32 %v4055, 10.0
    %v4072 = vmul.f32 %v4056, 10.0
    %v4073 = vmul.f32 %v4057, 10.0
    %v4074 = vmul.f32 %v4058, 10.0
    %v4075 = vmul.f32 %v4059, 10.0
    %v4076 = vmul.f32 %v4060, 10.0
    %v4077 = vmul.f32 %v4061, 10.0
    %v4078 = vmul.f32 %v4062, 10.0
    %v4079 = vmul.f32 %v4063, 1.442695
    %v4080 = vpow.pop %v4079
    %v4081 = vmul.f32 %v4064, 1.442695
    %v4082 = vpow.pop %v4081
    %v4083 = vmul.f32 %v4065, 1.442695
    %v4084 = vpow.pop %v4083
    %v4085 = vmul.f32 %v4066, 1.442695
    %v4086 = vpow.pop %v4085
    %v4087 = vmul.f32 %v4067, 1.442695
    %v4088 = vpow.pop %v4087
    %v4089 = vmul.f32 %v4068, 1.442695
    %v4090 = vpow.pop %v4089
    %v4091 = vmul.f32 %v4069, 1.442695
    %v4092 = vpow.pop %v4091
    %v4093 = vmul.f32 %v4070, 1.442695
    %v4094 = vpow.pop %v4093
    %v4095 = vmul.f32 %v4071, 1.442695
    %v4096 = vpow.pop %v4095
    %v4097 = vmul.f32 %v4072, 1.442695
    %v4098 = vpow.pop %v4097
    %v4099 = vmul.f32 %v4073, 1.442695
    %v4100 = vpow.pop %v4099
    %v4101 = vmul.f32 %v4074, 1.442695
    %v4102 = vpow.pop %v4101
    %v4103 = vmul.f32 %v4075, 1.442695
    %v4104 = vpow.pop %v4103
    %v4105 = vmul.f32 %v4076, 1.442695
    %v4106 = vpow.pop %v4105
    %v4107 = vmul.f32 %v4077, 1.442695
    %v4108 = vpow.pop %v4107
    %v4109 = vmul.f32 %v4078, 1.442695
    %v4110 = vpow.pop %v4109
    %v4111 = vadd.f32 %v4080, %v4082
    %v4112 = vadd.f32 %v4111, %v4084
    %v4113 = vadd.f32 %v4112, %v4086
    %4114 = vadd.xlane.f32.xlu0 %v4113
    %v4115 = vpop.xlane.xlu0 %4114
    %v4116 = vadd.f32 %v4088, %v4090
    %v4117 = vadd.f32 %v4116, %v4092
    %v4118 = vadd.f32 %v4117, %v4094
    %4119 = vadd.xlane.f32.xlu0 %v4118
    %v4120 = vpop.xlane.xlu0 %4119
    %v4121 = vadd.f32 %v4096, %v4098
    %v4122 = vadd.f32 %v4121, %v4100
    %v4123 = vadd.f32 %v4122, %v4102
    %4124 = vadd.xlane.f32.xlu0 %v4123
    %v4125 = vpop.xlane.xlu0 %4124
    %v4126 = vadd.f32 %v4104, %v4106
    %v4127 = vadd.f32 %v4126, %v4108
    %v4128 = vadd.f32 %v4127, %v4110
    %4129 = vadd.xlane.f32.xlu0 %v4128
    %v4130 = vpop.xlane.xlu0 %4129
    %v4131 = vadd.f32 %v3745, %v4115
    %v4132 = vadd.f32 %v3746, %v4120
    %v4133 = vadd.f32 %v3747, %v4125
    %v4134 = vadd.f32 %v3748, %v4130
    %v4135 = vld [vmem:[#allocation10 + $0x60] sm:$0xff]
    %v4136 = vld [vmem:[#allocation10 + $0x68] sm:$0xff]
    %v4137 = vld [vmem:[#allocation10 + $0xe0] sm:$0xff]
    %v4138 = vld [vmem:[#allocation10 + $0xe8] sm:$0xff]
    %v4139 = vld [vmem:[#allocation10 + $0x160] sm:$0xff]
    %v4140 = vld [vmem:[#allocation10 + $0x168] sm:$0xff]
    %v4141 = vld [vmem:[#allocation10 + $0x1e0] sm:$0xff]
    %v4142 = vld [vmem:[#allocation10 + $0x1e8] sm:$0xff]
    %v4143 = vld [vmem:[#allocation10 + $0x260] sm:$0xff]
    %v4144 = vld [vmem:[#allocation10 + $0x268] sm:$0xff]
    %v4145 = vld [vmem:[#allocation10 + $0x2e0] sm:$0xff]
    %v4146 = vld [vmem:[#allocation10 + $0x2e8] sm:$0xff]
    %v4147 = vld [vmem:[#allocation10 + $0x360] sm:$0xff]
    %v4148 = vld [vmem:[#allocation10 + $0x368] sm:$0xff]
    %v4149 = vld [vmem:[#allocation10 + $0x3e0] sm:$0xff]
    %v4150 = vld [vmem:[#allocation10 + $0x3e8] sm:$0xff]
    %v4151 = vld [vmem:[#allocation10 + $0x460] sm:$0xff]
    %v4152 = vld [vmem:[#allocation10 + $0x468] sm:$0xff]
    %v4153 = vld [vmem:[#allocation10 + $0x4e0] sm:$0xff]
    %v4154 = vld [vmem:[#allocation10 + $0x4e8] sm:$0xff]
    %v4155 = vld [vmem:[#allocation10 + $0x560] sm:$0xff]
    %v4156 = vld [vmem:[#allocation10 + $0x568] sm:$0xff]
    %v4157 = vld [vmem:[#allocation10 + $0x5e0] sm:$0xff]
    %v4158 = vld [vmem:[#allocation10 + $0x5e8] sm:$0xff]
    %v4159 = vld [vmem:[#allocation10 + $0x660] sm:$0xff]
    %v4160 = vld [vmem:[#allocation10 + $0x668] sm:$0xff]
    %v4161 = vld [vmem:[#allocation10 + $0x6e0] sm:$0xff]
    %v4162 = vld [vmem:[#allocation10 + $0x6e8] sm:$0xff]
    %v4163 = vld [vmem:[#allocation10 + $0x760] sm:$0xff]
    %v4164 = vld [vmem:[#allocation10 + $0x768] sm:$0xff]
    %v4165 = vld [vmem:[#allocation10 + $0x7e0] sm:$0xff]
    %v4166 = vld [vmem:[#allocation10 + $0x7e8] sm:$0xff]
    %v4199 = vunpack.c.l.b16 %v4135
    %v4200 = vunpack.c.h.b16 %v4135
    %v4201 = vunpack.c.l.b16 %v4136
    %v4202 = vunpack.c.h.b16 %v4136
    %v4203 = vunpack.c.l.b16 %v4137
    %v4204 = vunpack.c.h.b16 %v4137
    %v4205 = vunpack.c.l.b16 %v4138
    %v4206 = vunpack.c.h.b16 %v4138
    %v4207 = vunpack.c.l.b16 %v4139
    %v4208 = vunpack.c.h.b16 %v4139
    %v4209 = vunpack.c.l.b16 %v4140
    %v4210 = vunpack.c.h.b16 %v4140
    %v4211 = vunpack.c.l.b16 %v4141
    %v4212 = vunpack.c.h.b16 %v4141
    %v4213 = vunpack.c.l.b16 %v4142
    %v4214 = vunpack.c.h.b16 %v4142
    %v4215 = vunpack.c.l.b16 %v4143
    %v4216 = vunpack.c.h.b16 %v4143
    %v4217 = vunpack.c.l.b16 %v4144
    %v4218 = vunpack.c.h.b16 %v4144
    %v4219 = vunpack.c.l.b16 %v4145
    %v4220 = vunpack.c.h.b16 %v4145
    %v4221 = vunpack.c.l.b16 %v4146
    %v4222 = vunpack.c.h.b16 %v4146
    %v4223 = vunpack.c.l.b16 %v4147
    %v4224 = vunpack.c.h.b16 %v4147
    %v4225 = vunpack.c.l.b16 %v4148
    %v4226 = vunpack.c.h.b16 %v4148
    %v4227 = vunpack.c.l.b16 %v4149
    %v4228 = vunpack.c.h.b16 %v4149
    %v4229 = vunpack.c.l.b16 %v4150
    %v4230 = vunpack.c.h.b16 %v4150
    %v4231 = vunpack.c.l.b16 %v4151
    %v4232 = vunpack.c.h.b16 %v4151
    %v4233 = vunpack.c.l.b16 %v4152
    %v4234 = vunpack.c.h.b16 %v4152
    %v4235 = vunpack.c.l.b16 %v4153
    %v4236 = vunpack.c.h.b16 %v4153
    %v4237 = vunpack.c.l.b16 %v4154
    %v4238 = vunpack.c.h.b16 %v4154
    %v4239 = vunpack.c.l.b16 %v4155
    %v4240 = vunpack.c.h.b16 %v4155
    %v4241 = vunpack.c.l.b16 %v4156
    %v4242 = vunpack.c.h.b16 %v4156
    %v4243 = vunpack.c.l.b16 %v4157
    %v4244 = vunpack.c.h.b16 %v4157
    %v4245 = vunpack.c.l.b16 %v4158
    %v4246 = vunpack.c.h.b16 %v4158
    %v4247 = vunpack.c.l.b16 %v4159
    %v4248 = vunpack.c.h.b16 %v4159
    %v4249 = vunpack.c.l.b16 %v4160
    %v4250 = vunpack.c.h.b16 %v4160
    %v4251 = vunpack.c.l.b16 %v4161
    %v4252 = vunpack.c.h.b16 %v4161
    %v4253 = vunpack.c.l.b16 %v4162
    %v4254 = vunpack.c.h.b16 %v4162
    %v4255 = vunpack.c.l.b16 %v4163
    %v4256 = vunpack.c.h.b16 %v4163
    %v4257 = vunpack.c.l.b16 %v4164
    %v4258 = vunpack.c.h.b16 %v4164
    %v4259 = vunpack.c.l.b16 %v4165
    %v4260 = vunpack.c.h.b16 %v4165
    %v4261 = vunpack.c.l.b16 %v4166
    %v4262 = vunpack.c.h.b16 %v4166
    %v4263 = vpack.c.b16 %v4203, %v4199
    %v4264 = vpack.c.b16 %v4204, %v4200
    %v4265 = vpack.c.b16 %v4205, %v4201
    %v4266 = vpack.c.b16 %v4206, %v4202
    %v4267 = vpack.c.b16 %v4211, %v4207
    %v4268 = vpack.c.b16 %v4212, %v4208
    %v4269 = vpack.c.b16 %v4213, %v4209
    %v4270 = vpack.c.b16 %v4214, %v4210
    %v4271 = vpack.c.b16 %v4219, %v4215
    %v4272 = vpack.c.b16 %v4220, %v4216
    %v4273 = vpack.c.b16 %v4221, %v4217
    %v4274 = vpack.c.b16 %v4222, %v4218
    %v4275 = vpack.c.b16 %v4227, %v4223
    %v4276 = vpack.c.b16 %v4228, %v4224
    %v4277 = vpack.c.b16 %v4229, %v4225
    %v4278 = vpack.c.b16 %v4230, %v4226
    %v4279 = vpack.c.b16 %v4235, %v4231
    %v4280 = vpack.c.b16 %v4236, %v4232
    %v4281 = vpack.c.b16 %v4237, %v4233
    %v4282 = vpack.c.b16 %v4238, %v4234
    %v4283 = vpack.c.b16 %v4243, %v4239
    %v4284 = vpack.c.b16 %v4244, %v4240
    %v4285 = vpack.c.b16 %v4245, %v4241
    %v4286 = vpack.c.b16 %v4246, %v4242
    %v4287 = vpack.c.b16 %v4251, %v4247
    %v4288 = vpack.c.b16 %v4252, %v4248
    %v4289 = vpack.c.b16 %v4253, %v4249
    %v4290 = vpack.c.b16 %v4254, %v4250
    %v4291 = vpack.c.b16 %v4259, %v4255
    %v4292 = vpack.c.b16 %v4260, %v4256
    %v4293 = vpack.c.b16 %v4261, %v4257
    %v4294 = vpack.c.b16 %v4262, %v4258
    %4327 = vmatprep.subr.bf16.mxu0 %v4264
    %4328 = vmatpush1.bf16.msra.mxu0 %v4263
    %4329 = vmatprep.subr.bf16.mxu0 %v4268
    %4330 = vmatpush1.bf16.msra.mxu0 %v4267
    %4331 = vmatprep.subr.bf16.mxu0 %v4272
    %4332 = vmatpush1.bf16.msra.mxu0 %v4271
    %4333 = vmatprep.subr.bf16.mxu0 %v4276
    %4334 = vmatpush1.bf16.msra.mxu0 %v4275
    %4335 = vmatprep.subr.bf16.mxu0 %v4280
    %4336 = vmatpush1.bf16.msra.mxu0 %v4279
    %4337 = vmatprep.subr.bf16.mxu0 %v4284
    %4338 = vmatpush1.bf16.msra.mxu0 %v4283
    %4339 = vmatprep.subr.bf16.mxu0 %v4288
    %4340 = vmatpush1.bf16.msra.mxu0 %v4287
    %4341 = vmatprep.subr.bf16.mxu0 %v4292
    %4342 = vmatpush1.bf16.msra.mxu0 %v4291
    %4343 = vmatprep.subr.bf16.mxu0 0
    %4344 = vmatpush1.bf16.msra.mxu0 0
    %4345 = vmatprep.subr.bf16.mxu0 0
    %4346 = vmatpush1.bf16.msra.mxu0 0
    %4347 = vmatprep.subr.bf16.mxu0 0
    %4348 = vmatpush1.bf16.msra.mxu0 0
    %4349 = vmatprep.subr.bf16.mxu0 0
    %4350 = vmatpush1.bf16.msra.mxu0 0
    %4351 = vmatprep.subr.bf16.mxu0 0
    %4352 = vmatpush1.bf16.msra.mxu0 0
    %4353 = vmatprep.subr.bf16.mxu0 0
    %4354 = vmatpush1.bf16.msra.mxu0 0
    %4355 = vmatprep.subr.bf16.mxu0 0
    %4356 = vmatpush1.bf16.msra.mxu0 0
    %4357 = vmatprep.subr.bf16.mxu0 0
    %4358 = vmatpush1.bf16.msra.mxu0 0
    %4359 = vmatprep.mubr.bf16.mxu0 0
    %4360 = vmatmul.mubr.bf16.gmra.mrb[0].mxu0 %v1801
    %v4361 = vpop.f32.mrb[0].mxu0
    %v4362 = vadd.f32 0.0, %v4361
    %v4363 = vpop.f32.mrb[0].mxu0
    %v4364 = vadd.f32 0.0, %v4363
    %v4365 = vpop.f32.mrb[0].mxu0
    %v4366 = vadd.f32 0.0, %v4365
    %v4367 = vpop.f32.mrb[0].mxu0
    %v4368 = vadd.f32 0.0, %v4367
    %4369 = vmatprep.mubr.bf16.mxu0 0
    %4370 = vmatmul.mubr.bf16.gmra.mrb[0].mxu0 %v1802
    %v4371 = vpop.f32.mrb[0].mxu0
    %v4372 = vadd.f32 0.0, %v4371
    %v4373 = vpop.f32.mrb[0].mxu0
    %v4374 = vadd.f32 0.0, %v4373
    %v4375 = vpop.f32.mrb[0].mxu0
    %v4376 = vadd.f32 0.0, %v4375
    %v4377 = vpop.f32.mrb[0].mxu0
    %v4378 = vadd.f32 0.0, %v4377
    %4379 = vdwg.mxu0
    %4380 = vmatprep.subr.bf16.mxu0 %v4266
    %4381 = vmatpush1.bf16.msra.mxu0 %v4265
    %4382 = vmatprep.subr.bf16.mxu0 %v4270
    %4383 = vmatpush1.bf16.msra.mxu0 %v4269
    %4384 = vmatprep.subr.bf16.mxu0 %v4274
    %4385 = vmatpush1.bf16.msra.mxu0 %v4273
    %4386 = vmatprep.subr.bf16.mxu0 %v4278
    %4387 = vmatpush1.bf16.msra.mxu0 %v4277
    %4388 = vmatprep.subr.bf16.mxu0 %v4282
    %4389 = vmatpush1.bf16.msra.mxu0 %v4281
    %4390 = vmatprep.subr.bf16.mxu0 %v4286
    %4391 = vmatpush1.bf16.msra.mxu0 %v4285
    %4392 = vmatprep.subr.bf16.mxu0 %v4290
    %4393 = vmatpush1.bf16.msra.mxu0 %v4289
    %4394 = vmatprep.subr.bf16.mxu0 %v4294
    %4395 = vmatpush1.bf16.msra.mxu0 %v4293
    %4396 = vmatprep.subr.bf16.mxu0 0
    %4397 = vmatpush1.bf16.msra.mxu0 0
    %4398 = vmatprep.subr.bf16.mxu0 0
    %4399 = vmatpush1.bf16.msra.mxu0 0
    %4400 = vmatprep.subr.bf16.mxu0 0
    %4401 = vmatpush1.bf16.msra.mxu0 0
    %4402 = vmatprep.subr.bf16.mxu0 0
    %4403 = vmatpush1.bf16.msra.mxu0 0
    %4404 = vmatprep.subr.bf16.mxu0 0
    %4405 = vmatpush1.bf16.msra.mxu0 0
    %4406 = vmatprep.subr.bf16.mxu0 0
    %4407 = vmatpush1.bf16.msra.mxu0 0
    %4408 = vmatprep.subr.bf16.mxu0 0
    %4409 = vmatpush1.bf16.msra.mxu0 0
    %4410 = vmatprep.subr.bf16.mxu0 0
    %4411 = vmatpush1.bf16.msra.mxu0 0
    %4412 = vmatprep.mubr.bf16.mxu0 0
    %4413 = vmatmul.mubr.bf16.gmra.mrb[0].mxu0 %v1801
    %v4414 = vpop.f32.mrb[0].mxu0
    %v4415 = vadd.f32 0.0, %v4414
    %v4416 = vpop.f32.mrb[0].mxu0
    %v4417 = vadd.f32 0.0, %v4416
    %v4418 = vpop.f32.mrb[0].mxu0
    %v4419 = vadd.f32 0.0, %v4418
    %v4420 = vpop.f32.mrb[0].mxu0
    %v4421 = vadd.f32 0.0, %v4420
    %4422 = vmatprep.mubr.bf16.mxu0 0
    %4423 = vmatmul.mubr.bf16.gmra.mrb[0].mxu0 %v1802
    %v4424 = vpop.f32.mrb[0].mxu0
    %v4425 = vadd.f32 0.0, %v4424
    %v4426 = vpop.f32.mrb[0].mxu0
    %v4427 = vadd.f32 0.0, %v4426
    %v4428 = vpop.f32.mrb[0].mxu0
    %v4429 = vadd.f32 0.0, %v4428
    %v4430 = vpop.f32.mrb[0].mxu0
    %v4431 = vadd.f32 0.0, %v4430
    %4432 = vdwg.mxu0
    %v4433 = vsub.f32 %v4362, 1.0
    %v4434 = vsub.f32 %v4364, 1.0
    %v4435 = vsub.f32 %v4415, 1.0
    %v4436 = vsub.f32 %v4417, 1.0
    %v4437 = vsub.f32 %v4366, 1.0
    %v4438 = vsub.f32 %v4368, 1.0
    %v4439 = vsub.f32 %v4419, 1.0
    %v4440 = vsub.f32 %v4421, 1.0
    %v4441 = vsub.f32 %v4372, 1.0
    %v4442 = vsub.f32 %v4374, 1.0
    %v4443 = vsub.f32 %v4425, 1.0
    %v4444 = vsub.f32 %v4427, 1.0
    %v4445 = vsub.f32 %v4376, 1.0
    %v4446 = vsub.f32 %v4378, 1.0
    %v4447 = vsub.f32 %v4429, 1.0
    %v4448 = vsub.f32 %v4431, 1.0
    %v4449 = vmul.f32 %v4433, 10.0
    %v4450 = vmul.f32 %v4434, 10.0
    %v4451 = vmul.f32 %v4435, 10.0
    %v4452 = vmul.f32 %v4436, 10.0
    %v4453 = vmul.f32 %v4437, 10.0
    %v4454 = vmul.f32 %v4438, 10.0
    %v4455 = vmul.f32 %v4439, 10.0
    %v4456 = vmul.f32 %v4440, 10.0
    %v4457 = vmul.f32 %v4441, 10.0
    %v4458 = vmul.f32 %v4442, 10.0
    %v4459 = vmul.f32 %v4443, 10.0
    %v4460 = vmul.f32 %v4444, 10.0
    %v4461 = vmul.f32 %v4445, 10.0
    %v4462 = vmul.f32 %v4446, 10.0
    %v4463 = vmul.f32 %v4447, 10.0
    %v4464 = vmul.f32 %v4448, 10.0
    %v4465 = vmul.f32 %v4449, 1.442695
    %v4466 = vpow.pop %v4465
    %v4467 = vmul.f32 %v4450, 1.442695
    %v4468 = vpow.pop %v4467
    %v4469 = vmul.f32 %v4451, 1.442695
    %v4470 = vpow.pop %v4469
    %v4471 = vmul.f32 %v4452, 1.442695
    %v4472 = vpow.pop %v4471
    %v4473 = vmul.f32 %v4453, 1.442695
    %v4474 = vpow.pop %v4473
    %v4475 = vmul.f32 %v4454, 1.442695
    %v4476 = vpow.pop %v4475
    %v4477 = vmul.f32 %v4455, 1.442695
    %v4478 = vpow.pop %v4477
    %v4479 = vmul.f32 %v4456, 1.442695
    %v4480 = vpow.pop %v4479
    %v4481 = vmul.f32 %v4457, 1.442695
    %v4482 = vpow.pop %v4481
    %v4483 = vmul.f32 %v4458, 1.442695
    %v4484 = vpow.pop %v4483
    %v4485 = vmul.f32 %v4459, 1.442695
    %v4486 = vpow.pop %v4485
    %v4487 = vmul.f32 %v4460, 1.442695
    %v4488 = vpow.pop %v4487
    %v4489 = vmul.f32 %v4461, 1.442695
    %v4490 = vpow.pop %v4489
    %v4491 = vmul.f32 %v4462, 1.442695
    %v4492 = vpow.pop %v4491
    %v4493 = vmul.f32 %v4463, 1.442695
    %v4494 = vpow.pop %v4493
    %v4495 = vmul.f32 %v4464, 1.442695
    %v4496 = vpow.pop %v4495
    %v4497 = vadd.f32 %v4466, %v4468
    %v4498 = vadd.f32 %v4497, %v4470
    %v4499 = vadd.f32 %v4498, %v4472
    %4500 = vadd.xlane.f32.xlu0 %v4499
    %v4501 = vpop.xlane.xlu0 %4500
    %v4502 = vadd.f32 %v4474, %v4476
    %v4503 = vadd.f32 %v4502, %v4478
    %v4504 = vadd.f32 %v4503, %v4480
    %4505 = vadd.xlane.f32.xlu0 %v4504
    %v4506 = vpop.xlane.xlu0 %4505
    %v4507 = vadd.f32 %v4482, %v4484
    %v4508 = vadd.f32 %v4507, %v4486
    %v4509 = vadd.f32 %v4508, %v4488
    %4510 = vadd.xlane.f32.xlu0 %v4509
    %v4511 = vpop.xlane.xlu0 %4510
    %v4512 = vadd.f32 %v4490, %v4492
    %v4513 = vadd.f32 %v4512, %v4494
    %v4514 = vadd.f32 %v4513, %v4496
    %4515 = vadd.xlane.f32.xlu0 %v4514
    %v4516 = vpop.xlane.xlu0 %4515
    %v4517 = vadd.f32 %v4131, %v4501
    %v4518 = vadd.f32 %v4132, %v4506
    %v4519 = vadd.f32 %v4133, %v4511
    %v4520 = vadd.f32 %v4134, %v4516
    %v4521 = vld [vmem:[#allocation10 + $0x70] sm:$0xff]
    %v4522 = vld [vmem:[#allocation10 + $0x78] sm:$0xff]
    %v4523 = vld [vmem:[#allocation10 + $0xf0] sm:$0xff]
    %v4524 = vld [vmem:[#allocation10 + $0xf8] sm:$0xff]
    %v4525 = vld [vmem:[#allocation10 + $0x170] sm:$0xff]
    %v4526 = vld [vmem:[#allocation10 + $0x178] sm:$0xff]
    %v4527 = vld [vmem:[#allocation10 + $0x1f0] sm:$0xff]
    %v4528 = vld [vmem:[#allocation10 + $0x1f8] sm:$0xff]
    %v4529 = vld [vmem:[#allocation10 + $0x270] sm:$0xff]
    %v4530 = vld [vmem:[#allocation10 + $0x278] sm:$0xff]
    %v4531 = vld [vmem:[#allocation10 + $0x2f0] sm:$0xff]
    %v4532 = vld [vmem:[#allocation10 + $0x2f8] sm:$0xff]
    %v4533 = vld [vmem:[#allocation10 + $0x370] sm:$0xff]
    %v4534 = vld [vmem:[#allocation10 + $0x378] sm:$0xff]
    %v4535 = vld [vmem:[#allocation10 + $0x3f0] sm:$0xff]
    %v4536 = vld [vmem:[#allocation10 + $0x3f8] sm:$0xff]
    %v4537 = vld [vmem:[#allocation10 + $0x470] sm:$0xff]
    %v4538 = vld [vmem:[#allocation10 + $0x478] sm:$0xff]
    %v4539 = vld [vmem:[#allocation10 + $0x4f0] sm:$0xff]
    %v4540 = vld [vmem:[#allocation10 + $0x4f8] sm:$0xff]
    %v4541 = vld [vmem:[#allocation10 + $0x570] sm:$0xff]
    %v4542 = vld [vmem:[#allocation10 + $0x578] sm:$0xff]
    %v4543 = vld [vmem:[#allocation10 + $0x5f0] sm:$0xff]
    %v4544 = vld [vmem:[#allocation10 + $0x5f8] sm:$0xff]
    %v4545 = vld [vmem:[#allocation10 + $0x670] sm:$0xff]
    %v4546 = vld [vmem:[#allocation10 + $0x678] sm:$0xff]
    %v4547 = vld [vmem:[#allocation10 + $0x6f0] sm:$0xff]
    %v4548 = vld [vmem:[#allocation10 + $0x6f8] sm:$0xff]
    %v4549 = vld [vmem:[#allocation10 + $0x770] sm:$0xff]
    %v4550 = vld [vmem:[#allocation10 + $0x778] sm:$0xff]
    %v4551 = vld [vmem:[#allocation10 + $0x7f0] sm:$0xff]
    %v4552 = vld [vmem:[#allocation10 + $0x7f8] sm:$0xff]
    %v4585 = vunpack.c.l.b16 %v4521
    %v4586 = vunpack.c.h.b16 %v4521
    %v4587 = vunpack.c.l.b16 %v4522
    %v4588 = vunpack.c.h.b16 %v4522
    %v4589 = vunpack.c.l.b16 %v4523
    %v4590 = vunpack.c.h.b16 %v4523
    %v4591 = vunpack.c.l.b16 %v4524
    %v4592 = vunpack.c.h.b16 %v4524
    %v4593 = vunpack.c.l.b16 %v4525
    %v4594 = vunpack.c.h.b16 %v4525
    %v4595 = vunpack.c.l.b16 %v4526
    %v4596 = vunpack.c.h.b16 %v4526
    %v4597 = vunpack.c.l.b16 %v4527
    %v4598 = vunpack.c.h.b16 %v4527
    %v4599 = vunpack.c.l.b16 %v4528
    %v4600 = vunpack.c.h.b16 %v4528
    %v4601 = vunpack.c.l.b16 %v4529
    %v4602 = vunpack.c.h.b16 %v4529
    %v4603 = vunpack.c.l.b16 %v4530
    %v4604 = vunpack.c.h.b16 %v4530
    %v4605 = vunpack.c.l.b16 %v4531
    %v4606 = vunpack.c.h.b16 %v4531
    %v4607 = vunpack.c.l.b16 %v4532
    %v4608 = vunpack.c.h.b16 %v4532
    %v4609 = vunpack.c.l.b16 %v4533
    %v4610 = vunpack.c.h.b16 %v4533
    %v4611 = vunpack.c.l.b16 %v4534
    %v4612 = vunpack.c.h.b16 %v4534
    %v4613 = vunpack.c.l.b16 %v4535
    %v4614 = vunpack.c.h.b16 %v4535
    %v4615 = vunpack.c.l.b16 %v4536
    %v4616 = vunpack.c.h.b16 %v4536
    %v4617 = vunpack.c.l.b16 %v4537
    %v4618 = vunpack.c.h.b16 %v4537
    %v4619 = vunpack.c.l.b16 %v4538
    %v4620 = vunpack.c.h.b16 %v4538
    %v4621 = vunpack.c.l.b16 %v4539
    %v4622 = vunpack.c.h.b16 %v4539
    %v4623 = vunpack.c.l.b16 %v4540
    %v4624 = vunpack.c.h.b16 %v4540
    %v4625 = vunpack.c.l.b16 %v4541
    %v4626 = vunpack.c.h.b16 %v4541
    %v4627 = vunpack.c.l.b16 %v4542
    %v4628 = vunpack.c.h.b16 %v4542
    %v4629 = vunpack.c.l.b16 %v4543
    %v4630 = vunpack.c.h.b16 %v4543
    %v4631 = vunpack.c.l.b16 %v4544
    %v4632 = vunpack.c.h.b16 %v4544
    %v4633 = vunpack.c.l.b16 %v4545
    %v4634 = vunpack.c.h.b16 %v4545
    %v4635 = vunpack.c.l.b16 %v4546
    %v4636 = vunpack.c.h.b16 %v4546
    %v4637 = vunpack.c.l.b16 %v4547
    %v4638 = vunpack.c.h.b16 %v4547
    %v4639 = vunpack.c.l.b16 %v4548
    %v4640 = vunpack.c.h.b16 %v4548
    %v4641 = vunpack.c.l.b16 %v4549
    %v4642 = vunpack.c.h.b16 %v4549
    %v4643 = vunpack.c.l.b16 %v4550
    %v4644 = vunpack.c.h.b16 %v4550
    %v4645 = vunpack.c.l.b16 %v4551
    %v4646 = vunpack.c.h.b16 %v4551
    %v4647 = vunpack.c.l.b16 %v4552
    %v4648 = vunpack.c.h.b16 %v4552
    %v4649 = vpack.c.b16 %v4589, %v4585
    %v4650 = vpack.c.b16 %v4590, %v4586
    %v4651 = vpack.c.b16 %v4591, %v4587
    %v4652 = vpack.c.b16 %v4592, %v4588
    %v4653 = vpack.c.b16 %v4597, %v4593
    %v4654 = vpack.c.b16 %v4598, %v4594
    %v4655 = vpack.c.b16 %v4599, %v4595
    %v4656 = vpack.c.b16 %v4600, %v4596
    %v4657 = vpack.c.b16 %v4605, %v4601
    %v4658 = vpack.c.b16 %v4606, %v4602
    %v4659 = vpack.c.b16 %v4607, %v4603
    %v4660 = vpack.c.b16 %v4608, %v4604
    %v4661 = vpack.c.b16 %v4613, %v4609
    %v4662 = vpack.c.b16 %v4614, %v4610
    %v4663 = vpack.c.b16 %v4615, %v4611
    %v4664 = vpack.c.b16 %v4616, %v4612
    %v4665 = vpack.c.b16 %v4621, %v4617
    %v4666 = vpack.c.b16 %v4622, %v4618
    %v4667 = vpack.c.b16 %v4623, %v4619
    %v4668 = vpack.c.b16 %v4624, %v4620
    %v4669 = vpack.c.b16 %v4629, %v4625
    %v4670 = vpack.c.b16 %v4630, %v4626
    %v4671 = vpack.c.b16 %v4631, %v4627
    %v4672 = vpack.c.b16 %v4632, %v4628
    %v4673 = vpack.c.b16 %v4637, %v4633
    %v4674 = vpack.c.b16 %v4638, %v4634
    %v4675 = vpack.c.b16 %v4639, %v4635
    %v4676 = vpack.c.b16 %v4640, %v4636
    %v4677 = vpack.c.b16 %v4645, %v4641
    %v4678 = vpack.c.b16 %v4646, %v4642
    %v4679 = vpack.c.b16 %v4647, %v4643
    %v4680 = vpack.c.b16 %v4648, %v4644
    %4713 = vmatprep.subr.bf16.mxu0 %v4650
    %4714 = vmatpush1.bf16.msra.mxu0 %v4649
    %4715 = vmatprep.subr.bf16.mxu0 %v4654
    %4716 = vmatpush1.bf16.msra.mxu0 %v4653
    %4717 = vmatprep.subr.bf16.mxu0 %v4658
    %4718 = vmatpush1.bf16.msra.mxu0 %v4657
    %4719 = vmatprep.subr.bf16.mxu0 %v4662
    %4720 = vmatpush1.bf16.msra.mxu0 %v4661
    %4721 = vmatprep.subr.bf16.mxu0 %v4666
    %4722 = vmatpush1.bf16.msra.mxu0 %v4665
    %4723 = vmatprep.subr.bf16.mxu0 %v4670
    %4724 = vmatpush1.bf16.msra.mxu0 %v4669
    %4725 = vmatprep.subr.bf16.mxu0 %v4674
    %4726 = vmatpush1.bf16.msra.mxu0 %v4673
    %4727 = vmatprep.subr.bf16.mxu0 %v4678
    %4728 = vmatpush1.bf16.msra.mxu0 %v4677
    %4729 = vmatprep.subr.bf16.mxu0 0
    %4730 = vmatpush1.bf16.msra.mxu0 0
    %4731 = vmatprep.subr.bf16.mxu0 0
    %4732 = vmatpush1.bf16.msra.mxu0 0
    %4733 = vmatprep.subr.bf16.mxu0 0
    %4734 = vmatpush1.bf16.msra.mxu0 0
    %4735 = vmatprep.subr.bf16.mxu0 0
    %4736 = vmatpush1.bf16.msra.mxu0 0
    %4737 = vmatprep.subr.bf16.mxu0 0
    %4738 = vmatpush1.bf16.msra.mxu0 0
    %4739 = vmatprep.subr.bf16.mxu0 0
    %4740 = vmatpush1.bf16.msra.mxu0 0
    %4741 = vmatprep.subr.bf16.mxu0 0
    %4742 = vmatpush1.bf16.msra.mxu0 0
    %4743 = vmatprep.subr.bf16.mxu0 0
    %4744 = vmatpush1.bf16.msra.mxu0 0
    %4745 = vmatprep.mubr.bf16.mxu0 0
    %4746 = vmatmul.mubr.bf16.gmra.mrb[0].mxu0 %v1801
    %v4747 = vpop.f32.mrb[0].mxu0
    %v4748 = vadd.f32 0.0, %v4747
    %v4749 = vpop.f32.mrb[0].mxu0
    %v4750 = vadd.f32 0.0, %v4749
    %v4751 = vpop.f32.mrb[0].mxu0
    %v4752 = vadd.f32 0.0, %v4751
    %v4753 = vpop.f32.mrb[0].mxu0
    %v4754 = vadd.f32 0.0, %v4753
    %4755 = vmatprep.mubr.bf16.mxu0 0
    %4756 = vmatmul.mubr.bf16.gmra.mrb[0].mxu0 %v1802
    %v4757 = vpop.f32.mrb[0].mxu0
    %v4758 = vadd.f32 0.0, %v4757
    %v4759 = vpop.f32.mrb[0].mxu0
    %v4760 = vadd.f32 0.0, %v4759
    %v4761 = vpop.f32.mrb[0].mxu0
    %v4762 = vadd.f32 0.0, %v4761
    %v4763 = vpop.f32.mrb[0].mxu0
    %v4764 = vadd.f32 0.0, %v4763
    %4765 = vdwg.mxu0
    %4766 = vmatprep.subr.bf16.mxu0 %v4652
    %4767 = vmatpush1.bf16.msra.mxu0 %v4651
    %4768 = vmatprep.subr.bf16.mxu0 %v4656
    %4769 = vmatpush1.bf16.msra.mxu0 %v4655
    %4770 = vmatprep.subr.bf16.mxu0 %v4660
    %4771 = vmatpush1.bf16.msra.mxu0 %v4659
    %4772 = vmatprep.subr.bf16.mxu0 %v4664
    %4773 = vmatpush1.bf16.msra.mxu0 %v4663
    %4774 = vmatprep.subr.bf16.mxu0 %v4668
    %4775 = vmatpush1.bf16.msra.mxu0 %v4667
    %4776 = vmatprep.subr.bf16.mxu0 %v4672
    %4777 = vmatpush1.bf16.msra.mxu0 %v4671
    %4778 = vmatprep.subr.bf16.mxu0 %v4676
    %4779 = vmatpush1.bf16.msra.mxu0 %v4675
    %4780 = vmatprep.subr.bf16.mxu0 %v4680
    %4781 = vmatpush1.bf16.msra.mxu0 %v4679
    %4782 = vmatprep.subr.bf16.mxu0 0
    %4783 = vmatpush1.bf16.msra.mxu0 0
    %4784 = vmatprep.subr.bf16.mxu0 0
    %4785 = vmatpush1.bf16.msra.mxu0 0
    %4786 = vmatprep.subr.bf16.mxu0 0
    %4787 = vmatpush1.bf16.msra.mxu0 0
    %4788 = vmatprep.subr.bf16.mxu0 0
    %4789 = vmatpush1.bf16.msra.mxu0 0
    %4790 = vmatprep.subr.bf16.mxu0 0
    %4791 = vmatpush1.bf16.msra.mxu0 0
    %4792 = vmatprep.subr.bf16.mxu0 0
    %4793 = vmatpush1.bf16.msra.mxu0 0
    %4794 = vmatprep.subr.bf16.mxu0 0
    %4795 = vmatpush1.bf16.msra.mxu0 0
    %4796 = vmatprep.subr.bf16.mxu0 0
    %4797 = vmatpush1.bf16.msra.mxu0 0
    %4798 = vmatprep.mubr.bf16.mxu0 0
    %4799 = vmatmul.mubr.bf16.gmra.mrb[0].mxu0 %v1801
    %v4800 = vpop.f32.mrb[0].mxu0
    %v4801 = vadd.f32 0.0, %v4800
    %v4802 = vpop.f32.mrb[0].mxu0
    %v4803 = vadd.f32 0.0, %v4802
    %v4804 = vpop.f32.mrb[0].mxu0
    %v4805 = vadd.f32 0.0, %v4804
    %v4806 = vpop.f32.mrb[0].mxu0
    %v4807 = vadd.f32 0.0, %v4806
    %4808 = vmatprep.mubr.bf16.mxu0 0
    %4809 = vmatmul.mubr.bf16.gmra.mrb[0].mxu0 %v1802
    %v4810 = vpop.f32.mrb[0].mxu0
    %v4811 = vadd.f32 0.0, %v4810
    %v4812 = vpop.f32.mrb[0].mxu0
    %v4813 = vadd.f32 0.0, %v4812
    %v4814 = vpop.f32.mrb[0].mxu0
    %v4815 = vadd.f32 0.0, %v4814
    %v4816 = vpop.f32.mrb[0].mxu0
    %v4817 = vadd.f32 0.0, %v4816
    %4818 = vdwg.mxu0
    %v4819 = vsub.f32 %v4748, 1.0
    %v4820 = vsub.f32 %v4750, 1.0
    %v4821 = vsub.f32 %v4801, 1.0
    %v4822 = vsub.f32 %v4803, 1.0
    %v4823 = vsub.f32 %v4752, 1.0
    %v4824 = vsub.f32 %v4754, 1.0
    %v4825 = vsub.f32 %v4805, 1.0
    %v4826 = vsub.f32 %v4807, 1.0
    %v4827 = vsub.f32 %v4758, 1.0
    %v4828 = vsub.f32 %v4760, 1.0
    %v4829 = vsub.f32 %v4811, 1.0
    %v4830 = vsub.f32 %v4813, 1.0
    %v4831 = vsub.f32 %v4762, 1.0
    %v4832 = vsub.f32 %v4764, 1.0
    %v4833 = vsub.f32 %v4815, 1.0
    %v4834 = vsub.f32 %v4817, 1.0
    %v4835 = vmul.f32 %v4819, 10.0
    %v4836 = vmul.f32 %v4820, 10.0
    %v4837 = vmul.f32 %v4821, 10.0
    %v4838 = vmul.f32 %v4822, 10.0
    %v4839 = vmul.f32 %v4823, 10.0
    %v4840 = vmul.f32 %v4824, 10.0
    %v4841 = vmul.f32 %v4825, 10.0
    %v4842 = vmul.f32 %v4826, 10.0
    %v4843 = vmul.f32 %v4827, 10.0
    %v4844 = vmul.f32 %v4828, 10.0
    %v4845 = vmul.f32 %v4829, 10.0
    %v4846 = vmul.f32 %v4830, 10.0
    %v4847 = vmul.f32 %v4831, 10.0
    %v4848 = vmul.f32 %v4832, 10.0
    %v4849 = vmul.f32 %v4833, 10.0
    %v4850 = vmul.f32 %v4834, 10.0
    %v4851 = vmul.f32 %v4835, 1.442695
    %v4852 = vpow.pop %v4851
    %v4853 = vmul.f32 %v4836, 1.442695
    %v4854 = vpow.pop %v4853
    %v4855 = vmul.f32 %v4837, 1.442695
    %v4856 = vpow.pop %v4855
    %v4857 = vmul.f32 %v4838, 1.442695
    %v4858 = vpow.pop %v4857
    %v4859 = vmul.f32 %v4839, 1.442695
    %v4860 = vpow.pop %v4859
    %v4861 = vmul.f32 %v4840, 1.442695
    %v4862 = vpow.pop %v4861
    %v4863 = vmul.f32 %v4841, 1.442695
    %v4864 = vpow.pop %v4863
    %v4865 = vmul.f32 %v4842, 1.442695
    %v4866 = vpow.pop %v4865
    %v4867 = vmul.f32 %v4843, 1.442695
    %v4868 = vpow.pop %v4867
    %v4869 = vmul.f32 %v4844, 1.442695
    %v4870 = vpow.pop %v4869
    %v4871 = vmul.f32 %v4845, 1.442695
    %v4872 = vpow.pop %v4871
    %v4873 = vmul.f32 %v4846, 1.442695
    %v4874 = vpow.pop %v4873
    %v4875 = vmul.f32 %v4847, 1.442695
    %v4876 = vpow.pop %v4875
    %v4877 = vmul.f32 %v4848, 1.442695
    %v4878 = vpow.pop %v4877
    %v4879 = vmul.f32 %v4849, 1.442695
    %v4880 = vpow.pop %v4879
    %v4881 = vmul.f32 %v4850, 1.442695
    %v4882 = vpow.pop %v4881
    %v4883 = vadd.f32 %v4852, %v4854
    %v4884 = vadd.f32 %v4883, %v4856
    %v4885 = vadd.f32 %v4884, %v4858
    %4886 = vadd.xlane.f32.xlu0 %v4885
    %v4887 = vpop.xlane.xlu0 %4886
    %v4888 = vadd.f32 %v4860, %v4862
    %v4889 = vadd.f32 %v4888, %v4864
    %v4890 = vadd.f32 %v4889, %v4866
    %4891 = vadd.xlane.f32.xlu0 %v4890
    %v4892 = vpop.xlane.xlu0 %4891
    %v4893 = vadd.f32 %v4868, %v4870
    %v4894 = vadd.f32 %v4893, %v4872
    %v4895 = vadd.f32 %v4894, %v4874
    %4896 = vadd.xlane.f32.xlu0 %v4895
    %v4897 = vpop.xlane.xlu0 %4896
    %v4898 = vadd.f32 %v4876, %v4878
    %v4899 = vadd.f32 %v4898, %v4880
    %v4900 = vadd.f32 %v4899, %v4882
    %4901 = vadd.xlane.f32.xlu0 %v4900
    %v4902 = vpop.xlane.xlu0 %4901
    %v4903 = vadd.f32 %v4517, %v4887
    %v4904 = vadd.f32 %v4518, %v4892
    %v4905 = vadd.f32 %v4519, %v4897
    %v4906 = vadd.f32 %v4520, %v4902
    %v4907 = vlog2.pop %v4903
    %v4908 = vmul.f32 %v4907, 0.6931472
    %v4909 = vlog2.pop %v4904
    %v4910 = vmul.f32 %v4909, 0.6931472
    %v4911 = vlog2.pop %v4905
    %v4912 = vmul.f32 %v4911, 0.6931472
    %v4913 = vlog2.pop %v4906
    %v4914 = vmul.f32 %v4913, 0.6931472
    %v4915 = vadd.f32 %v4908, 10.0
    %v4916 = vadd.f32 %v4910, 10.0
    %v4917 = vadd.f32 %v4912, 10.0
    %v4918 = vadd.f32 %v4914, 10.0
    %v4919 = vmul.f32 %v1794, 10.0
    %v4920 = vmul.f32 %v1796, 10.0
    %v4921 = vmul.f32 %v1798, 10.0
    %v4922 = vmul.f32 %v1800, 10.0
    %v4923 = vsub.f32 %v4915, %v4919
    %v4924 = vsub.f32 %v4916, %v4920
    %v4925 = vsub.f32 %v4917, %v4921
    %v4926 = vsub.f32 %v4918, %v4922
    %v4927 = vlaneseq
    %v4928 = vshrl.u32 %v4927, 7
    %v4929 = vadd.s32 %v4928, 8
    %v4930 = vadd.s32 %v4928, 16
    %v4931 = vadd.s32 %v4928, 24
    %vm4932 = vcmp.lt.s32.totalorder %v4928, 16
    %vm4933 = vcmp.lt.s32.totalorder %v4929, 16
    %vm4934 = vcmp.lt.s32.totalorder %v4930, 16
    %vm4935 = vcmp.lt.s32.totalorder %v4931, 16
    %v4936 = vsub.s32 %v4928, 16
    %v4937 = vsub.s32 %v4929, 16
    %v4938 = vsub.s32 %v4931, 16
    %v4939 = vsel %vm4932, %v4928, %v4936
    %v4940 = vsel %vm4933, %v4929, %v4937
    %v4941 = vsel %vm4934, %v4930, %v4928
    %v4942 = vsel %vm4935, %v4931, %v4938
    %s4943 = smul.u32 0, 16
    %v4944 = vstv %s4943
    %v4945 = vadd.s32 %v4944, %v4939
    %v4946 = vadd.s32 %v4944, %v4940
    %v4947 = vadd.s32 %v4944, %v4941
    %v4948 = vadd.s32 %v4944, %v4942
    %vm4949 = vcmp.lt.s32.totalorder %v4945, 2
    %vm4950 = vcmp.lt.s32.totalorder %v4946, 2
    %vm4951 = vcmp.lt.s32.totalorder %v4947, 2
    %vm4952 = vcmp.lt.s32.totalorder %v4948, 2
    %v4953 = vsel %vm4949, %v4923, 0.0
    %v4954 = vsel %vm4950, %v4924, 0.0
    %v4955 = vsel %vm4951, %v4925, 0.0
    %v4956 = vsel %vm4952, %v4926, 0.0
    %v4957 = vadd.f32 %v4953, %v4954
    %v4958 = vadd.f32 %v4957, %v4955
    %v4959 = vadd.f32 %v4958, %v4956
    %v4960 = vrot.slane %v4959, 4
    %v4961 = vadd.f32 %v4959, %v4960
    %v4962 = vrot.slane %v4961, 2
    %v4963 = vadd.f32 %v4961, %v4962
    %v4964 = vrot.slane %v4963, 1
    %v4965 = vadd.f32 %v4963, %v4964
    %4966 = vst [vmem:[#allocation11] sm:$0xff] %v4965
    // Predicated region
    $region50: #{tpu_custom_call.1} parent=1 // pred_check
      _
    $region51: #{tpu_custom_call.1} parent=1 // pred_check_branch
      %4968 = sbr.rel (0) target = $region53
    $region52: #{tpu_custom_call.1} parent=1 // pred_region
      %s4970 = ssub.s32 128, 128
      %4971 = vsyncadd [#allocation4], %s4970
      %s4973 = sshll.u32 [#allocation11], 4
      %s4974 = int_to_ptr.vmem [resolvable:$true] %s4973
      %4976 = dma.vmem_to_hbm [thread:$0]  %s4974, 128, %s7, [#allocation4]
    $region53: #{tpu_custom_call.1} parent=1 // pred_fallthru
      _
    // Predicated region
    $region54: #{tpu_custom_call.1} parent=1 // pred_check
      _
    $region55: #{tpu_custom_call.1} parent=1 // pred_check_branch
      %4978 = sbr.rel (0) target = $region57
    $region56: #{tpu_custom_call.1} parent=1 // pred_region
      %s4980 = ssub.s32 128, 128
      %4981 = vsyncadd [#allocation13], %s4980
      %s4982 = sshll.u32 [#allocation12], 4
      %s4983 = int_to_ptr.vmem [resolvable:$true] %s4982
      %4988 = dma.vmem_to_hbm [thread:$0]  %s4983, 128, %s8, [#allocation13], 64, 64, 4
    $region57: #{tpu_custom_call.1} parent=1 // pred_fallthru
      _
    // Predicated region
    $region58: #{tpu_custom_call.1} parent=1 // pred_check
      _
    $region59: #{tpu_custom_call.1} parent=1 // pred_check_branch
      %4990 = sbr.rel (0) target = $region61
    $region60: #{tpu_custom_call.1} parent=1 // pred_region
      %s4992 = ssub.s32 128, 128
      %4993 = vsyncadd [#allocation13], %s4992
      %s4994 = sshll.u32 [#allocation14], 4
      %s4995 = int_to_ptr.vmem [resolvable:$true] %s4994
      %5000 = dma.vmem_to_hbm [thread:$0]  %s4995, 128, %s9, [#allocation13], 64, 64, 4
    $region61: #{tpu_custom_call.1} parent=1 // pred_fallthru
      _
    // Predicated region
    $region62: #{tpu_custom_call.1} parent=1 // pred_check
      _
    $region63: #{tpu_custom_call.1} parent=1 // pred_check_branch
      %5002 = sbr.rel (0) target = $region65
    $region64: #{tpu_custom_call.1} parent=1 // pred_region
      %s5004 = ssub.s32 16384, 16384
      %5005 = vsyncadd [#allocation16], %s5004
      %s5006 = sshll.u32 [#allocation15], 4
      %s5007 = int_to_ptr.vmem [resolvable:$true] %s5006
      %5012 = dma.vmem_to_hbm [thread:$0]  %s5007, 16384, %s10, [#allocation16], 128, 128, 8
    $region65: #{tpu_custom_call.1} parent=1 // pred_fallthru
      _
    // Predicated region
    $region66: #{tpu_custom_call.1} parent=1 // pred_check
      _
    $region67: #{tpu_custom_call.1} parent=1 // pred_check_branch
      %5014 = sbr.rel (0) target = $region69
    $region68: #{tpu_custom_call.1} parent=1 // pred_region
      %s5016 = ssub.s32 16, 16
      %5017 = vsyncadd [#allocation16], %s5016
      %s5019 = sshll.u32 [#allocation17], 4
      %s5020 = int_to_ptr.vmem [resolvable:$true] %s5019
      %5022 = dma.vmem_to_hbm [thread:$0]  %s5020, 16, %s11, [#allocation16]
    $region69: #{tpu_custom_call.1} parent=1 // pred_fallthru
      _
    // Predicated region
    $region70: #{tpu_custom_call.1} parent=1 // pred_check
      _
    $region71: #{tpu_custom_call.1} parent=1 // pred_check_branch
      %5024 = sbr.rel (0) target = $region73
    $region72: #{tpu_custom_call.1} parent=1 // pred_region
      %5025 = dma.done [#allocation4], 128
    $region73: #{tpu_custom_call.1} parent=1 // pred_fallthru
      _
    // Predicated region
    $region74: #{tpu_custom_call.1} parent=1 // pred_check
      _
    $region75: #{tpu_custom_call.1} parent=1 // pred_check_branch
      %5027 = sbr.rel (0) target = $region77
    $region76: #{tpu_custom_call.1} parent=1 // pred_region
      %5028 = dma.done [#allocation13], 128
    $region77: #{tpu_custom_call.1} parent=1 // pred_fallthru
      _
    // Predicated region
    $region78: #{tpu_custom_call.1} parent=1 // pred_check
      _
    $region79: #{tpu_custom_call.1} parent=1 // pred_check_branch
      %5030 = sbr.rel (0) target = $region81
    $region80: #{tpu_custom_call.1} parent=1 // pred_region
      %5031 = dma.done [#allocation13], 128
    $region81: #{tpu_custom_call.1} parent=1 // pred_fallthru
      _
    // Predicated region
    $region82: #{tpu_custom_call.1} parent=1 // pred_check
      _
    $region83: #{tpu_custom_call.1} parent=1 // pred_check_branch
      %5033 = sbr.rel (0) target = $region85
    $region84: #{tpu_custom_call.1} parent=1 // pred_region
      %5034 = dma.done [#allocation16], 16384
    $region85: #{tpu_custom_call.1} parent=1 // pred_fallthru
      _
    // Predicated region
    $region86: #{tpu_custom_call.1} parent=1 // pred_check
      _
    $region87: #{tpu_custom_call.1} parent=1 // pred_check_branch
      %5036 = sbr.rel (0) target = $region89
    $region88: #{tpu_custom_call.1} parent=1 // pred_region
      %5037 = dma.done [#allocation16], 16
    $region89: #{tpu_custom_call.1} parent=1 // pred_fallthru
      _
    %5038 = vsyncpa [#allocation3], 1
    %5039 = vsyncpa [#allocation6], 1
    %5040 = vsyncpa [#allocation9], 1
    %5041 = vsyncpa [#allocation4], 1
    %5042 = vsyncpa [#allocation13], 1
    %5043 = vsyncpa [#allocation16], 1

</llo_original>
